<compile_context>
chip_gen: v7x
topology: tpu7x:2x2x1
jax: 0.10.0
libtpu: 0.0.40
codegen_flags: <defaults>
</compile_context>

<pallas_src>
import functools

import jax
import jax.numpy as jnp
import numpy as np
from jax.experimental import pallas as pl
from jax.experimental.pallas import tpu as pltpu


# ---------------------------------------------------------------------------
# Shared weight-slab layout (used by the host-side folder AND the kernel)
# ---------------------------------------------------------------------------
def _round8(x):
    return (x + 7) // 8 * 8


def _slab_layout(h1d, h2d, feat_w, gn):
    """Row ranges (start, rows, cols) of every folded weight in the slab."""
    L, r = {}, 0

    def add(name, rows, cols):
        nonlocal r
        L[name] = (r, rows, cols)
        r += _round8(rows)

    add("w1", feat_w, h1d + 1)        # [W1 | W1 @ a1_src^T], zero rows for noise/pad
    add("w2", h1d, h2d + 1)           # [W2 | W2 @ a2_src^T]
    add("w3", h1d, h2d + 1)           # [W3 | W3 @ a3_src^T]
    add("wfc1_z", h2d, h1d)           # fc1 weight, z part
    add("wfc1_y", feat_w, h1d)        # fc1 weight, Y part (zero rows elsewhere)
    add("wfc2", h1d, gn)              # fc2 weight replicated across graph blocks
    add("a1_dst", 1, h1d)
    add("a2_dst", 1, h2d)
    add("a3_dst", 1, h2d)
    add("bfc1", 1, h1d)
    add("bfc2", 1, gn)                # fc2 bias replicated across graph blocks
    L["rows"] = _round8(r)
    return L


# ---------------------------------------------------------------------------
# Kernel
# ---------------------------------------------------------------------------
def _elu(x):
    return jnp.where(x > 0, x, jnp.exp(x) - 1.0)


def vgae8_kernel(alpha, h1d, h2d, feat_w, gn,
                 feats_ref, mask_ref, slab_ref, out_ref):
    L = _slab_layout(h1d, h2d, feat_w, gn)

    def wslice(name):
        r0, nr, nc = L[name]
        return slab_ref[r0:r0 + nr, 0:nc]

    feats = feats_ref[...]            # (GN, feat_w): [noise | X | Y | 0]
    mask = mask_ref[...]              # (GN, GN) additive block-diag mask (0 / -9e15)

    def attend(haug, feat, a_dst):
        """GAT attention.  haug = [h | h @ a_src^T] (a_src folded into W)."""
        h = haug[:, :feat]                                # (GN, F)
        f_src = haug[:, feat:feat + 1]                    # (GN, 1)
        # f_dst_row[0, j] = h_j @ a_dst  (contracted, no in-kernel transpose)
        f_dst_row = jax.lax.dot_general(
            a_dst, h, (((1,), (1,)), ((), ())),
            preferred_element_type=jnp.float32)           # (1, GN)
        e = f_src + f_dst_row                             # (GN, GN)
        e = jnp.where(e > 0, e, alpha * e)                # LeakyReLU(alpha)
        att = e + mask                                    # additive mask (add, not select)
        m = jnp.max(att, axis=1, keepdims=True)           # row softmax (masked cols -> exp==0)
        p = jnp.exp(att - m)
        s = jnp.sum(p, axis=1, keepdims=True)
        r = pl.reciprocal(s, approx=True)                 # EUP vrcp, free slot
        r = r * (2.0 - s * r)                             # one Newton step -> ~f32 exact
        # dropout p = 0.0 -> identity
        return jnp.dot(p * r, h, preferred_element_type=jnp.float32)

    # ---------------- encoder ----------------
    # layer 1: torch.cat([X, Y], 1) folded into zero-padded rows of W1_full
    haug1 = jnp.dot(feats, wslice("w1"), preferred_element_type=jnp.float32)
    hidden = _elu(attend(haug1, h1d, wslice("a1_dst")))

    # mean / logstd heads (separate row-aligned weight blocks in the slab)
    haug2 = jnp.dot(hidden, wslice("w2"), preferred_element_type=jnp.float32)
    haug3 = jnp.dot(hidden, wslice("w3"), preferred_element_type=jnp.float32)
    mean = _elu(attend(haug2, h2d, wslice("a2_dst")))
    logstd = _elu(attend(haug3, h2d, wslice("a3_dst")))

    # reparameterization: z = noise * exp(logstd) + mean
    noise = feats[:, :h2d]
    z = noise * jnp.exp(logstd) + mean

    # ---------------- decoder ----------------
    # fc1(cat([z, Y])) == z @ Wfc1_z + Y @ Wfc1_y + b1  (concat folded into weights)
    h1 = (jnp.dot(z, wslice("wfc1_z"), preferred_element_type=jnp.float32)
          + jnp.dot(feats, wslice("wfc1_y"), preferred_element_type=jnp.float32)
          + wslice("bfc1"))
    h1 = jnp.maximum(h1, 0.0)                             # ReLU
    # fc2 weight/bias replicated across the G graph blocks -> lane-dense store
    logits = jnp.dot(h1, wslice("wfc2"), preferred_element_type=jnp.float32) + wslice("bfc2")
    out_ref[...] = jax.nn.sigmoid(logits)                 # (GN, GN), full 128-lane store


# ---------------------------------------------------------------------------
# One-time host-side folding / packing (HOISTED out of the per-call path)
# ---------------------------------------------------------------------------
def fold_params(params, *, n_nodes, graphs_per_group, input_dim, num_class, h1d, h2d):
    g = graphs_per_group
    gn = g * n_nodes
    feat_w = _round8(h2d + input_dim + num_class)
    L = _slab_layout(h1d, h2d, feat_w, gn)
    slab = np.zeros((L["rows"], max(128, gn)), np.float32)

    def put(name, mat, row_off=0):
        r0, _, nc = L[name]
        mat = np.asarray(mat, np.float32)
        assert mat.shape[1] <= nc
        slab[r0 + row_off:r0 + row_off + mat.shape[0], :mat.shape[1]] = mat

    def aug(W, a_src):
        W = np.asarray(W, np.float32)
        a_src = np.asarray(a_src, np.float32)
        return np.concatenate([W, W @ a_src.T], axis=1)   # x @ [W | W a_src^T]

    # feats column layout: [noise(h2d) | X(input_dim) | Y(num_class) | pad]
    put("w1", aug(params["W1"], params["a1_src"]), row_off=h2d)
    put("w2", aug(params["W2"], params["a2_src"]))
    put("w3", aug(params["W3"], params["a3_src"]))
    put("wfc1_z", params["Wfc1_z"])
    put("wfc1_y", params["Wfc1_y"], row_off=h2d + input_dim)
    put("wfc2", np.tile(np.asarray(params["Wfc2"], np.float32), (1, g)))
    put("a1_dst", params["a1_dst"])
    put("a2_dst", params["a2_dst"])
    put("a3_dst", params["a3_dst"])
    put("bfc1", params["bfc1"])
    put("bfc2", np.tile(np.asarray(params["bfc2"], np.float32), (1, g)))
    return jnp.asarray(slab), feat_w


def pack_graphs(X, Y, adj, noise, *, graphs_per_group):
    """Pack TG graphs into B groups of `graphs_per_group` along the row axis."""
    X, Y, adj, noise = (np.asarray(a, np.float32) for a in (X, Y, adj, noise))
    tg, n, din = X.shape
    g = graphs_per_group
    assert tg % g == 0
    b = tg // g
    h2 = noise.shape[-1]
    c = Y.shape[-1]
    feat_w = _round8(h2 + din + c)
    gn = g * n

    feats = np.zeros((tg * n, feat_w), np.float32)
    feats[:, :h2] = noise.reshape(tg * n, h2)
    feats[:, h2:h2 + din] = X.reshape(tg * n, din)
    feats[:, h2 + din:h2 + din + c] = Y.reshape(tg * n, c)

    mask = np.full((b, gn, gn), -9e15, np.float32)        # block-diag additive mask
    for bi in range(b):
        for gi in range(g):
            a = adj[bi * g + gi]
            mask[bi, gi * n:(gi + 1) * n, gi * n:(gi + 1) * n] = \
                np.where(a > 0, 0.0, -9e15)
    return jnp.asarray(feats), jnp.asarray(mask.reshape(b * gn, gn))


# ---------------------------------------------------------------------------
# Jitted forward: ONLY the pallas_call + one output slice/reshape
# ---------------------------------------------------------------------------
def vgae8_forward(weight_slab, feats, mask_bias, *, alpha, h1d, h2d, feat_w, gn, n):
    total_rows = feats.shape[0]
    n_groups = total_rows // gn
    kernel = functools.partial(vgae8_kernel, float(alpha), h1d, h2d, feat_w, gn)

    out_wide = pl.pallas_call(
        kernel,
        out_shape=jax.ShapeDtypeStruct((total_rows, gn), jnp.float32),
        grid=(n_groups,),
        in_specs=[
            pl.BlockSpec((gn, feat_w), lambda b: (b, 0)),          # per-group data
            pl.BlockSpec((gn, gn), lambda b: (b, 0)),              # per-group mask
            pl.BlockSpec(weight_slab.shape, lambda b: (0, 0)),     # resident weights
        ],
        out_specs=pl.BlockSpec((gn, gn), lambda b: (b, 0)),
        compiler_params=pltpu.CompilerParams(
            dimension_semantics=("parallel",)),
    )(feats, mask_bias, weight_slab)

    # fc2 columns repeat every n (weight replication) -> take the first n.
    n_graphs = total_rows // n
    return out_wide[:, :n].reshape(n_graphs, n, n)


# ---------------------------------------------------------------------------
# Pure-JAX per-graph reference (mirrors the PyTorch semantics, no folding)
# ---------------------------------------------------------------------------
def vgae8_reference_single(params, X, Y, adj, noise, alpha=0.2):
    def elu(x):
        return jnp.where(x > 0, x, jnp.exp(x) - 1.0)

    def gat(x, W, a_src, a_dst):
        h = x @ W
        e = (h @ a_src.T) + (h @ a_dst.T).T
        e = jnp.where(e > 0, e, alpha * e)
        att = jnp.where(adj > 0, e, -9e15)
        att = jax.nn.softmax(att, axis=1)
        return att @ h

    Xc = jnp.concatenate([X, Y], axis=1)
    hidden = elu(gat(Xc, params["W1"], params["a1_src"], params["a1_dst"]))
    mean = elu(gat(hidden, params["W2"], params["a2_src"], params["a2_dst"]))
    logstd = elu(gat(hidden, params["W3"], params["a3_src"], params["a3_dst"]))
    z = noise * jnp.exp(logstd) + mean
    h1 = jnp.maximum(z @ params["Wfc1_z"] + Y @ params["Wfc1_y"] + params["bfc1"], 0.0)
    return jax.nn.sigmoid(h1 @ params["Wfc2"] + params["bfc2"])


# ---------------------------------------------------------------------------
# Deterministic parameter construction (shapes from VGAE8.__init__)
# ---------------------------------------------------------------------------
def make_params(key, input_dim, num_class, hidden1, hidden2, N):
    def xavier(k, shape, gain=1.414):
        lim = gain * np.sqrt(6.0 / (shape[0] + shape[1]))
        return jax.random.uniform(k, shape, jnp.float32, -lim, lim)

    ks = jax.random.split(key, 12)
    din1 = input_dim + num_class
    a1 = xavier(ks[1], (2 * hidden1, 1))
    a2 = xavier(ks[3], (2 * hidden2, 1))
    a3 = xavier(ks[5], (2 * hidden2, 1))
    wfc1 = xavier(ks[6], (hidden2 + num_class, hidden1), gain=1.0)   # (in, out)
    wfc2 = xavier(ks[8], (hidden1, N), gain=1.0)
    return {
        "W1": xavier(ks[0], (din1, hidden1)),
        "a1_src": a1[:hidden1].reshape(1, hidden1),
        "a1_dst": a1[hidden1:].reshape(1, hidden1),
        "W2": xavier(ks[2], (hidden1, hidden2)),
        "a2_src": a2[:hidden2].reshape(1, hidden2),
        "a2_dst": a2[hidden2:].reshape(1, hidden2),
        "W3": xavier(ks[4], (hidden1, hidden2)),
        "a3_src": a3[:hidden2].reshape(1, hidden2),
        "a3_dst": a3[hidden2:].reshape(1, hidden2),
        "Wfc1_z": wfc1[:hidden2],
        "Wfc1_y": wfc1[hidden2:],
        "bfc1": jax.random.uniform(ks[7], (1, hidden1), jnp.float32, -0.1, 0.1),
        "Wfc2": wfc2,
        "bfc2": jax.random.uniform(ks[9], (1, N), jnp.float32, -0.1, 0.1),
    }


if __name__ == "__main__":
    # Module-consistent small shapes.
    N, input_dim, num_class = 16, 8, 4
    hidden1, hidden2 = 32, 16
    alpha = 0.2            # GAT LeakyReLU negative slope; dropout = 0.0 -> identity
    G = 8                  # graphs packed per 128-lane group (matches v5e MXU width)
    B = 2                  # groups -> grid=(2,), shards across v7x's 2 TensorCores
    TG = B * G             # total graphs

    key = jax.random.PRNGKey(0)
    k_p, k_x, k_y, k_adj, k_n = jax.random.split(key, 5)
    params = make_params(k_p, input_dim, num_class, hidden1, hidden2, N)

    X = jax.random.normal(k_x, (TG, N, input_dim), jnp.float32)
    labels = jax.random.randint(k_y, (TG, N), 0, num_class)
    Y = jax.nn.one_hot(labels, num_class, dtype=jnp.float32)
    adj = (jax.random.uniform(k_adj, (TG, N, N)) > 0.6).astype(jnp.float32)
    adj = jnp.maximum(adj, jnp.eye(N, dtype=jnp.float32))   # self-loops (softmax precondition)
    # gaussian_noise = torch.randn(N, hidden2): generated host-side so the
    # kernel is deterministic (reparameterization input).
    noise = jax.random.normal(k_n, (TG, N, hidden2), jnp.float32)

    # One-time folding/packing (outside the jitted per-call path).
    weight_slab, feat_w = fold_params(
        params, n_nodes=N, graphs_per_group=G, input_dim=input_dim,
        num_class=num_class, h1d=hidden1, h2d=hidden2)
    feats, mask_bias = pack_graphs(X, Y, adj, noise, graphs_per_group=G)

    fwd = jax.jit(functools.partial(
        vgae8_forward, alpha=alpha, h1d=hidden1, h2d=hidden2,
        feat_w=feat_w, gn=G * N, n=N))
    A_pred = jax.block_until_ready(fwd(weight_slab, feats, mask_bias))

    ref = jax.vmap(functools.partial(vgae8_reference_single, params, alpha=alpha))(
        X, Y, adj, noise)
    np.testing.assert_allclose(np.asarray(A_pred), np.asarray(ref),
                               rtol=1e-3, atol=1e-3)
    assert A_pred.shape == (TG, N, N)
    print("KERNEL_OK")
</pallas_src>

<mosaic_0001>
module attributes {stable_mosaic.version = 11 : i64} {
  func.func @vgae8_kernel(%arg0: i32, %arg1: memref<128x32xf32, #tpu.memory_space<vmem>>, %arg2: memref<128x128xf32, #tpu.memory_space<vmem>>, %arg3: memref<216x128xf32, #tpu.memory_space<vmem>>, %arg4: memref<128x128xf32, #tpu.memory_space<vmem>>) attributes {dimension_semantics = [#tpu.dimension_semantics<parallel>], iteration_bounds = array<i64: 2>, scalar_prefetch = 0 : i64, scratch_operands = 0 : i64, tpu.core_type = #tpu.core_type<tc>, window_params = [{transform_indices = @transform_0, window_bounds = array<i64: 128, 32>}, {transform_indices = @transform_1, window_bounds = array<i64: 128, 128>}, {pipeline_mode = #tpu.pipeline_mode<synchronous>, transform_indices = @transform_2, window_bounds = array<i64: 216, 128>}, {transform_indices = @transform_3, window_bounds = array<i64: 128, 128>}]} {
    %c0 = arith.constant 0 : index
    %c0_0 = arith.constant 0 : index
    %0 = vector.load %arg1[%c0, %c0_0] : memref<128x32xf32, #tpu.memory_space<vmem>>, vector<128x32xf32>
    %c0_1 = arith.constant 0 : index
    %c0_2 = arith.constant 0 : index
    %1 = vector.load %arg2[%c0_1, %c0_2] : memref<128x128xf32, #tpu.memory_space<vmem>>, vector<128x128xf32>
    %c0_3 = arith.constant 0 : index
    %c0_4 = arith.constant 0 : index
    %2 = vector.load %arg3[%c0_3, %c0_4] : memref<216x128xf32, #tpu.memory_space<vmem>>, vector<32x33xf32>
    %cst = arith.constant dense<0.000000e+00> : vector<128x33xf32>
    %3 = tpu.matmul %0, %2, %cst {dimension_numbers = #tpu.dot_dimension_numbers<[1], [0], [0], [1], [0, 0, 1, 1], [], []>} : vector<128x32xf32>, vector<32x33xf32>, vector<128x33xf32> -> vector<128x33xf32>
    %c176 = arith.constant 176 : index
    %c0_5 = arith.constant 0 : index
    %4 = vector.load %arg3[%c176, %c0_5] : memref<216x128xf32, #tpu.memory_space<vmem>>, vector<1x32xf32>
    %5 = vector.extract_strided_slice %3 {offsets = [0, 0], sizes = [128, 32], strides = [1, 1]} : vector<128x33xf32> to vector<128x32xf32>
    %6 = vector.extract_strided_slice %3 {offsets = [0, 32], sizes = [128, 1], strides = [1, 1]} : vector<128x33xf32> to vector<128x1xf32>
    %cst_6 = arith.constant dense<0.000000e+00> : vector<1x128xf32>
    %7 = tpu.matmul %4, %5, %cst_6 {dimension_numbers = #tpu.dot_dimension_numbers<[1], [1], [0], [0], [0, 0, 1, 0], [], []>} : vector<1x32xf32>, vector<128x32xf32>, vector<1x128xf32> -> vector<1x128xf32>
    %8 = vector.broadcast %6 : vector<128x1xf32> to vector<128x128xf32>
    %9 = vector.broadcast %7 : vector<1x128xf32> to vector<128x128xf32>
    %10 = arith.addf %8, %9 : vector<128x128xf32>
    %cst_7 = arith.constant 0.000000e+00 : f32
    %11 = vector.broadcast %cst_7 : f32 to vector<128x128xf32>
    %12 = arith.cmpf ogt, %10, %11 : vector<128x128xf32>
    %cst_8 = arith.constant 2.000000e-01 : f32
    %13 = vector.broadcast %cst_8 : f32 to vector<128x128xf32>
    %14 = arith.mulf %13, %10 : vector<128x128xf32>
    %15 = arith.select %12, %10, %14 : vector<128x128xi1>, vector<128x128xf32>
    %16 = arith.addf %15, %1 : vector<128x128xf32>
    %cst_9 = arith.constant dense<0xFF800000> : vector<128xf32>
    %17 = vector.multi_reduction <maximumf>, %16, %cst_9 [1] : vector<128x128xf32> to vector<128xf32>
    %18 = vector.shape_cast %17 : vector<128xf32> to vector<128x1xf32>
    %19 = vector.broadcast %18 : vector<128x1xf32> to vector<128x128xf32>
    %20 = arith.subf %16, %19 : vector<128x128xf32>
    %21 = math.exp %20 : vector<128x128xf32>
    %cst_10 = arith.constant dense<0.000000e+00> : vector<128xf32>
    %22 = vector.multi_reduction <add>, %21, %cst_10 [1] : vector<128x128xf32> to vector<128xf32>
    %23 = vector.shape_cast %22 : vector<128xf32> to vector<128x1xf32>
    %24 = tpu.reciprocal %23 {approx = true} : vector<128x1xf32> -> vector<128x1xf32>
    %25 = arith.mulf %23, %24 : vector<128x1xf32>
    %cst_11 = arith.constant 2.000000e+00 : f32
    %26 = vector.broadcast %cst_11 : f32 to vector<128x1xf32>
    %27 = arith.subf %26, %25 : vector<128x1xf32>
    %28 = arith.mulf %24, %27 : vector<128x1xf32>
    %29 = vector.broadcast %28 : vector<128x1xf32> to vector<128x128xf32>
    %30 = arith.mulf %21, %29 : vector<128x128xf32>
    %cst_12 = arith.constant dense<0.000000e+00> : vector<128x32xf32>
    %31 = tpu.matmul %30, %5, %cst_12 {dimension_numbers = #tpu.dot_dimension_numbers<[1], [0], [0], [1], [0, 0, 1, 1], [], []>} : vector<128x128xf32>, vector<128x32xf32>, vector<128x32xf32> -> vector<128x32xf32>
    %cst_13 = arith.constant 0.000000e+00 : f32
    %32 = vector.broadcast %cst_13 : f32 to vector<128x32xf32>
    %33 = arith.cmpf ogt, %31, %32 : vector<128x32xf32>
    %34 = math.exp %31 : vector<128x32xf32>
    %cst_14 = arith.constant 1.000000e+00 : f32
    %35 = vector.broadcast %cst_14 : f32 to vector<128x32xf32>
    %36 = arith.subf %34, %35 : vector<128x32xf32>
    %37 = arith.select %33, %31, %36 : vector<128x32xi1>, vector<128x32xf32>
    %c32 = arith.constant 32 : index
    %c0_15 = arith.constant 0 : index
    %38 = vector.load %arg3[%c32, %c0_15] : memref<216x128xf32, #tpu.memory_space<vmem>>, vector<32x17xf32>
    %cst_16 = arith.constant dense<0.000000e+00> : vector<128x17xf32>
    %39 = tpu.matmul %37, %38, %cst_16 {dimension_numbers = #tpu.dot_dimension_numbers<[1], [0], [0], [1], [0, 0, 1, 1], [], []>} : vector<128x32xf32>, vector<32x17xf32>, vector<128x17xf32> -> vector<128x17xf32>
    %c64 = arith.constant 64 : index
    %c0_17 = arith.constant 0 : index
    %40 = vector.load %arg3[%c64, %c0_17] : memref<216x128xf32, #tpu.memory_space<vmem>>, vector<32x17xf32>
    %cst_18 = arith.constant dense<0.000000e+00> : vector<128x17xf32>
    %41 = tpu.matmul %37, %40, %cst_18 {dimension_numbers = #tpu.dot_dimension_numbers<[1], [0], [0], [1], [0, 0, 1, 1], [], []>} : vector<128x32xf32>, vector<32x17xf32>, vector<128x17xf32> -> vector<128x17xf32>
    %c184 = arith.constant 184 : index
    %c0_19 = arith.constant 0 : index
    %42 = vector.load %arg3[%c184, %c0_19] : memref<216x128xf32, #tpu.memory_space<vmem>>, vector<1x16xf32>
    %43 = vector.extract_strided_slice %39 {offsets = [0, 0], sizes = [128, 16], strides = [1, 1]} : vector<128x17xf32> to vector<128x16xf32>
    %44 = vector.extract_strided_slice %39 {offsets = [0, 16], sizes = [128, 1], strides = [1, 1]} : vector<128x17xf32> to vector<128x1xf32>
    %cst_20 = arith.constant dense<0.000000e+00> : vector<1x128xf32>
    %45 = tpu.matmul %42, %43, %cst_20 {dimension_numbers = #tpu.dot_dimension_numbers<[1], [1], [0], [0], [0, 0, 1, 0], [], []>} : vector<1x16xf32>, vector<128x16xf32>, vector<1x128xf32> -> vector<1x128xf32>
    %46 = vector.broadcast %44 : vector<128x1xf32> to vector<128x128xf32>
    %47 = vector.broadcast %45 : vector<1x128xf32> to vector<128x128xf32>
    %48 = arith.addf %46, %47 : vector<128x128xf32>
    %cst_21 = arith.constant 0.000000e+00 : f32
    %49 = vector.broadcast %cst_21 : f32 to vector<128x128xf32>
    %50 = arith.cmpf ogt, %48, %49 : vector<128x128xf32>
    %cst_22 = arith.constant 2.000000e-01 : f32
    %51 = vector.broadcast %cst_22 : f32 to vector<128x128xf32>
    %52 = arith.mulf %51, %48 : vector<128x128xf32>
    %53 = arith.select %50, %48, %52 : vector<128x128xi1>, vector<128x128xf32>
    %54 = arith.addf %53, %1 : vector<128x128xf32>
    %cst_23 = arith.constant dense<0xFF800000> : vector<128xf32>
    %55 = vector.multi_reduction <maximumf>, %54, %cst_23 [1] : vector<128x128xf32> to vector<128xf32>
    %56 = vector.shape_cast %55 : vector<128xf32> to vector<128x1xf32>
    %57 = vector.broadcast %56 : vector<128x1xf32> to vector<128x128xf32>
    %58 = arith.subf %54, %57 : vector<128x128xf32>
    %59 = math.exp %58 : vector<128x128xf32>
    %cst_24 = arith.constant dense<0.000000e+00> : vector<128xf32>
    %60 = vector.multi_reduction <add>, %59, %cst_24 [1] : vector<128x128xf32> to vector<128xf32>
    %61 = vector.shape_cast %60 : vector<128xf32> to vector<128x1xf32>
    %62 = tpu.reciprocal %61 {approx = true} : vector<128x1xf32> -> vector<128x1xf32>
    %63 = arith.mulf %61, %62 : vector<128x1xf32>
    %cst_25 = arith.constant 2.000000e+00 : f32
    %64 = vector.broadcast %cst_25 : f32 to vector<128x1xf32>
    %65 = arith.subf %64, %63 : vector<128x1xf32>
    %66 = arith.mulf %62, %65 : vector<128x1xf32>
    %67 = vector.broadcast %66 : vector<128x1xf32> to vector<128x128xf32>
    %68 = arith.mulf %59, %67 : vector<128x128xf32>
    %cst_26 = arith.constant dense<0.000000e+00> : vector<128x16xf32>
    %69 = tpu.matmul %68, %43, %cst_26 {dimension_numbers = #tpu.dot_dimension_numbers<[1], [0], [0], [1], [0, 0, 1, 1], [], []>} : vector<128x128xf32>, vector<128x16xf32>, vector<128x16xf32> -> vector<128x16xf32>
    %cst_27 = arith.constant 0.000000e+00 : f32
    %70 = vector.broadcast %cst_27 : f32 to vector<128x16xf32>
    %71 = arith.cmpf ogt, %69, %70 : vector<128x16xf32>
    %72 = math.exp %69 : vector<128x16xf32>
    %cst_28 = arith.constant 1.000000e+00 : f32
    %73 = vector.broadcast %cst_28 : f32 to vector<128x16xf32>
    %74 = arith.subf %72, %73 : vector<128x16xf32>
    %75 = arith.select %71, %69, %74 : vector<128x16xi1>, vector<128x16xf32>
    %c192 = arith.constant 192 : index
    %c0_29 = arith.constant 0 : index
    %76 = vector.load %arg3[%c192, %c0_29] : memref<216x128xf32, #tpu.memory_space<vmem>>, vector<1x16xf32>
    %77 = vector.extract_strided_slice %41 {offsets = [0, 0], sizes = [128, 16], strides = [1, 1]} : vector<128x17xf32> to vector<128x16xf32>
    %78 = vector.extract_strided_slice %41 {offsets = [0, 16], sizes = [128, 1], strides = [1, 1]} : vector<128x17xf32> to vector<128x1xf32>
    %cst_30 = arith.constant dense<0.000000e+00> : vector<1x128xf32>
    %79 = tpu.matmul %76, %77, %cst_30 {dimension_numbers = #tpu.dot_dimension_numbers<[1], [1], [0], [0], [0, 0, 1, 0], [], []>} : vector<1x16xf32>, vector<128x16xf32>, vector<1x128xf32> -> vector<1x128xf32>
    %80 = vector.broadcast %78 : vector<128x1xf32> to vector<128x128xf32>
    %81 = vector.broadcast %79 : vector<1x128xf32> to vector<128x128xf32>
    %82 = arith.addf %80, %81 : vector<128x128xf32>
    %cst_31 = arith.constant 0.000000e+00 : f32
    %83 = vector.broadcast %cst_31 : f32 to vector<128x128xf32>
    %84 = arith.cmpf ogt, %82, %83 : vector<128x128xf32>
    %cst_32 = arith.constant 2.000000e-01 : f32
    %85 = vector.broadcast %cst_32 : f32 to vector<128x128xf32>
    %86 = arith.mulf %85, %82 : vector<128x128xf32>
    %87 = arith.select %84, %82, %86 : vector<128x128xi1>, vector<128x128xf32>
    %88 = arith.addf %87, %1 : vector<128x128xf32>
    %cst_33 = arith.constant dense<0xFF800000> : vector<128xf32>
    %89 = vector.multi_reduction <maximumf>, %88, %cst_33 [1] : vector<128x128xf32> to vector<128xf32>
    %90 = vector.shape_cast %89 : vector<128xf32> to vector<128x1xf32>
    %91 = vector.broadcast %90 : vector<128x1xf32> to vector<128x128xf32>
    %92 = arith.subf %88, %91 : vector<128x128xf32>
    %93 = math.exp %92 : vector<128x128xf32>
    %cst_34 = arith.constant dense<0.000000e+00> : vector<128xf32>
    %94 = vector.multi_reduction <add>, %93, %cst_34 [1] : vector<128x128xf32> to vector<128xf32>
    %95 = vector.shape_cast %94 : vector<128xf32> to vector<128x1xf32>
    %96 = tpu.reciprocal %95 {approx = true} : vector<128x1xf32> -> vector<128x1xf32>
    %97 = arith.mulf %95, %96 : vector<128x1xf32>
    %cst_35 = arith.constant 2.000000e+00 : f32
    %98 = vector.broadcast %cst_35 : f32 to vector<128x1xf32>
    %99 = arith.subf %98, %97 : vector<128x1xf32>
    %100 = arith.mulf %96, %99 : vector<128x1xf32>
    %101 = vector.broadcast %100 : vector<128x1xf32> to vector<128x128xf32>
    %102 = arith.mulf %93, %101 : vector<128x128xf32>
    %cst_36 = arith.constant dense<0.000000e+00> : vector<128x16xf32>
    %103 = tpu.matmul %102, %77, %cst_36 {dimension_numbers = #tpu.dot_dimension_numbers<[1], [0], [0], [1], [0, 0, 1, 1], [], []>} : vector<128x128xf32>, vector<128x16xf32>, vector<128x16xf32> -> vector<128x16xf32>
    %cst_37 = arith.constant 0.000000e+00 : f32
    %104 = vector.broadcast %cst_37 : f32 to vector<128x16xf32>
    %105 = arith.cmpf ogt, %103, %104 : vector<128x16xf32>
    %106 = math.exp %103 : vector<128x16xf32>
    %cst_38 = arith.constant 1.000000e+00 : f32
    %107 = vector.broadcast %cst_38 : f32 to vector<128x16xf32>
    %108 = arith.subf %106, %107 : vector<128x16xf32>
    %109 = arith.select %105, %103, %108 : vector<128x16xi1>, vector<128x16xf32>
    %110 = vector.extract_strided_slice %0 {offsets = [0, 0], sizes = [128, 16], strides = [1, 1]} : vector<128x32xf32> to vector<128x16xf32>
    %111 = math.exp %109 : vector<128x16xf32>
    %112 = arith.mulf %110, %111 : vector<128x16xf32>
    %113 = arith.addf %112, %75 : vector<128x16xf32>
    %c96 = arith.constant 96 : index
    %c0_39 = arith.constant 0 : index
    %114 = vector.load %arg3[%c96, %c0_39] : memref<216x128xf32, #tpu.memory_space<vmem>>, vector<16x32xf32>
    %cst_40 = arith.constant dense<0.000000e+00> : vector<128x32xf32>
    %115 = tpu.matmul %113, %114, %cst_40 {dimension_numbers = #tpu.dot_dimension_numbers<[1], [0], [0], [1], [0, 0, 1, 1], [], []>} : vector<128x16xf32>, vector<16x32xf32>, vector<128x32xf32> -> vector<128x32xf32>
    %c112 = arith.constant 112 : index
    %c0_41 = arith.constant 0 : index
    %116 = vector.load %arg3[%c112, %c0_41] : memref<216x128xf32, #tpu.memory_space<vmem>>, vector<32x32xf32>
    %cst_42 = arith.constant dense<0.000000e+00> : vector<128x32xf32>
    %117 = tpu.matmul %0, %116, %cst_42 {dimension_numbers = #tpu.dot_dimension_numbers<[1], [0], [0], [1], [0, 0, 1, 1], [], []>} : vector<128x32xf32>, vector<32x32xf32>, vector<128x32xf32> -> vector<128x32xf32>
    %118 = arith.addf %115, %117 : vector<128x32xf32>
    %c200 = arith.constant 200 : index
    %c0_43 = arith.constant 0 : index
    %119 = vector.load %arg3[%c200, %c0_43] : memref<216x128xf32, #tpu.memory_space<vmem>>, vector<1x32xf32>
    %120 = vector.broadcast %119 : vector<1x32xf32> to vector<128x32xf32>
    %121 = arith.addf %118, %120 : vector<128x32xf32>
    %cst_44 = arith.constant 0.000000e+00 : f32
    %122 = vector.broadcast %cst_44 : f32 to vector<128x32xf32>
    %123 = arith.maximumf %121, %122 : vector<128x32xf32>
    %c144 = arith.constant 144 : index
    %c0_45 = arith.constant 0 : index
    %124 = vector.load %arg3[%c144, %c0_45] : memref<216x128xf32, #tpu.memory_space<vmem>>, vector<32x128xf32>
    %cst_46 = arith.constant dense<0.000000e+00> : vector<128x128xf32>
    %125 = tpu.matmul %123, %124, %cst_46 {dimension_numbers = #tpu.dot_dimension_numbers<[1], [0], [0], [1], [0, 0, 1, 1], [], []>} : vector<128x32xf32>, vector<32x128xf32>, vector<128x128xf32> -> vector<128x128xf32>
    %c208 = arith.constant 208 : index
    %c0_47 = arith.constant 0 : index
    %126 = vector.load %arg3[%c208, %c0_47] : memref<216x128xf32, #tpu.memory_space<vmem>>, vector<1x128xf32>
    %127 = vector.broadcast %126 : vector<1x128xf32> to vector<128x128xf32>
    %128 = arith.addf %125, %127 : vector<128x128xf32>
    %129 = arith.negf %128 : vector<128x128xf32>
    %130 = math.exp %129 : vector<128x128xf32>
    %cst_48 = arith.constant 1.000000e+00 : f32
    %131 = vector.broadcast %cst_48 : f32 to vector<128x128xf32>
    %132 = arith.addf %131, %130 : vector<128x128xf32>
    %133 = arith.divf %131, %132 : vector<128x128xf32>
    %c0_49 = arith.constant 0 : index
    %c0_50 = arith.constant 0 : index
    %134 = vector.load %arg4[%c0_49, %c0_50] : memref<128x128xf32, #tpu.memory_space<vmem>>, vector<128x128xf32>
    tpu.vector_store %arg4[%c0_49, %c0_50], %133 {strides = array<i32>} : memref<128x128xf32, #tpu.memory_space<vmem>>, vector<128x128xf32>,
    return
  }
  func.func @transform_0(%arg0: i32) -> (i32, i32) {
    %c0_i32 = arith.constant 0 : i32
    %c0_i32_0 = arith.constant 0 : i32
    return %arg0, %c0_i32 : i32, i32
  }
  func.func @transform_1(%arg0: i32) -> (i32, i32) {
    %c0_i32 = arith.constant 0 : i32
    %c0_i32_0 = arith.constant 0 : i32
    return %arg0, %c0_i32 : i32, i32
  }
  func.func @transform_2(%arg0: i32) -> (i32, i32) {
    %c0_i32 = arith.constant 0 : i32
    %c0_i32_0 = arith.constant 0 : i32
    %c0_i32_1 = arith.constant 0 : i32
    return %c0_i32, %c0_i32_0 : i32, i32
  }
  func.func @transform_3(%arg0: i32) -> (i32, i32) {
    %c0_i32 = arith.constant 0 : i32
    %c0_i32_0 = arith.constant 0 : i32
    return %arg0, %c0_i32 : i32, i32
  }
}

</mosaic_0001>

<llo_original>
// kernel: vgae8_forward.1
$region0: #{vgae8_forward.1}
  #allocation0 [shape = 'u32[]', space=smem, size = 0x4, offset = 0x4, fixed_abs, tag = 'smem constant byte address 0x4 - core index']
  #allocation1 [shape = 'u32[144,128]{1,0:T(1,128)}', space=vmem, size = 0x12000, scoped, tag = 'internal scratch']
  %s0 = inlined_call_operand.vmem [shape: f32[256,32], index: 0, kind: input, shape index: {}]
  %s1 = inlined_call_operand.vmem [shape: f32[256,128], index: 1, kind: input, shape index: {}]
  %s2 = inlined_call_operand.hbm [shape: f32[216,128], index: 2, kind: input, shape index: {}]
  %s3 = inlined_call_operand.hbm [shape: f32[256,128], index: 3, kind: output, shape index: {}]
  %s4 = sld [smem:[#allocation0]]
  $region49: #{vgae8_forward.1} parent=0
    _
  %s6 = ssub.s32 1, %s4
  %s7 = scalar_select 0, %s6, %s4
  $region1: #{vgae8_forward.1} parent=0
    #allocation2 [shape = 'u8[110592]{0}', space=vmem, size = 0x1b000, scoped, tag = 'input window, operand 2, single buffered']
    #allocation3 [shape = 's32[2]{0}', space=sflag, size = 0x8, scoped, tag = 'scoped memory for vgae8_forward.1']
    #allocation4 [shape = 's32[2]{0}', space=sflag, size = 0x8, scoped, tag = 'scoped memory for vgae8_forward.1']
    #allocation5 [shape = 'u8[131072]{0}', space=vmem, size = 0x20000, scoped, tag = 'output window, operand 0']
    %8 = vsyncpa [#allocation3], 0
    %9 = vsyncpa [#allocation4], 0
    %s10 = scalar_lea.sflag [#allocation4], 1
    %11 = vsyncpa %s10, 0
    loop: start=0, step=1, limit=4
    $region2: #{vgae8_forward.1} parent=1 // loop_pre_header
      _
    $region3: #{vgae8_forward.1} parent=1 // loop_header
      %s13 = sphi 0, %s17
      %p14 = scmp.ge.s32.totalorder %s13, 4
      %s23 = sphi 0, %s25
      %s26 = sphi 0, %s23
      %s27 = sphi 0, %s26
      %s43 = sphi 0, %s27
      %s49 = sphi 0, %s51
      %s52 = sphi 0, %s49
      %s53 = sphi 0, %s52
      %s69 = sphi 0, %s53
      %s73 = sphi 0, %s73
      %s75 = sphi 0, %s73
      %s76 = sphi 0, %s75
      %s90 = sphi 0, %s76
      %s96 = sphi 0, %s98
      %s99 = sphi 0, %s96
      %s100 = sphi 0, %s99
      %s116 = sphi 0, %s100
    $region4: #{vgae8_forward.1} parent=1 // loop_header_branch
      %16 = sbr.rel (%p14) target = $region8
    $region5: #{vgae8_forward.1} parent=1 // loop_body
      %s18 = ssub.s32 %s13, 1
      %s19 = ssub.s32 %s13, 2
      %s20 = sadd.s32 %s13, 1
      %s21 = ssub.s32 %s13, %s20
      %p22 = scmp.eq.s32.totalorder %s21, 0
      %s24 = sadd.s32 %s23, 1
      %s25 = scalar_select %p22, %s23, %s24
      %p28 = pneg %p22
      %p29 = scmp.eq.s32.totalorder %s13, 1
      %p30 = por %p28, %p29
      %p31 = scmp.ne.s32.totalorder %s23, %s26
      %p32 = scmp.eq.s32.totalorder %s13, 0
      %p33 = por %p31, %p32
      %p34 = scmp.ne.s32.totalorder %s23, %s26
      %p35 = scmp.eq.s32.totalorder %s18, 1
      %p36 = por %p34, %p35
      %p37 = scmp.ne.s32.totalorder %s26, %s27
      %p38 = scmp.eq.s32.totalorder %s18, 0
      %p39 = por %p37, %p38
      %p40 = scmp.ne.s32.totalorder %s26, %s27
      %p41 = scmp.eq.s32.totalorder %s19, 1
      %p42 = por %p40, %p41
      %p44 = scmp.ne.s32.totalorder %s27, %s43
      %p45 = scmp.eq.s32.totalorder %s19, 0
      %p46 = por %p44, %p45
      %s47 = ssub.s32 %s13, %s20
      %p48 = scmp.eq.s32.totalorder %s47, 0
      %s50 = sadd.s32 %s49, 1
      %s51 = scalar_select %p48, %s49, %s50
      %p54 = pneg %p48
      %p55 = scmp.eq.s32.totalorder %s13, 1
      %p56 = por %p54, %p55
      %p57 = scmp.ne.s32.totalorder %s49, %s52
      %p58 = scmp.eq.s32.totalorder %s13, 0
      %p59 = por %p57, %p58
      %p60 = scmp.ne.s32.totalorder %s49, %s52
      %p61 = scmp.eq.s32.totalorder %s18, 1
      %p62 = por %p60, %p61
      %p63 = scmp.ne.s32.totalorder %s52, %s53
      %p64 = scmp.eq.s32.totalorder %s18, 0
      %p65 = por %p63, %p64
      %p66 = scmp.ne.s32.totalorder %s52, %s53
      %p67 = scmp.eq.s32.totalorder %s19, 1
      %p68 = por %p66, %p67
      %p70 = scmp.ne.s32.totalorder %s53, %s69
      %p71 = scmp.eq.s32.totalorder %s19, 0
      %p72 = por %p70, %p71
      %s74 = sadd.s32 %s73, 1
      %p77 = scmp.eq.s32.totalorder %s13, 1
      %p78 = scmp.ne.s32.totalorder %s73, %s75
      %p79 = scmp.eq.s32.totalorder %s13, 0
      %p80 = por %p78, %p79
      %p81 = scmp.ne.s32.totalorder %s73, %s75
      %p82 = scmp.eq.s32.totalorder %s18, 1
      %p83 = por %p81, %p82
      %p84 = scmp.ne.s32.totalorder %s75, %s76
      %p85 = scmp.eq.s32.totalorder %s18, 0
      %p86 = por %p84, %p85
      %p87 = scmp.ne.s32.totalorder %s75, %s76
      %p88 = scmp.eq.s32.totalorder %s19, 1
      %p89 = por %p87, %p88
      %p91 = scmp.ne.s32.totalorder %s76, %s90
      %p92 = scmp.eq.s32.totalorder %s19, 0
      %p93 = por %p91, %p92
      %s94 = ssub.s32 %s13, %s20
      %p95 = scmp.eq.s32.totalorder %s94, 0
      %s97 = sadd.s32 %s96, 1
      %s98 = scalar_select %p95, %s96, %s97
      %p101 = pneg %p95
      %p102 = scmp.eq.s32.totalorder %s13, 1
      %p103 = por %p101, %p102
      %p104 = scmp.ne.s32.totalorder %s96, %s99
      %p105 = scmp.eq.s32.totalorder %s13, 0
      %p106 = por %p104, %p105
      %p107 = scmp.ne.s32.totalorder %s96, %s99
      %p108 = scmp.eq.s32.totalorder %s18, 1
      %p109 = por %p107, %p108
      %p110 = scmp.ne.s32.totalorder %s99, %s100
      %p111 = scmp.eq.s32.totalorder %s18, 0
      %p112 = por %p110, %p111
      %p113 = scmp.ne.s32.totalorder %s99, %s100
      %p114 = scmp.eq.s32.totalorder %s19, 1
      %p115 = por %p113, %p114
      %p117 = scmp.ne.s32.totalorder %s100, %s116
      %p118 = scmp.eq.s32.totalorder %s19, 0
      %p119 = por %p117, %p118
      %p120 = scmp.le.s32.totalorder 1, %s13
      %p121 = scmp.lt.s32.totalorder %s13, 3
      %p122 = pnand %p120, %p121
      %p123 = pneg %p122
      // Predicated region
      $region9: #{vgae8_forward.1} parent=5 // pred_check
        _
      $region10: #{vgae8_forward.1} parent=5 // pred_check_branch
        %125 = sbr.rel (%p122) target = $region12
      $region11: #{vgae8_forward.1} parent=5 // pred_region
        %s126 = ssub.s32 %s13, 1
        // Predicated region
        $region13: #{vgae8_forward.1} parent=11 // pred_check
          %p127 = pneg %p86
        $region14: #{vgae8_forward.1} parent=11 // pred_check_branch
          %129 = sbr.rel (%p127) target = $region16
        $region15: #{vgae8_forward.1} parent=11 // pred_region
          %s131 = ssub.s32 3456, 3456
          %132 = vsyncadd [#allocation3], %s131
          %s133 = sshll.u32 [#allocation2], 4
          %s134 = int_to_ptr.vmem [resolvable:$true] %s133
          %139 = dma.hbm_to_vmem [thread:$0]  %s2, 3456, %s134, [#allocation3], 128, 128, 8
        $region16: #{vgae8_forward.1} parent=11 // pred_fallthru
          _
      $region12: #{vgae8_forward.1} parent=5 // pred_fallthru
        _
      %p140 = scmp.lt.s32.totalorder %s13, 2
      // Predicated region
      $region17: #{vgae8_forward.1} parent=5 // pred_check
        %p141 = pneg %p140
      $region18: #{vgae8_forward.1} parent=5 // pred_check_branch
        %143 = sbr.rel (%p141) target = $region20
      $region19: #{vgae8_forward.1} parent=5 // pred_region
        // Predicated region
        $region21: #{vgae8_forward.1} parent=19 // pred_check
          %p144 = pneg %p33
        $region22: #{vgae8_forward.1} parent=19 // pred_check_branch
          %146 = sbr.rel (%p144) target = $region24
        $region23: #{vgae8_forward.1} parent=19 // pred_region
          %s147 = smul.u32 16, %s13
          %p148 = scmp.lt.s32.totalorder %s147, 31
          %s149 = scalar_select %p148, %s147, 31
          %s150 = smul.addr %s149, 8
          %s151 = scalar_lea.vmem %s0, %s150
          %s152 = smul.u32 16, %s13
        $region24: #{vgae8_forward.1} parent=19 // pred_fallthru
          _
        // Predicated region
        $region25: #{vgae8_forward.1} parent=19 // pred_check
          %p153 = pneg %p59
        $region26: #{vgae8_forward.1} parent=19 // pred_check_branch
          %155 = sbr.rel (%p153) target = $region28
        $region27: #{vgae8_forward.1} parent=19 // pred_region
          %s156 = smul.u32 16, %s13
          %p157 = scmp.lt.s32.totalorder %s156, 31
          %s158 = scalar_select %p157, %s156, 31
          %s159 = smul.addr %s158, 8
          %s160 = scalar_lea.vmem %s1, %s159
          %s161 = smul.u32 16, %s13
        $region28: #{vgae8_forward.1} parent=19 // pred_fallthru
          _
      $region20: #{vgae8_forward.1} parent=5 // pred_fallthru
        _
      %p162 = scmp.le.s32.totalorder 1, %s13
      %p163 = scmp.lt.s32.totalorder %s13, 3
      %p164 = pnand %p162, %p163
      %p165 = pneg %p164
      // Predicated region
      $region29: #{vgae8_forward.1} parent=5 // pred_check
        _
      $region30: #{vgae8_forward.1} parent=5 // pred_check_branch
        %167 = sbr.rel (%p164) target = $region32
      $region31: #{vgae8_forward.1} parent=5 // pred_region
        %s168 = ssub.s32 %s13, 1
        // Predicated region
        $region33: #{vgae8_forward.1} parent=31 // pred_check
          %p169 = pneg %p86
        $region34: #{vgae8_forward.1} parent=31 // pred_check_branch
          %171 = sbr.rel (%p169) target = $region36
        $region35: #{vgae8_forward.1} parent=31 // pred_region
          %172 = dma.done [#allocation3], 3456
        $region36: #{vgae8_forward.1} parent=31 // pred_fallthru
          _
        %s173 = smul.u32 16, %s18
        %p174 = scmp.lt.s32.totalorder %s173, 31
        %s175 = scalar_select %p174, %s173, 31
        %s176 = smul.addr %s175, 8
        %s177 = scalar_lea.vmem %s0, %s176
        %p178 = pneg %p39
        %p179 = pneg %p36
        %s180 = smul.u32 16, %s18
        %p181 = scmp.lt.s32.totalorder %s180, 31
        %s182 = scalar_select %p181, %s180, 31
        %s183 = smul.addr %s182, 8
        %s184 = scalar_lea.vmem %s1, %s183
        %p185 = pneg %p65
        %p186 = pneg %p62
        %p187 = pneg %p86
        %p188 = pneg %p83
        %p189 = pneg %p112
        %p190 = pneg %p109
        %s191 = sand.u32 %s99, 1
        %s192 = scalar_lea.sflag [#allocation4], %s191
        %s193 = sand.u32 %s99, 1
        %s194 = smul.addr %s193, 128
        %s195 = scalar_lea.vmem [#allocation5], %s194
        %s196 = smul.u32 16, %s18
        %p197 = scmp.lt.s32.totalorder %s196, 31
        %s198 = scalar_select %p197, %s196, 31
        %s199 = smul.addr %s198, 8
        %s200 = scalar_lea.vmem %s0, %s199
        %s201 = smul.u32 16, %s18
        %s202 = smul.u32 16, %s18
        %p203 = scmp.lt.s32.totalorder %s202, 31
        %s204 = scalar_select %p203, %s202, 31
        %s205 = smul.addr %s204, 8
        %s206 = scalar_lea.vmem %s1, %s205
        %s207 = smul.u32 16, %s18
        %s208 = smul.u32 16, %s18
        %v209 = vld [vmem:[%s200] sm:$0xff]
        %v210 = vld [vmem:[%s200 + $0x8] sm:$0xff]
        %v211 = vld [vmem:[%s200 + $0x10] sm:$0xff]
        %v212 = vld [vmem:[%s200 + $0x18] sm:$0xff]
        %v213 = vld [vmem:[%s200 + $0x20] sm:$0xff]
        %v214 = vld [vmem:[%s200 + $0x28] sm:$0xff]
        %v215 = vld [vmem:[%s200 + $0x30] sm:$0xff]
        %v216 = vld [vmem:[%s200 + $0x38] sm:$0xff]
        %v217 = vld [vmem:[%s200 + $0x40] sm:$0xff]
        %v218 = vld [vmem:[%s200 + $0x48] sm:$0xff]
        %v219 = vld [vmem:[%s200 + $0x50] sm:$0xff]
        %v220 = vld [vmem:[%s200 + $0x58] sm:$0xff]
        %v221 = vld [vmem:[%s200 + $0x60] sm:$0xff]
        %v222 = vld [vmem:[%s200 + $0x68] sm:$0xff]
        %v223 = vld [vmem:[%s200 + $0x70] sm:$0xff]
        %v224 = vld [vmem:[%s200 + $0x78] sm:$0xff]
        %v225 = vld [vmem:[%s206] sm:$0xff]
        %v226 = vld [vmem:[%s206 + $0x8] sm:$0xff]
        %v227 = vld [vmem:[%s206 + $0x10] sm:$0xff]
        %v228 = vld [vmem:[%s206 + $0x18] sm:$0xff]
        %v229 = vld [vmem:[%s206 + $0x20] sm:$0xff]
        %v230 = vld [vmem:[%s206 + $0x28] sm:$0xff]
        %v231 = vld [vmem:[%s206 + $0x30] sm:$0xff]
        %v232 = vld [vmem:[%s206 + $0x38] sm:$0xff]
        %v233 = vld [vmem:[%s206 + $0x40] sm:$0xff]
        %v234 = vld [vmem:[%s206 + $0x48] sm:$0xff]
        %v235 = vld [vmem:[%s206 + $0x50] sm:$0xff]
        %v236 = vld [vmem:[%s206 + $0x58] sm:$0xff]
        %v237 = vld [vmem:[%s206 + $0x60] sm:$0xff]
        %v238 = vld [vmem:[%s206 + $0x68] sm:$0xff]
        %v239 = vld [vmem:[%s206 + $0x70] sm:$0xff]
        %v240 = vld [vmem:[%s206 + $0x78] sm:$0xff]
        %v241 = vld [vmem:[#allocation2] sm:$0xff]
        %v242 = vld [vmem:[#allocation2 + $0x8] sm:$0xff]
        %v243 = vld [vmem:[#allocation2 + $0x10] sm:$0xff]
        %v244 = vld [vmem:[#allocation2 + $0x18] sm:$0xff]
        %vm245 = vcmask 261120
        %v247 = vsel %vm245, %v209, 0
        %v250 = vsel %vm245, %v210, 0
        %v253 = vsel %vm245, %v211, 0
        %v256 = vsel %vm245, %v212, 0
        %v259 = vsel %vm245, %v213, 0
        %v262 = vsel %vm245, %v214, 0
        %v265 = vsel %vm245, %v215, 0
        %v268 = vsel %vm245, %v216, 0
        %v271 = vsel %vm245, %v217, 0
        %v274 = vsel %vm245, %v218, 0
        %v277 = vsel %vm245, %v219, 0
        %v280 = vsel %vm245, %v220, 0
        %v283 = vsel %vm245, %v221, 0
        %v286 = vsel %vm245, %v222, 0
        %v289 = vsel %vm245, %v223, 0
        %v292 = vsel %vm245, %v224, 0
        %294 = vmatprep.subr.mxu0 0.0
        %295 = vmatpush1.msra.mxu0 %v241
        %296 = vmatprep.subr.mxu0 0.0
        %297 = vmatpush1.msra.mxu0 %v242
        %298 = vmatprep.subr.mxu0 0.0
        %299 = vmatpush1.msra.mxu0 %v243
        %300 = vmatprep.subr.mxu0 0.0
        %301 = vmatpush1.msra.mxu0 %v244
        %302 = vmatprep.subr.mxu0 0.0
        %303 = vmatpush1.msra.mxu0 0.0
        %304 = vmatprep.subr.mxu0 0.0
        %305 = vmatpush1.msra.mxu0 0.0
        %306 = vmatprep.subr.mxu0 0.0
        %307 = vmatpush1.msra.mxu0 0.0
        %308 = vmatprep.subr.mxu0 0.0
        %309 = vmatpush1.msra.mxu0 0.0
        %310 = vmatprep.subr.mxu0 0.0
        %311 = vmatpush1.msra.mxu0 0.0
        %312 = vmatprep.subr.mxu0 0.0
        %313 = vmatpush1.msra.mxu0 0.0
        %314 = vmatprep.subr.mxu0 0.0
        %315 = vmatpush1.msra.mxu0 0.0
        %316 = vmatprep.subr.mxu0 0.0
        %317 = vmatpush1.msra.mxu0 0.0
        %318 = vmatprep.subr.mxu0 0.0
        %319 = vmatpush1.msra.mxu0 0.0
        %320 = vmatprep.subr.mxu0 0.0
        %321 = vmatpush1.msra.mxu0 0.0
        %322 = vmatprep.subr.mxu0 0.0
        %323 = vmatpush1.msra.mxu0 0.0
        %324 = vmatprep.subr.mxu0 0.0
        %325 = vmatpush1.msra.mxu0 0.0
        %326 = vmatprep.subr.mxu0 0.0
        %327 = vmatpush1.msra.mxu0 0.0
        %328 = vmatprep.subr.mxu0 0.0
        %329 = vmatpush1.msra.mxu0 0.0
        %330 = vmatprep.subr.mxu0 0.0
        %331 = vmatpush1.msra.mxu0 0.0
        %332 = vmatprep.subr.mxu0 0.0
        %333 = vmatpush1.msra.mxu0 0.0
        %334 = vmatprep.subr.mxu0 0.0
        %335 = vmatpush1.msra.mxu0 0.0
        %336 = vmatprep.subr.mxu0 0.0
        %337 = vmatpush1.msra.mxu0 0.0
        %338 = vmatprep.subr.mxu0 0.0
        %339 = vmatpush1.msra.mxu0 0.0
        %340 = vmatprep.subr.mxu0 0.0
        %341 = vmatpush1.msra.mxu0 0.0
        %342 = vmatprep.subr.mxu0 0.0
        %343 = vmatpush1.msra.mxu0 0.0
        %344 = vmatprep.subr.mxu0 0.0
        %345 = vmatpush1.msra.mxu0 0.0
        %346 = vmatprep.subr.mxu0 0.0
        %347 = vmatpush1.msra.mxu0 0.0
        %348 = vmatprep.subr.mxu0 0.0
        %349 = vmatpush1.msra.mxu0 0.0
        %350 = vmatprep.subr.mxu0 0.0
        %351 = vmatpush1.msra.mxu0 0.0
        %352 = vmatprep.subr.mxu0 0.0
        %353 = vmatpush1.msra.mxu0 0.0
        %354 = vmatprep.subr.mxu0 0.0
        %355 = vmatpush1.msra.mxu0 0.0
        %356 = vmatprep.subr.mxu0 0.0
        %357 = vmatpush1.msra.mxu0 0.0
        %358 = vmatprep.mubr.f32.mxu0 0.0
        %359 = vmatmul.mubr.f32.gmra.mrb[0].mxu0 %v247
        %v360 = vpop.f32.mrb[0].mxu0
        %v361 = vadd.f32 0.0, %v360
        %v362 = vpop.f32.mrb[0].mxu0
        %363 = vmatprep.mubr.f32.mxu0 0.0
        %364 = vmatmul.mubr.f32.gmra.mrb[0].mxu0 %v250
        %v365 = vpop.f32.mrb[0].mxu0
        %v366 = vadd.f32 0.0, %v365
        %v367 = vpop.f32.mrb[0].mxu0
        %368 = vmatprep.mubr.f32.mxu0 0.0
        %369 = vmatmul.mubr.f32.gmra.mrb[0].mxu0 %v253
        %v370 = vpop.f32.mrb[0].mxu0
        %v371 = vadd.f32 0.0, %v370
        %v372 = vpop.f32.mrb[0].mxu0
        %373 = vmatprep.mubr.f32.mxu0 0.0
        %374 = vmatmul.mubr.f32.gmra.mrb[0].mxu0 %v256
        %v375 = vpop.f32.mrb[0].mxu0
        %v376 = vadd.f32 0.0, %v375
        %v377 = vpop.f32.mrb[0].mxu0
        %378 = vmatprep.mubr.f32.mxu0 0.0
        %379 = vmatmul.mubr.f32.gmra.mrb[0].mxu0 %v259
        %v380 = vpop.f32.mrb[0].mxu0
        %v381 = vadd.f32 0.0, %v380
        %v382 = vpop.f32.mrb[0].mxu0
        %383 = vmatprep.mubr.f32.mxu0 0.0
        %384 = vmatmul.mubr.f32.gmra.mrb[0].mxu0 %v262
        %v385 = vpop.f32.mrb[0].mxu0
        %v386 = vadd.f32 0.0, %v385
        %v387 = vpop.f32.mrb[0].mxu0
        %388 = vmatprep.mubr.f32.mxu0 0.0
        %389 = vmatmul.mubr.f32.gmra.mrb[0].mxu0 %v265
        %v390 = vpop.f32.mrb[0].mxu0
        %v391 = vadd.f32 0.0, %v390
        %v392 = vpop.f32.mrb[0].mxu0
        %393 = vmatprep.mubr.f32.mxu0 0.0
        %394 = vmatmul.mubr.f32.gmra.mrb[0].mxu0 %v268
        %v395 = vpop.f32.mrb[0].mxu0
        %v396 = vadd.f32 0.0, %v395
        %v397 = vpop.f32.mrb[0].mxu0
        %398 = vmatprep.mubr.f32.mxu0 0.0
        %399 = vmatmul.mubr.f32.gmra.mrb[0].mxu0 %v271
        %v400 = vpop.f32.mrb[0].mxu0
        %v401 = vadd.f32 0.0, %v400
        %v402 = vpop.f32.mrb[0].mxu0
        %403 = vmatprep.mubr.f32.mxu0 0.0
        %404 = vmatmul.mubr.f32.gmra.mrb[0].mxu0 %v274
        %v405 = vpop.f32.mrb[0].mxu0
        %v406 = vadd.f32 0.0, %v405
        %v407 = vpop.f32.mrb[0].mxu0
        %408 = vmatprep.mubr.f32.mxu0 0.0
        %409 = vmatmul.mubr.f32.gmra.mrb[0].mxu0 %v277
        %v410 = vpop.f32.mrb[0].mxu0
        %v411 = vadd.f32 0.0, %v410
        %v412 = vpop.f32.mrb[0].mxu0
        %413 = vmatprep.mubr.f32.mxu0 0.0
        %414 = vmatmul.mubr.f32.gmra.mrb[0].mxu0 %v280
        %v415 = vpop.f32.mrb[0].mxu0
        %v416 = vadd.f32 0.0, %v415
        %v417 = vpop.f32.mrb[0].mxu0
        %418 = vmatprep.mubr.f32.mxu0 0.0
        %419 = vmatmul.mubr.f32.gmra.mrb[0].mxu0 %v283
        %v420 = vpop.f32.mrb[0].mxu0
        %v421 = vadd.f32 0.0, %v420
        %v422 = vpop.f32.mrb[0].mxu0
        %423 = vmatprep.mubr.f32.mxu0 0.0
        %424 = vmatmul.mubr.f32.gmra.mrb[0].mxu0 %v286
        %v425 = vpop.f32.mrb[0].mxu0
        %v426 = vadd.f32 0.0, %v425
        %v427 = vpop.f32.mrb[0].mxu0
        %428 = vmatprep.mubr.f32.mxu0 0.0
        %429 = vmatmul.mubr.f32.gmra.mrb[0].mxu0 %v289
        %v430 = vpop.f32.mrb[0].mxu0
        %v431 = vadd.f32 0.0, %v430
        %v432 = vpop.f32.mrb[0].mxu0
        %433 = vmatprep.mubr.f32.mxu0 0.0
        %434 = vmatmul.mubr.f32.gmra.mrb[0].mxu0 %v292
        %v435 = vpop.f32.mrb[0].mxu0
        %v436 = vadd.f32 0.0, %v435
        %v437 = vpop.f32.mrb[0].mxu0
        %438 = vdwg.mxu0
        %v439 = vld [vmem:[#allocation2 + $0xb0] sm:$0x1]
        %v441 = vsel %vm245, %v439, 0
        %v444 = vsel %vm245, %v361, 0
        %v447 = vsel %vm245, %v366, 0
        %v450 = vsel %vm245, %v371, 0
        %v453 = vsel %vm245, %v376, 0
        %v456 = vsel %vm245, %v381, 0
        %v459 = vsel %vm245, %v386, 0
        %v462 = vsel %vm245, %v391, 0
        %v465 = vsel %vm245, %v396, 0
        %v468 = vsel %vm245, %v401, 0
        %v471 = vsel %vm245, %v406, 0
        %v474 = vsel %vm245, %v411, 0
        %v477 = vsel %vm245, %v416, 0
        %v480 = vsel %vm245, %v421, 0
        %v483 = vsel %vm245, %v426, 0
        %v486 = vsel %vm245, %v431, 0
        %v489 = vsel %vm245, %v436, 0
        %491 = vmatprep.subr.mxu0 0.0
        %492 = vmatpush1.xpose.msra.mxu0 %v444
        %493 = vmatprep.subr.mxu0 0.0
        %494 = vmatpush1.xpose.msra.mxu0 %v447
        %495 = vmatprep.subr.mxu0 0.0
        %496 = vmatpush1.xpose.msra.mxu0 %v450
        %497 = vmatprep.subr.mxu0 0.0
        %498 = vmatpush1.xpose.msra.mxu0 %v453
        %499 = vmatprep.subr.mxu0 0.0
        %500 = vmatpush1.xpose.msra.mxu0 %v456
        %501 = vmatprep.subr.mxu0 0.0
        %502 = vmatpush1.xpose.msra.mxu0 %v459
        %503 = vmatprep.subr.mxu0 0.0
        %504 = vmatpush1.xpose.msra.mxu0 %v462
        %505 = vmatprep.subr.mxu0 0.0
        %506 = vmatpush1.xpose.msra.mxu0 %v465
        %507 = vmatprep.subr.mxu0 0.0
        %508 = vmatpush1.xpose.msra.mxu0 %v468
        %509 = vmatprep.subr.mxu0 0.0
        %510 = vmatpush1.xpose.msra.mxu0 %v471
        %511 = vmatprep.subr.mxu0 0.0
        %512 = vmatpush1.xpose.msra.mxu0 %v474
        %513 = vmatprep.subr.mxu0 0.0
        %514 = vmatpush1.xpose.msra.mxu0 %v477
        %515 = vmatprep.subr.mxu0 0.0
        %516 = vmatpush1.xpose.msra.mxu0 %v480
        %517 = vmatprep.subr.mxu0 0.0
        %518 = vmatpush1.xpose.msra.mxu0 %v483
        %519 = vmatprep.subr.mxu0 0.0
        %520 = vmatpush1.xpose.msra.mxu0 %v486
        %521 = vmatprep.subr.mxu0 0.0
        %522 = vmatpush1.xpose.msra.mxu0 %v489
        %523 = vmatprep.subr.mxu0 0.0
        %524 = vmatpush1.xpose.msra.mxu0 0.0
        %525 = vmatprep.subr.mxu0 0.0
        %526 = vmatpush1.xpose.msra.mxu0 0.0
        %527 = vmatprep.subr.mxu0 0.0
        %528 = vmatpush1.xpose.msra.mxu0 0.0
        %529 = vmatprep.subr.mxu0 0.0
        %530 = vmatpush1.xpose.msra.mxu0 0.0
        %531 = vmatprep.subr.mxu0 0.0
        %532 = vmatpush1.xpose.msra.mxu0 0.0
        %533 = vmatprep.subr.mxu0 0.0
        %534 = vmatpush1.xpose.msra.mxu0 0.0
        %535 = vmatprep.subr.mxu0 0.0
        %536 = vmatpush1.xpose.msra.mxu0 0.0
        %537 = vmatprep.subr.mxu0 0.0
        %538 = vmatpush1.xpose.msra.mxu0 0.0
        %539 = vmatprep.subr.mxu0 0.0
        %540 = vmatpush1.xpose.msra.mxu0 0.0
        %541 = vmatprep.subr.mxu0 0.0
        %542 = vmatpush1.xpose.msra.mxu0 0.0
        %543 = vmatprep.subr.mxu0 0.0
        %544 = vmatpush1.xpose.msra.mxu0 0.0
        %545 = vmatprep.subr.mxu0 0.0
        %546 = vmatpush1.xpose.msra.mxu0 0.0
        %547 = vmatprep.subr.mxu0 0.0
        %548 = vmatpush1.xpose.msra.mxu0 0.0
        %549 = vmatprep.subr.mxu0 0.0
        %550 = vmatpush1.xpose.msra.mxu0 0.0
        %551 = vmatprep.subr.mxu0 0.0
        %552 = vmatpush1.xpose.msra.mxu0 0.0
        %553 = vmatprep.subr.mxu0 0.0
        %554 = vmatpush1.xpose.msra.mxu0 0.0
        %555 = vmatprep.mubr.f32.mxu0 0.0
        %556 = vmatmul.mubr.f32.gmra.mrb[0].mxu0 %v441
        %v557 = vpop.f32.mrb[0].mxu0
        %v558 = vadd.f32 0.0, %v557
        %v559 = vpop.f32.mrb[0].mxu0
        %560 = vdwg.mxu0
        %561 = vset.pattern.permute.xlu0 32
        %562 = vperm.xlu0 %561, %v361
        %v563 = vpop.permute.xlu0 %562
        %565 = vset.pattern.permute.xlu0 32
        %566 = vperm.xlu0 %565, %v366
        %v567 = vpop.permute.xlu0 %566
        %569 = vset.pattern.permute.xlu0 32
        %570 = vperm.xlu0 %569, %v371
        %v571 = vpop.permute.xlu0 %570
        %573 = vset.pattern.permute.xlu0 32
        %574 = vperm.xlu0 %573, %v376
        %v575 = vpop.permute.xlu0 %574
        %577 = vset.pattern.permute.xlu0 32
        %578 = vperm.xlu0 %577, %v381
        %v579 = vpop.permute.xlu0 %578
        %581 = vset.pattern.permute.xlu0 32
        %582 = vperm.xlu0 %581, %v386
        %v583 = vpop.permute.xlu0 %582
        %585 = vset.pattern.permute.xlu0 32
        %586 = vperm.xlu0 %585, %v391
        %v587 = vpop.permute.xlu0 %586
        %589 = vset.pattern.permute.xlu0 32
        %590 = vperm.xlu0 %589, %v396
        %v591 = vpop.permute.xlu0 %590
        %593 = vset.pattern.permute.xlu0 32
        %594 = vperm.xlu0 %593, %v401
        %v595 = vpop.permute.xlu0 %594
        %597 = vset.pattern.permute.xlu0 32
        %598 = vperm.xlu0 %597, %v406
        %v599 = vpop.permute.xlu0 %598
        %601 = vset.pattern.permute.xlu0 32
        %602 = vperm.xlu0 %601, %v411
        %v603 = vpop.permute.xlu0 %602
        %605 = vset.pattern.permute.xlu0 32
        %606 = vperm.xlu0 %605, %v416
        %v607 = vpop.permute.xlu0 %606
        %609 = vset.pattern.permute.xlu0 32
        %610 = vperm.xlu0 %609, %v421
        %v611 = vpop.permute.xlu0 %610
        %613 = vset.pattern.permute.xlu0 32
        %614 = vperm.xlu0 %613, %v426
        %v615 = vpop.permute.xlu0 %614
        %617 = vset.pattern.permute.xlu0 32
        %618 = vperm.xlu0 %617, %v431
        %v619 = vpop.permute.xlu0 %618
        %621 = vset.pattern.permute.xlu0 32
        %622 = vperm.xlu0 %621, %v436
        %v623 = vpop.permute.xlu0 %622
        %v625 = vlaneseq
        %v626 = vshrl.u32 %v625, 7
        %v627 = vsub.s32 0, %v626
        %v628 = vrot.slane %v558, %v627
        %v629 = vadd.f32 %v563, %v628
        %v630 = vadd.f32 %v567, %v628
        %v631 = vadd.f32 %v571, %v628
        %v632 = vadd.f32 %v575, %v628
        %v633 = vadd.f32 %v579, %v628
        %v634 = vadd.f32 %v583, %v628
        %v635 = vadd.f32 %v587, %v628
        %v636 = vadd.f32 %v591, %v628
        %v637 = vadd.f32 %v595, %v628
        %v638 = vadd.f32 %v599, %v628
        %v639 = vadd.f32 %v603, %v628
        %v640 = vadd.f32 %v607, %v628
        %v641 = vadd.f32 %v611, %v628
        %v642 = vadd.f32 %v615, %v628
        %v643 = vadd.f32 %v619, %v628
        %v644 = vadd.f32 %v623, %v628
        %vm645 = vcmp.gt.f32.partialorder %v629, 0.0
        %vm646 = vcmp.gt.f32.partialorder %v630, 0.0
        %vm647 = vcmp.gt.f32.partialorder %v631, 0.0
        %vm648 = vcmp.gt.f32.partialorder %v632, 0.0
        %vm649 = vcmp.gt.f32.partialorder %v633, 0.0
        %vm650 = vcmp.gt.f32.partialorder %v634, 0.0
        %vm651 = vcmp.gt.f32.partialorder %v635, 0.0
        %vm652 = vcmp.gt.f32.partialorder %v636, 0.0
        %vm653 = vcmp.gt.f32.partialorder %v637, 0.0
        %vm654 = vcmp.gt.f32.partialorder %v638, 0.0
        %vm655 = vcmp.gt.f32.partialorder %v639, 0.0
        %vm656 = vcmp.gt.f32.partialorder %v640, 0.0
        %vm657 = vcmp.gt.f32.partialorder %v641, 0.0
        %vm658 = vcmp.gt.f32.partialorder %v642, 0.0
        %vm659 = vcmp.gt.f32.partialorder %v643, 0.0
        %vm660 = vcmp.gt.f32.partialorder %v644, 0.0
        %v661 = vmul.f32 %v629, 0.2
        %v662 = vmul.f32 %v630, 0.2
        %v663 = vmul.f32 %v631, 0.2
        %v664 = vmul.f32 %v632, 0.2
        %v665 = vmul.f32 %v633, 0.2
        %v666 = vmul.f32 %v634, 0.2
        %v667 = vmul.f32 %v635, 0.2
        %v668 = vmul.f32 %v636, 0.2
        %v669 = vmul.f32 %v637, 0.2
        %v670 = vmul.f32 %v638, 0.2
        %v671 = vmul.f32 %v639, 0.2
        %v672 = vmul.f32 %v640, 0.2
        %v673 = vmul.f32 %v641, 0.2
        %v674 = vmul.f32 %v642, 0.2
        %v675 = vmul.f32 %v643, 0.2
        %v676 = vmul.f32 %v644, 0.2
        %v677 = vsel %vm645, %v629, %v661
        %v678 = vsel %vm646, %v630, %v662
        %v679 = vsel %vm647, %v631, %v663
        %v680 = vsel %vm648, %v632, %v664
        %v681 = vsel %vm649, %v633, %v665
        %v682 = vsel %vm650, %v634, %v666
        %v683 = vsel %vm651, %v635, %v667
        %v684 = vsel %vm652, %v636, %v668
        %v685 = vsel %vm653, %v637, %v669
        %v686 = vsel %vm654, %v638, %v670
        %v687 = vsel %vm655, %v639, %v671
        %v688 = vsel %vm656, %v640, %v672
        %v689 = vsel %vm657, %v641, %v673
        %v690 = vsel %vm658, %v642, %v674
        %v691 = vsel %vm659, %v643, %v675
        %v692 = vsel %vm660, %v644, %v676
        %v693 = vadd.f32 %v677, %v225
        %v694 = vadd.f32 %v678, %v226
        %v695 = vadd.f32 %v679, %v227
        %v696 = vadd.f32 %v680, %v228
        %v697 = vadd.f32 %v681, %v229
        %v698 = vadd.f32 %v682, %v230
        %v699 = vadd.f32 %v683, %v231
        %v700 = vadd.f32 %v684, %v232
        %v701 = vadd.f32 %v685, %v233
        %v702 = vadd.f32 %v686, %v234
        %v703 = vadd.f32 %v687, %v235
        %v704 = vadd.f32 %v688, %v236
        %v705 = vadd.f32 %v689, %v237
        %v706 = vadd.f32 %v690, %v238
        %v707 = vadd.f32 %v691, %v239
        %v708 = vadd.f32 %v692, %v240
        %709 = vmax.xlane.f32.xlu0 %v693
        %v710 = vpop.xlane.xlu0 %709
        %711 = vmax.xlane.f32.xlu0 %v694
        %v712 = vpop.xlane.xlu0 %711
        %713 = vmax.xlane.f32.xlu0 %v695
        %v714 = vpop.xlane.xlu0 %713
        %715 = vmax.xlane.f32.xlu0 %v696
        %v716 = vpop.xlane.xlu0 %715
        %717 = vmax.xlane.f32.xlu0 %v697
        %v718 = vpop.xlane.xlu0 %717
        %719 = vmax.xlane.f32.xlu0 %v698
        %v720 = vpop.xlane.xlu0 %719
        %721 = vmax.xlane.f32.xlu0 %v699
        %v722 = vpop.xlane.xlu0 %721
        %723 = vmax.xlane.f32.xlu0 %v700
        %v724 = vpop.xlane.xlu0 %723
        %725 = vmax.xlane.f32.xlu0 %v701
        %v726 = vpop.xlane.xlu0 %725
        %727 = vmax.xlane.f32.xlu0 %v702
        %v728 = vpop.xlane.xlu0 %727
        %729 = vmax.xlane.f32.xlu0 %v703
        %v730 = vpop.xlane.xlu0 %729
        %731 = vmax.xlane.f32.xlu0 %v704
        %v732 = vpop.xlane.xlu0 %731
        %733 = vmax.xlane.f32.xlu0 %v705
        %v734 = vpop.xlane.xlu0 %733
        %735 = vmax.xlane.f32.xlu0 %v706
        %v736 = vpop.xlane.xlu0 %735
        %737 = vmax.xlane.f32.xlu0 %v707
        %v738 = vpop.xlane.xlu0 %737
        %739 = vmax.xlane.f32.xlu0 %v708
        %v740 = vpop.xlane.xlu0 %739
        %v741 = vsub.f32 %v693, %v710
        %v742 = vsub.f32 %v694, %v712
        %v743 = vsub.f32 %v695, %v714
        %v744 = vsub.f32 %v696, %v716
        %v745 = vsub.f32 %v697, %v718
        %v746 = vsub.f32 %v698, %v720
        %v747 = vsub.f32 %v699, %v722
        %v748 = vsub.f32 %v700, %v724
        %v749 = vsub.f32 %v701, %v726
        %v750 = vsub.f32 %v702, %v728
        %v751 = vsub.f32 %v703, %v730
        %v752 = vsub.f32 %v704, %v732
        %v753 = vsub.f32 %v705, %v734
        %v754 = vsub.f32 %v706, %v736
        %v755 = vsub.f32 %v707, %v738
        %v756 = vsub.f32 %v708, %v740
        %v757 = vmul.f32 %v741, 1.442695
        %v758 = vpow.pop %v757
        %v759 = vmul.f32 %v742, 1.442695
        %v760 = vpow.pop %v759
        %v761 = vmul.f32 %v743, 1.442695
        %v762 = vpow.pop %v761
        %v763 = vmul.f32 %v744, 1.442695
        %v764 = vpow.pop %v763
        %v765 = vmul.f32 %v745, 1.442695
        %v766 = vpow.pop %v765
        %v767 = vmul.f32 %v746, 1.442695
        %v768 = vpow.pop %v767
        %v769 = vmul.f32 %v747, 1.442695
        %v770 = vpow.pop %v769
        %v771 = vmul.f32 %v748, 1.442695
        %v772 = vpow.pop %v771
        %v773 = vmul.f32 %v749, 1.442695
        %v774 = vpow.pop %v773
        %v775 = vmul.f32 %v750, 1.442695
        %v776 = vpow.pop %v775
        %v777 = vmul.f32 %v751, 1.442695
        %v778 = vpow.pop %v777
        %v779 = vmul.f32 %v752, 1.442695
        %v780 = vpow.pop %v779
        %v781 = vmul.f32 %v753, 1.442695
        %v782 = vpow.pop %v781
        %v783 = vmul.f32 %v754, 1.442695
        %v784 = vpow.pop %v783
        %v785 = vmul.f32 %v755, 1.442695
        %v786 = vpow.pop %v785
        %v787 = vmul.f32 %v756, 1.442695
        %v788 = vpow.pop %v787
        %789 = vadd.xlane.f32.xlu0 %v758
        %v790 = vpop.xlane.xlu0 %789
        %791 = vadd.xlane.f32.xlu0 %v760
        %v792 = vpop.xlane.xlu0 %791
        %793 = vadd.xlane.f32.xlu0 %v762
        %v794 = vpop.xlane.xlu0 %793
        %795 = vadd.xlane.f32.xlu0 %v764
        %v796 = vpop.xlane.xlu0 %795
        %797 = vadd.xlane.f32.xlu0 %v766
        %v798 = vpop.xlane.xlu0 %797
        %799 = vadd.xlane.f32.xlu0 %v768
        %v800 = vpop.xlane.xlu0 %799
        %801 = vadd.xlane.f32.xlu0 %v770
        %v802 = vpop.xlane.xlu0 %801
        %803 = vadd.xlane.f32.xlu0 %v772
        %v804 = vpop.xlane.xlu0 %803
        %805 = vadd.xlane.f32.xlu0 %v774
        %v806 = vpop.xlane.xlu0 %805
        %807 = vadd.xlane.f32.xlu0 %v776
        %v808 = vpop.xlane.xlu0 %807
        %809 = vadd.xlane.f32.xlu0 %v778
        %v810 = vpop.xlane.xlu0 %809
        %811 = vadd.xlane.f32.xlu0 %v780
        %v812 = vpop.xlane.xlu0 %811
        %813 = vadd.xlane.f32.xlu0 %v782
        %v814 = vpop.xlane.xlu0 %813
        %815 = vadd.xlane.f32.xlu0 %v784
        %v816 = vpop.xlane.xlu0 %815
        %817 = vadd.xlane.f32.xlu0 %v786
        %v818 = vpop.xlane.xlu0 %817
        %819 = vadd.xlane.f32.xlu0 %v788
        %v820 = vpop.xlane.xlu0 %819
        %v821 = vrcp.pop %v790
        %v822 = vrcp.pop %v792
        %v823 = vrcp.pop %v794
        %v824 = vrcp.pop %v796
        %v825 = vrcp.pop %v798
        %v826 = vrcp.pop %v800
        %v827 = vrcp.pop %v802
        %v828 = vrcp.pop %v804
        %v829 = vrcp.pop %v806
        %v830 = vrcp.pop %v808
        %v831 = vrcp.pop %v810
        %v832 = vrcp.pop %v812
        %v833 = vrcp.pop %v814
        %v834 = vrcp.pop %v816
        %v835 = vrcp.pop %v818
        %v836 = vrcp.pop %v820
        %v837 = vmul.f32 %v790, %v821
        %v838 = vmul.f32 %v792, %v822
        %v839 = vmul.f32 %v794, %v823
        %v840 = vmul.f32 %v796, %v824
        %v841 = vmul.f32 %v798, %v825
        %v842 = vmul.f32 %v800, %v826
        %v843 = vmul.f32 %v802, %v827
        %v844 = vmul.f32 %v804, %v828
        %v845 = vmul.f32 %v806, %v829
        %v846 = vmul.f32 %v808, %v830
        %v847 = vmul.f32 %v810, %v831
        %v848 = vmul.f32 %v812, %v832
        %v849 = vmul.f32 %v814, %v833
        %v850 = vmul.f32 %v816, %v834
        %v851 = vmul.f32 %v818, %v835
        %v852 = vmul.f32 %v820, %v836
        %v853 = vsub.f32 2.0, %v837
        %v854 = vsub.f32 2.0, %v838
        %v855 = vsub.f32 2.0, %v839
        %v856 = vsub.f32 2.0, %v840
        %v857 = vsub.f32 2.0, %v841
        %v858 = vsub.f32 2.0, %v842
        %v859 = vsub.f32 2.0, %v843
        %v860 = vsub.f32 2.0, %v844
        %v861 = vsub.f32 2.0, %v845
        %v862 = vsub.f32 2.0, %v846
        %v863 = vsub.f32 2.0, %v847
        %v864 = vsub.f32 2.0, %v848
        %v865 = vsub.f32 2.0, %v849
        %v866 = vsub.f32 2.0, %v850
        %v867 = vsub.f32 2.0, %v851
        %v868 = vsub.f32 2.0, %v852
        %v869 = vmul.f32 %v821, %v853
        %v870 = vmul.f32 %v822, %v854
        %v871 = vmul.f32 %v823, %v855
        %v872 = vmul.f32 %v824, %v856
        %v873 = vmul.f32 %v825, %v857
        %v874 = vmul.f32 %v826, %v858
        %v875 = vmul.f32 %v827, %v859
        %v876 = vmul.f32 %v828, %v860
        %v877 = vmul.f32 %v829, %v861
        %v878 = vmul.f32 %v830, %v862
        %v879 = vmul.f32 %v831, %v863
        %v880 = vmul.f32 %v832, %v864
        %v881 = vmul.f32 %v833, %v865
        %v882 = vmul.f32 %v834, %v866
        %v883 = vmul.f32 %v835, %v867
        %v884 = vmul.f32 %v836, %v868
        %v885 = vmul.f32 %v758, %v869
        %v886 = vmul.f32 %v760, %v870
        %v887 = vmul.f32 %v762, %v871
        %v888 = vmul.f32 %v764, %v872
        %v889 = vmul.f32 %v766, %v873
        %v890 = vmul.f32 %v768, %v874
        %v891 = vmul.f32 %v770, %v875
        %v892 = vmul.f32 %v772, %v876
        %v893 = vmul.f32 %v774, %v877
        %v894 = vmul.f32 %v776, %v878
        %v895 = vmul.f32 %v778, %v879
        %v896 = vmul.f32 %v780, %v880
        %v897 = vmul.f32 %v782, %v881
        %v898 = vmul.f32 %v784, %v882
        %v899 = vmul.f32 %v786, %v883
        %v900 = vmul.f32 %v788, %v884
        %901 = vmatprep.subr.mxu0 0.0
        %902 = vmatpush1.msra.mxu0 %v361
        %903 = vmatprep.subr.mxu0 0.0
        %904 = vmatpush1.msra.mxu0 %v366
        %905 = vmatprep.subr.mxu0 0.0
        %906 = vmatpush1.msra.mxu0 %v371
        %907 = vmatprep.subr.mxu0 0.0
        %908 = vmatpush1.msra.mxu0 %v376
        %909 = vmatprep.subr.mxu0 0.0
        %910 = vmatpush1.msra.mxu0 %v381
        %911 = vmatprep.subr.mxu0 0.0
        %912 = vmatpush1.msra.mxu0 %v386
        %913 = vmatprep.subr.mxu0 0.0
        %914 = vmatpush1.msra.mxu0 %v391
        %915 = vmatprep.subr.mxu0 0.0
        %916 = vmatpush1.msra.mxu0 %v396
        %917 = vmatprep.subr.mxu0 0.0
        %918 = vmatpush1.msra.mxu0 %v401
        %919 = vmatprep.subr.mxu0 0.0
        %920 = vmatpush1.msra.mxu0 %v406
        %921 = vmatprep.subr.mxu0 0.0
        %922 = vmatpush1.msra.mxu0 %v411
        %923 = vmatprep.subr.mxu0 0.0
        %924 = vmatpush1.msra.mxu0 %v416
        %925 = vmatprep.subr.mxu0 0.0
        %926 = vmatpush1.msra.mxu0 %v421
        %927 = vmatprep.subr.mxu0 0.0
        %928 = vmatpush1.msra.mxu0 %v426
        %929 = vmatprep.subr.mxu0 0.0
        %930 = vmatpush1.msra.mxu0 %v431
        %931 = vmatprep.subr.mxu0 0.0
        %932 = vmatpush1.msra.mxu0 %v436
        %933 = vmatprep.subr.mxu0 0.0
        %934 = vmatpush1.msra.mxu0 0.0
        %935 = vmatprep.subr.mxu0 0.0
        %936 = vmatpush1.msra.mxu0 0.0
        %937 = vmatprep.subr.mxu0 0.0
        %938 = vmatpush1.msra.mxu0 0.0
        %939 = vmatprep.subr.mxu0 0.0
        %940 = vmatpush1.msra.mxu0 0.0
        %941 = vmatprep.subr.mxu0 0.0
        %942 = vmatpush1.msra.mxu0 0.0
        %943 = vmatprep.subr.mxu0 0.0
        %944 = vmatpush1.msra.mxu0 0.0
        %945 = vmatprep.subr.mxu0 0.0
        %946 = vmatpush1.msra.mxu0 0.0
        %947 = vmatprep.subr.mxu0 0.0
        %948 = vmatpush1.msra.mxu0 0.0
        %949 = vmatprep.subr.mxu0 0.0
        %950 = vmatpush1.msra.mxu0 0.0
        %951 = vmatprep.subr.mxu0 0.0
        %952 = vmatpush1.msra.mxu0 0.0
        %953 = vmatprep.subr.mxu0 0.0
        %954 = vmatpush1.msra.mxu0 0.0
        %955 = vmatprep.subr.mxu0 0.0
        %956 = vmatpush1.msra.mxu0 0.0
        %957 = vmatprep.subr.mxu0 0.0
        %958 = vmatpush1.msra.mxu0 0.0
        %959 = vmatprep.subr.mxu0 0.0
        %960 = vmatpush1.msra.mxu0 0.0
        %961 = vmatprep.subr.mxu0 0.0
        %962 = vmatpush1.msra.mxu0 0.0
        %963 = vmatprep.subr.mxu0 0.0
        %964 = vmatpush1.msra.mxu0 0.0
        %965 = vmatprep.mubr.f32.mxu0 0.0
        %966 = vmatmul.mubr.f32.gmra.mrb[0].mxu0 %v885
        %v967 = vpop.f32.mrb[0].mxu0
        %v968 = vadd.f32 0.0, %v967
        %v969 = vpop.f32.mrb[0].mxu0
        %970 = vmatprep.mubr.f32.mxu0 0.0
        %971 = vmatmul.mubr.f32.gmra.mrb[0].mxu0 %v886
        %v972 = vpop.f32.mrb[0].mxu0
        %v973 = vadd.f32 0.0, %v972
        %v974 = vpop.f32.mrb[0].mxu0
        %975 = vmatprep.mubr.f32.mxu0 0.0
        %976 = vmatmul.mubr.f32.gmra.mrb[0].mxu0 %v887
        %v977 = vpop.f32.mrb[0].mxu0
        %v978 = vadd.f32 0.0, %v977
        %v979 = vpop.f32.mrb[0].mxu0
        %980 = vmatprep.mubr.f32.mxu0 0.0
        %981 = vmatmul.mubr.f32.gmra.mrb[0].mxu0 %v888
        %v982 = vpop.f32.mrb[0].mxu0
        %v983 = vadd.f32 0.0, %v982
        %v984 = vpop.f32.mrb[0].mxu0
        %985 = vmatprep.mubr.f32.mxu0 0.0
        %986 = vmatmul.mubr.f32.gmra.mrb[0].mxu0 %v889
        %v987 = vpop.f32.mrb[0].mxu0
        %v988 = vadd.f32 0.0, %v987
        %v989 = vpop.f32.mrb[0].mxu0
        %990 = vmatprep.mubr.f32.mxu0 0.0
        %991 = vmatmul.mubr.f32.gmra.mrb[0].mxu0 %v890
        %v992 = vpop.f32.mrb[0].mxu0
        %v993 = vadd.f32 0.0, %v992
        %v994 = vpop.f32.mrb[0].mxu0
        %995 = vmatprep.mubr.f32.mxu0 0.0
        %996 = vmatmul.mubr.f32.gmra.mrb[0].mxu0 %v891
        %v997 = vpop.f32.mrb[0].mxu0
        %v998 = vadd.f32 0.0, %v997
        %v999 = vpop.f32.mrb[0].mxu0
        %1000 = vmatprep.mubr.f32.mxu0 0.0
        %1001 = vmatmul.mubr.f32.gmra.mrb[0].mxu0 %v892
        %v1002 = vpop.f32.mrb[0].mxu0
        %v1003 = vadd.f32 0.0, %v1002
        %v1004 = vpop.f32.mrb[0].mxu0
        %1005 = vmatprep.mubr.f32.mxu0 0.0
        %1006 = vmatmul.mubr.f32.gmra.mrb[0].mxu0 %v893
        %v1007 = vpop.f32.mrb[0].mxu0
        %v1008 = vadd.f32 0.0, %v1007
        %v1009 = vpop.f32.mrb[0].mxu0
        %1010 = vmatprep.mubr.f32.mxu0 0.0
        %1011 = vmatmul.mubr.f32.gmra.mrb[0].mxu0 %v894
        %v1012 = vpop.f32.mrb[0].mxu0
        %v1013 = vadd.f32 0.0, %v1012
        %v1014 = vpop.f32.mrb[0].mxu0
        %1015 = vmatprep.mubr.f32.mxu0 0.0
        %1016 = vmatmul.mubr.f32.gmra.mrb[0].mxu0 %v895
        %v1017 = vpop.f32.mrb[0].mxu0
        %v1018 = vadd.f32 0.0, %v1017
        %v1019 = vpop.f32.mrb[0].mxu0
        %1020 = vmatprep.mubr.f32.mxu0 0.0
        %1021 = vmatmul.mubr.f32.gmra.mrb[0].mxu0 %v896
        %v1022 = vpop.f32.mrb[0].mxu0
        %v1023 = vadd.f32 0.0, %v1022
        %v1024 = vpop.f32.mrb[0].mxu0
        %1025 = vmatprep.mubr.f32.mxu0 0.0
        %1026 = vmatmul.mubr.f32.gmra.mrb[0].mxu0 %v897
        %v1027 = vpop.f32.mrb[0].mxu0
        %v1028 = vadd.f32 0.0, %v1027
        %v1029 = vpop.f32.mrb[0].mxu0
        %1030 = vmatprep.mubr.f32.mxu0 0.0
        %1031 = vmatmul.mubr.f32.gmra.mrb[0].mxu0 %v898
        %v1032 = vpop.f32.mrb[0].mxu0
        %v1033 = vadd.f32 0.0, %v1032
        %v1034 = vpop.f32.mrb[0].mxu0
        %1035 = vmatprep.mubr.f32.mxu0 0.0
        %1036 = vmatmul.mubr.f32.gmra.mrb[0].mxu0 %v899
        %v1037 = vpop.f32.mrb[0].mxu0
        %v1038 = vadd.f32 0.0, %v1037
        %v1039 = vpop.f32.mrb[0].mxu0
        %1040 = vmatprep.mubr.f32.mxu0 0.0
        %1041 = vmatmul.mubr.f32.gmra.mrb[0].mxu0 %v900
        %v1042 = vpop.f32.mrb[0].mxu0
        %v1043 = vadd.f32 0.0, %v1042
        %v1044 = vpop.f32.mrb[0].mxu0
        %1045 = vdwg.mxu0
        %vm1046 = vcmp.gt.f32.partialorder %v968, 0.0
        %vm1047 = vcmp.gt.f32.partialorder %v973, 0.0
        %vm1048 = vcmp.gt.f32.partialorder %v978, 0.0
        %vm1049 = vcmp.gt.f32.partialorder %v983, 0.0
        %vm1050 = vcmp.gt.f32.partialorder %v988, 0.0
        %vm1051 = vcmp.gt.f32.partialorder %v993, 0.0
        %vm1052 = vcmp.gt.f32.partialorder %v998, 0.0
        %vm1053 = vcmp.gt.f32.partialorder %v1003, 0.0
        %vm1054 = vcmp.gt.f32.partialorder %v1008, 0.0
        %vm1055 = vcmp.gt.f32.partialorder %v1013, 0.0
        %vm1056 = vcmp.gt.f32.partialorder %v1018, 0.0
        %vm1057 = vcmp.gt.f32.partialorder %v1023, 0.0
        %vm1058 = vcmp.gt.f32.partialorder %v1028, 0.0
        %vm1059 = vcmp.gt.f32.partialorder %v1033, 0.0
        %vm1060 = vcmp.gt.f32.partialorder %v1038, 0.0
        %vm1061 = vcmp.gt.f32.partialorder %v1043, 0.0
        %v1062 = vmul.f32 %v968, 1.442695
        %v1063 = vpow.pop %v1062
        %v1064 = vmul.f32 %v973, 1.442695
        %v1065 = vpow.pop %v1064
        %v1066 = vmul.f32 %v978, 1.442695
        %v1067 = vpow.pop %v1066
        %v1068 = vmul.f32 %v983, 1.442695
        %v1069 = vpow.pop %v1068
        %v1070 = vmul.f32 %v988, 1.442695
        %v1071 = vpow.pop %v1070
        %v1072 = vmul.f32 %v993, 1.442695
        %v1073 = vpow.pop %v1072
        %v1074 = vmul.f32 %v998, 1.442695
        %v1075 = vpow.pop %v1074
        %v1076 = vmul.f32 %v1003, 1.442695
        %v1077 = vpow.pop %v1076
        %v1078 = vmul.f32 %v1008, 1.442695
        %v1079 = vpow.pop %v1078
        %v1080 = vmul.f32 %v1013, 1.442695
        %v1081 = vpow.pop %v1080
        %v1082 = vmul.f32 %v1018, 1.442695
        %v1083 = vpow.pop %v1082
        %v1084 = vmul.f32 %v1023, 1.442695
        %v1085 = vpow.pop %v1084
        %v1086 = vmul.f32 %v1028, 1.442695
        %v1087 = vpow.pop %v1086
        %v1088 = vmul.f32 %v1033, 1.442695
        %v1089 = vpow.pop %v1088
        %v1090 = vmul.f32 %v1038, 1.442695
        %v1091 = vpow.pop %v1090
        %v1092 = vmul.f32 %v1043, 1.442695
        %v1093 = vpow.pop %v1092
        %v1094 = vsub.f32 %v1063, 1.0
        %v1095 = vsub.f32 %v1065, 1.0
        %v1096 = vsub.f32 %v1067, 1.0
        %v1097 = vsub.f32 %v1069, 1.0
        %v1098 = vsub.f32 %v1071, 1.0
        %v1099 = vsub.f32 %v1073, 1.0
        %v1100 = vsub.f32 %v1075, 1.0
        %v1101 = vsub.f32 %v1077, 1.0
        %v1102 = vsub.f32 %v1079, 1.0
        %v1103 = vsub.f32 %v1081, 1.0
        %v1104 = vsub.f32 %v1083, 1.0
        %v1105 = vsub.f32 %v1085, 1.0
        %v1106 = vsub.f32 %v1087, 1.0
        %v1107 = vsub.f32 %v1089, 1.0
        %v1108 = vsub.f32 %v1091, 1.0
        %v1109 = vsub.f32 %v1093, 1.0
        %v1110 = vsel %vm1046, %v968, %v1094
        %v1111 = vsel %vm1047, %v973, %v1095
        %v1112 = vsel %vm1048, %v978, %v1096
        %v1113 = vsel %vm1049, %v983, %v1097
        %v1114 = vsel %vm1050, %v988, %v1098
        %v1115 = vsel %vm1051, %v993, %v1099
        %v1116 = vsel %vm1052, %v998, %v1100
        %v1117 = vsel %vm1053, %v1003, %v1101
        %v1118 = vsel %vm1054, %v1008, %v1102
        %v1119 = vsel %vm1055, %v1013, %v1103
        %v1120 = vsel %vm1056, %v1018, %v1104
        %v1121 = vsel %vm1057, %v1023, %v1105
        %v1122 = vsel %vm1058, %v1028, %v1106
        %v1123 = vsel %vm1059, %v1033, %v1107
        %v1124 = vsel %vm1060, %v1038, %v1108
        %v1125 = vsel %vm1061, %v1043, %v1109
        %v1126 = vld [vmem:[#allocation2 + $0x20] sm:$0xff]
        %v1127 = vld [vmem:[#allocation2 + $0x28] sm:$0xff]
        %v1128 = vld [vmem:[#allocation2 + $0x30] sm:$0xff]
        %v1129 = vld [vmem:[#allocation2 + $0x38] sm:$0xff]
        %v1131 = vsel %vm245, %v1110, 0
        %v1134 = vsel %vm245, %v1111, 0
        %v1137 = vsel %vm245, %v1112, 0
        %v1140 = vsel %vm245, %v1113, 0
        %v1143 = vsel %vm245, %v1114, 0
        %v1146 = vsel %vm245, %v1115, 0
        %v1149 = vsel %vm245, %v1116, 0
        %v1152 = vsel %vm245, %v1117, 0
        %v1155 = vsel %vm245, %v1118, 0
        %v1158 = vsel %vm245, %v1119, 0
        %v1161 = vsel %vm245, %v1120, 0
        %v1164 = vsel %vm245, %v1121, 0
        %v1167 = vsel %vm245, %v1122, 0
        %v1170 = vsel %vm245, %v1123, 0
        %v1173 = vsel %vm245, %v1124, 0
        %v1176 = vsel %vm245, %v1125, 0
        %1178 = vmatprep.subr.mxu0 0.0
        %1179 = vmatpush1.msra.mxu0 %v1126
        %1180 = vmatprep.subr.mxu0 0.0
        %1181 = vmatpush1.msra.mxu0 %v1127
        %1182 = vmatprep.subr.mxu0 0.0
        %1183 = vmatpush1.msra.mxu0 %v1128
        %1184 = vmatprep.subr.mxu0 0.0
        %1185 = vmatpush1.msra.mxu0 %v1129
        %1186 = vmatprep.subr.mxu0 0.0
        %1187 = vmatpush1.msra.mxu0 0.0
        %1188 = vmatprep.subr.mxu0 0.0
        %1189 = vmatpush1.msra.mxu0 0.0
        %1190 = vmatprep.subr.mxu0 0.0
        %1191 = vmatpush1.msra.mxu0 0.0
        %1192 = vmatprep.subr.mxu0 0.0
        %1193 = vmatpush1.msra.mxu0 0.0
        %1194 = vmatprep.subr.mxu0 0.0
        %1195 = vmatpush1.msra.mxu0 0.0
        %1196 = vmatprep.subr.mxu0 0.0
        %1197 = vmatpush1.msra.mxu0 0.0
        %1198 = vmatprep.subr.mxu0 0.0
        %1199 = vmatpush1.msra.mxu0 0.0
        %1200 = vmatprep.subr.mxu0 0.0
        %1201 = vmatpush1.msra.mxu0 0.0
        %1202 = vmatprep.subr.mxu0 0.0
        %1203 = vmatpush1.msra.mxu0 0.0
        %1204 = vmatprep.subr.mxu0 0.0
        %1205 = vmatpush1.msra.mxu0 0.0
        %1206 = vmatprep.subr.mxu0 0.0
        %1207 = vmatpush1.msra.mxu0 0.0
        %1208 = vmatprep.subr.mxu0 0.0
        %1209 = vmatpush1.msra.mxu0 0.0
        %1210 = vmatprep.subr.mxu0 0.0
        %1211 = vmatpush1.msra.mxu0 0.0
        %1212 = vmatprep.subr.mxu0 0.0
        %1213 = vmatpush1.msra.mxu0 0.0
        %1214 = vmatprep.subr.mxu0 0.0
        %1215 = vmatpush1.msra.mxu0 0.0
        %1216 = vmatprep.subr.mxu0 0.0
        %1217 = vmatpush1.msra.mxu0 0.0
        %1218 = vmatprep.subr.mxu0 0.0
        %1219 = vmatpush1.msra.mxu0 0.0
        %1220 = vmatprep.subr.mxu0 0.0
        %1221 = vmatpush1.msra.mxu0 0.0
        %1222 = vmatprep.subr.mxu0 0.0
        %1223 = vmatpush1.msra.mxu0 0.0
        %1224 = vmatprep.subr.mxu0 0.0
        %1225 = vmatpush1.msra.mxu0 0.0
        %1226 = vmatprep.subr.mxu0 0.0
        %1227 = vmatpush1.msra.mxu0 0.0
        %1228 = vmatprep.subr.mxu0 0.0
        %1229 = vmatpush1.msra.mxu0 0.0
        %1230 = vmatprep.subr.mxu0 0.0
        %1231 = vmatpush1.msra.mxu0 0.0
        %1232 = vmatprep.subr.mxu0 0.0
        %1233 = vmatpush1.msra.mxu0 0.0
        %1234 = vmatprep.subr.mxu0 0.0
        %1235 = vmatpush1.msra.mxu0 0.0
        %1236 = vmatprep.subr.mxu0 0.0
        %1237 = vmatpush1.msra.mxu0 0.0
        %1238 = vmatprep.subr.mxu0 0.0
        %1239 = vmatpush1.msra.mxu0 0.0
        %1240 = vmatprep.subr.mxu0 0.0
        %1241 = vmatpush1.msra.mxu0 0.0
        %1242 = vmatprep.mubr.f32.mxu0 0.0
        %1243 = vmatmul.mubr.f32.gmra.mrb[0].mxu0 %v1131
        %v1244 = vpop.f32.mrb[0].mxu0
        %v1245 = vadd.f32 0.0, %v1244
        %v1246 = vpop.f32.mrb[0].mxu0
        %1247 = vmatprep.mubr.f32.mxu0 0.0
        %1248 = vmatmul.mubr.f32.gmra.mrb[0].mxu0 %v1134
        %v1249 = vpop.f32.mrb[0].mxu0
        %v1250 = vadd.f32 0.0, %v1249
        %v1251 = vpop.f32.mrb[0].mxu0
        %1252 = vmatprep.mubr.f32.mxu0 0.0
        %1253 = vmatmul.mubr.f32.gmra.mrb[0].mxu0 %v1137
        %v1254 = vpop.f32.mrb[0].mxu0
        %v1255 = vadd.f32 0.0, %v1254
        %v1256 = vpop.f32.mrb[0].mxu0
        %1257 = vmatprep.mubr.f32.mxu0 0.0
        %1258 = vmatmul.mubr.f32.gmra.mrb[0].mxu0 %v1140
        %v1259 = vpop.f32.mrb[0].mxu0
        %v1260 = vadd.f32 0.0, %v1259
        %v1261 = vpop.f32.mrb[0].mxu0
        %1262 = vmatprep.mubr.f32.mxu0 0.0
        %1263 = vmatmul.mubr.f32.gmra.mrb[0].mxu0 %v1143
        %v1264 = vpop.f32.mrb[0].mxu0
        %v1265 = vadd.f32 0.0, %v1264
        %v1266 = vpop.f32.mrb[0].mxu0
        %1267 = vmatprep.mubr.f32.mxu0 0.0
        %1268 = vmatmul.mubr.f32.gmra.mrb[0].mxu0 %v1146
        %v1269 = vpop.f32.mrb[0].mxu0
        %v1270 = vadd.f32 0.0, %v1269
        %v1271 = vpop.f32.mrb[0].mxu0
        %1272 = vmatprep.mubr.f32.mxu0 0.0
        %1273 = vmatmul.mubr.f32.gmra.mrb[0].mxu0 %v1149
        %v1274 = vpop.f32.mrb[0].mxu0
        %v1275 = vadd.f32 0.0, %v1274
        %v1276 = vpop.f32.mrb[0].mxu0
        %1277 = vmatprep.mubr.f32.mxu0 0.0
        %1278 = vmatmul.mubr.f32.gmra.mrb[0].mxu0 %v1152
        %v1279 = vpop.f32.mrb[0].mxu0
        %v1280 = vadd.f32 0.0, %v1279
        %v1281 = vpop.f32.mrb[0].mxu0
        %1282 = vmatprep.mubr.f32.mxu0 0.0
        %1283 = vmatmul.mubr.f32.gmra.mrb[0].mxu0 %v1155
        %v1284 = vpop.f32.mrb[0].mxu0
        %v1285 = vadd.f32 0.0, %v1284
        %v1286 = vpop.f32.mrb[0].mxu0
        %1287 = vmatprep.mubr.f32.mxu0 0.0
        %1288 = vmatmul.mubr.f32.gmra.mrb[0].mxu0 %v1158
        %v1289 = vpop.f32.mrb[0].mxu0
        %v1290 = vadd.f32 0.0, %v1289
        %v1291 = vpop.f32.mrb[0].mxu0
        %1292 = vmatprep.mubr.f32.mxu0 0.0
        %1293 = vmatmul.mubr.f32.gmra.mrb[0].mxu0 %v1161
        %v1294 = vpop.f32.mrb[0].mxu0
        %v1295 = vadd.f32 0.0, %v1294
        %v1296 = vpop.f32.mrb[0].mxu0
        %1297 = vmatprep.mubr.f32.mxu0 0.0
        %1298 = vmatmul.mubr.f32.gmra.mrb[0].mxu0 %v1164
        %v1299 = vpop.f32.mrb[0].mxu0
        %v1300 = vadd.f32 0.0, %v1299
        %v1301 = vpop.f32.mrb[0].mxu0
        %1302 = vmatprep.mubr.f32.mxu0 0.0
        %1303 = vmatmul.mubr.f32.gmra.mrb[0].mxu0 %v1167
        %v1304 = vpop.f32.mrb[0].mxu0
        %v1305 = vadd.f32 0.0, %v1304
        %v1306 = vpop.f32.mrb[0].mxu0
        %1307 = vmatprep.mubr.f32.mxu0 0.0
        %1308 = vmatmul.mubr.f32.gmra.mrb[0].mxu0 %v1170
        %v1309 = vpop.f32.mrb[0].mxu0
        %v1310 = vadd.f32 0.0, %v1309
        %v1311 = vpop.f32.mrb[0].mxu0
        %1312 = vmatprep.mubr.f32.mxu0 0.0
        %1313 = vmatmul.mubr.f32.gmra.mrb[0].mxu0 %v1173
        %v1314 = vpop.f32.mrb[0].mxu0
        %v1315 = vadd.f32 0.0, %v1314
        %v1316 = vpop.f32.mrb[0].mxu0
        %1317 = vmatprep.mubr.f32.mxu0 0.0
        %1318 = vmatmul.mubr.f32.gmra.mrb[0].mxu0 %v1176
        %v1319 = vpop.f32.mrb[0].mxu0
        %v1320 = vadd.f32 0.0, %v1319
        %v1321 = vpop.f32.mrb[0].mxu0
        %1322 = vdwg.mxu0
        %v1323 = vld [vmem:[#allocation2 + $0x40] sm:$0xff]
        %v1324 = vld [vmem:[#allocation2 + $0x48] sm:$0xff]
        %v1325 = vld [vmem:[#allocation2 + $0x50] sm:$0xff]
        %v1326 = vld [vmem:[#allocation2 + $0x58] sm:$0xff]
        %1327 = vmatprep.subr.mxu0 0.0
        %1328 = vmatpush1.msra.mxu0 %v1323
        %1329 = vmatprep.subr.mxu0 0.0
        %1330 = vmatpush1.msra.mxu0 %v1324
        %1331 = vmatprep.subr.mxu0 0.0
        %1332 = vmatpush1.msra.mxu0 %v1325
        %1333 = vmatprep.subr.mxu0 0.0
        %1334 = vmatpush1.msra.mxu0 %v1326
        %1335 = vmatprep.subr.mxu0 0.0
        %1336 = vmatpush1.msra.mxu0 0.0
        %1337 = vmatprep.subr.mxu0 0.0
        %1338 = vmatpush1.msra.mxu0 0.0
        %1339 = vmatprep.subr.mxu0 0.0
        %1340 = vmatpush1.msra.mxu0 0.0
        %1341 = vmatprep.subr.mxu0 0.0
        %1342 = vmatpush1.msra.mxu0 0.0
        %1343 = vmatprep.subr.mxu0 0.0
        %1344 = vmatpush1.msra.mxu0 0.0
        %1345 = vmatprep.subr.mxu0 0.0
        %1346 = vmatpush1.msra.mxu0 0.0
        %1347 = vmatprep.subr.mxu0 0.0
        %1348 = vmatpush1.msra.mxu0 0.0
        %1349 = vmatprep.subr.mxu0 0.0
        %1350 = vmatpush1.msra.mxu0 0.0
        %1351 = vmatprep.subr.mxu0 0.0
        %1352 = vmatpush1.msra.mxu0 0.0
        %1353 = vmatprep.subr.mxu0 0.0
        %1354 = vmatpush1.msra.mxu0 0.0
        %1355 = vmatprep.subr.mxu0 0.0
        %1356 = vmatpush1.msra.mxu0 0.0
        %1357 = vmatprep.subr.mxu0 0.0
        %1358 = vmatpush1.msra.mxu0 0.0
        %1359 = vmatprep.subr.mxu0 0.0
        %1360 = vmatpush1.msra.mxu0 0.0
        %1361 = vmatprep.subr.mxu0 0.0
        %1362 = vmatpush1.msra.mxu0 0.0
        %1363 = vmatprep.subr.mxu0 0.0
        %1364 = vmatpush1.msra.mxu0 0.0
        %1365 = vmatprep.subr.mxu0 0.0
        %1366 = vmatpush1.msra.mxu0 0.0
        %1367 = vmatprep.subr.mxu0 0.0
        %1368 = vmatpush1.msra.mxu0 0.0
        %1369 = vmatprep.subr.mxu0 0.0
        %1370 = vmatpush1.msra.mxu0 0.0
        %1371 = vmatprep.subr.mxu0 0.0
        %1372 = vmatpush1.msra.mxu0 0.0
        %1373 = vmatprep.subr.mxu0 0.0
        %1374 = vmatpush1.msra.mxu0 0.0
        %1375 = vmatprep.subr.mxu0 0.0
        %1376 = vmatpush1.msra.mxu0 0.0
        %1377 = vmatprep.subr.mxu0 0.0
        %1378 = vmatpush1.msra.mxu0 0.0
        %1379 = vmatprep.subr.mxu0 0.0
        %1380 = vmatpush1.msra.mxu0 0.0
        %1381 = vmatprep.subr.mxu0 0.0
        %1382 = vmatpush1.msra.mxu0 0.0
        %1383 = vmatprep.subr.mxu0 0.0
        %1384 = vmatpush1.msra.mxu0 0.0
        %1385 = vmatprep.subr.mxu0 0.0
        %1386 = vmatpush1.msra.mxu0 0.0
        %1387 = vmatprep.subr.mxu0 0.0
        %1388 = vmatpush1.msra.mxu0 0.0
        %1389 = vmatprep.subr.mxu0 0.0
        %1390 = vmatpush1.msra.mxu0 0.0
        %1391 = vmatprep.mubr.f32.mxu0 0.0
        %1392 = vmatmul.mubr.f32.gmra.mrb[0].mxu0 %v1131
        %v1393 = vpop.f32.mrb[0].mxu0
        %v1394 = vadd.f32 0.0, %v1393
        %v1395 = vpop.f32.mrb[0].mxu0
        %1396 = vmatprep.mubr.f32.mxu0 0.0
        %1397 = vmatmul.mubr.f32.gmra.mrb[0].mxu0 %v1134
        %v1398 = vpop.f32.mrb[0].mxu0
        %v1399 = vadd.f32 0.0, %v1398
        %v1400 = vpop.f32.mrb[0].mxu0
        %1401 = vmatprep.mubr.f32.mxu0 0.0
        %1402 = vmatmul.mubr.f32.gmra.mrb[0].mxu0 %v1137
        %v1403 = vpop.f32.mrb[0].mxu0
        %v1404 = vadd.f32 0.0, %v1403
        %v1405 = vpop.f32.mrb[0].mxu0
        %1406 = vmatprep.mubr.f32.mxu0 0.0
        %1407 = vmatmul.mubr.f32.gmra.mrb[0].mxu0 %v1140
        %v1408 = vpop.f32.mrb[0].mxu0
        %v1409 = vadd.f32 0.0, %v1408
        %v1410 = vpop.f32.mrb[0].mxu0
        %1411 = vmatprep.mubr.f32.mxu0 0.0
        %1412 = vmatmul.mubr.f32.gmra.mrb[0].mxu0 %v1143
        %v1413 = vpop.f32.mrb[0].mxu0
        %v1414 = vadd.f32 0.0, %v1413
        %v1415 = vpop.f32.mrb[0].mxu0
        %1416 = vmatprep.mubr.f32.mxu0 0.0
        %1417 = vmatmul.mubr.f32.gmra.mrb[0].mxu0 %v1146
        %v1418 = vpop.f32.mrb[0].mxu0
        %v1419 = vadd.f32 0.0, %v1418
        %v1420 = vpop.f32.mrb[0].mxu0
        %1421 = vmatprep.mubr.f32.mxu0 0.0
        %1422 = vmatmul.mubr.f32.gmra.mrb[0].mxu0 %v1149
        %v1423 = vpop.f32.mrb[0].mxu0
        %v1424 = vadd.f32 0.0, %v1423
        %v1425 = vpop.f32.mrb[0].mxu0
        %1426 = vmatprep.mubr.f32.mxu0 0.0
        %1427 = vmatmul.mubr.f32.gmra.mrb[0].mxu0 %v1152
        %v1428 = vpop.f32.mrb[0].mxu0
        %v1429 = vadd.f32 0.0, %v1428
        %v1430 = vpop.f32.mrb[0].mxu0
        %1431 = vmatprep.mubr.f32.mxu0 0.0
        %1432 = vmatmul.mubr.f32.gmra.mrb[0].mxu0 %v1155
        %v1433 = vpop.f32.mrb[0].mxu0
        %v1434 = vadd.f32 0.0, %v1433
        %v1435 = vpop.f32.mrb[0].mxu0
        %1436 = vmatprep.mubr.f32.mxu0 0.0
        %1437 = vmatmul.mubr.f32.gmra.mrb[0].mxu0 %v1158
        %v1438 = vpop.f32.mrb[0].mxu0
        %v1439 = vadd.f32 0.0, %v1438
        %v1440 = vpop.f32.mrb[0].mxu0
        %1441 = vmatprep.mubr.f32.mxu0 0.0
        %1442 = vmatmul.mubr.f32.gmra.mrb[0].mxu0 %v1161
        %v1443 = vpop.f32.mrb[0].mxu0
        %v1444 = vadd.f32 0.0, %v1443
        %v1445 = vpop.f32.mrb[0].mxu0
        %1446 = vmatprep.mubr.f32.mxu0 0.0
        %1447 = vmatmul.mubr.f32.gmra.mrb[0].mxu0 %v1164
        %v1448 = vpop.f32.mrb[0].mxu0
        %v1449 = vadd.f32 0.0, %v1448
        %v1450 = vpop.f32.mrb[0].mxu0
        %1451 = vmatprep.mubr.f32.mxu0 0.0
        %1452 = vmatmul.mubr.f32.gmra.mrb[0].mxu0 %v1167
        %v1453 = vpop.f32.mrb[0].mxu0
        %v1454 = vadd.f32 0.0, %v1453
        %v1455 = vpop.f32.mrb[0].mxu0
        %1456 = vmatprep.mubr.f32.mxu0 0.0
        %1457 = vmatmul.mubr.f32.gmra.mrb[0].mxu0 %v1170
        %v1458 = vpop.f32.mrb[0].mxu0
        %v1459 = vadd.f32 0.0, %v1458
        %v1460 = vpop.f32.mrb[0].mxu0
        %1461 = vmatprep.mubr.f32.mxu0 0.0
        %1462 = vmatmul.mubr.f32.gmra.mrb[0].mxu0 %v1173
        %v1463 = vpop.f32.mrb[0].mxu0
        %v1464 = vadd.f32 0.0, %v1463
        %v1465 = vpop.f32.mrb[0].mxu0
        %1466 = vmatprep.mubr.f32.mxu0 0.0
        %1467 = vmatmul.mubr.f32.gmra.mrb[0].mxu0 %v1176
        %v1468 = vpop.f32.mrb[0].mxu0
        %v1469 = vadd.f32 0.0, %v1468
        %v1470 = vpop.f32.mrb[0].mxu0
        %1471 = vdwg.mxu0
        %v1472 = vld [vmem:[#allocation2 + $0xb8] sm:$0x1]
        %vm1473 = vcmask 130048
        %v1475 = vsel %vm1473, %v1472, 0
        %v1478 = vsel %vm1473, %v1245, 0
        %v1481 = vsel %vm1473, %v1250, 0
        %v1484 = vsel %vm1473, %v1255, 0
        %v1487 = vsel %vm1473, %v1260, 0
        %v1490 = vsel %vm1473, %v1265, 0
        %v1493 = vsel %vm1473, %v1270, 0
        %v1496 = vsel %vm1473, %v1275, 0
        %v1499 = vsel %vm1473, %v1280, 0
        %v1502 = vsel %vm1473, %v1285, 0
        %v1505 = vsel %vm1473, %v1290, 0
        %v1508 = vsel %vm1473, %v1295, 0
        %v1511 = vsel %vm1473, %v1300, 0
        %v1514 = vsel %vm1473, %v1305, 0
        %v1517 = vsel %vm1473, %v1310, 0
        %v1520 = vsel %vm1473, %v1315, 0
        %v1523 = vsel %vm1473, %v1320, 0
        %1525 = vmatprep.subr.mxu0 0.0
        %1526 = vmatpush1.xpose.msra.mxu0 %v1478
        %1527 = vmatprep.subr.mxu0 0.0
        %1528 = vmatpush1.xpose.msra.mxu0 %v1481
        %1529 = vmatprep.subr.mxu0 0.0
        %1530 = vmatpush1.xpose.msra.mxu0 %v1484
        %1531 = vmatprep.subr.mxu0 0.0
        %1532 = vmatpush1.xpose.msra.mxu0 %v1487
        %1533 = vmatprep.subr.mxu0 0.0
        %1534 = vmatpush1.xpose.msra.mxu0 %v1490
        %1535 = vmatprep.subr.mxu0 0.0
        %1536 = vmatpush1.xpose.msra.mxu0 %v1493
        %1537 = vmatprep.subr.mxu0 0.0
        %1538 = vmatpush1.xpose.msra.mxu0 %v1496
        %1539 = vmatprep.subr.mxu0 0.0
        %1540 = vmatpush1.xpose.msra.mxu0 %v1499
        %1541 = vmatprep.subr.mxu0 0.0
        %1542 = vmatpush1.xpose.msra.mxu0 %v1502
        %1543 = vmatprep.subr.mxu0 0.0
        %1544 = vmatpush1.xpose.msra.mxu0 %v1505
        %1545 = vmatprep.subr.mxu0 0.0
        %1546 = vmatpush1.xpose.msra.mxu0 %v1508
        %1547 = vmatprep.subr.mxu0 0.0
        %1548 = vmatpush1.xpose.msra.mxu0 %v1511
        %1549 = vmatprep.subr.mxu0 0.0
        %1550 = vmatpush1.xpose.msra.mxu0 %v1514
        %1551 = vmatprep.subr.mxu0 0.0
        %1552 = vmatpush1.xpose.msra.mxu0 %v1517
        %1553 = vmatprep.subr.mxu0 0.0
        %1554 = vmatpush1.xpose.msra.mxu0 %v1520
        %1555 = vmatprep.subr.mxu0 0.0
        %1556 = vmatpush1.xpose.msra.mxu0 %v1523
        %1557 = vmatprep.subr.mxu0 0.0
        %1558 = vmatpush1.xpose.msra.mxu0 0.0
        %1559 = vmatprep.subr.mxu0 0.0
        %1560 = vmatpush1.xpose.msra.mxu0 0.0
        %1561 = vmatprep.subr.mxu0 0.0
        %1562 = vmatpush1.xpose.msra.mxu0 0.0
        %1563 = vmatprep.subr.mxu0 0.0
        %1564 = vmatpush1.xpose.msra.mxu0 0.0
        %1565 = vmatprep.subr.mxu0 0.0
        %1566 = vmatpush1.xpose.msra.mxu0 0.0
        %1567 = vmatprep.subr.mxu0 0.0
        %1568 = vmatpush1.xpose.msra.mxu0 0.0
        %1569 = vmatprep.subr.mxu0 0.0
        %1570 = vmatpush1.xpose.msra.mxu0 0.0
        %1571 = vmatprep.subr.mxu0 0.0
        %1572 = vmatpush1.xpose.msra.mxu0 0.0
        %1573 = vmatprep.subr.mxu0 0.0
        %1574 = vmatpush1.xpose.msra.mxu0 0.0
        %1575 = vmatprep.subr.mxu0 0.0
        %1576 = vmatpush1.xpose.msra.mxu0 0.0
        %1577 = vmatprep.subr.mxu0 0.0
        %1578 = vmatpush1.xpose.msra.mxu0 0.0
        %1579 = vmatprep.subr.mxu0 0.0
        %1580 = vmatpush1.xpose.msra.mxu0 0.0
        %1581 = vmatprep.subr.mxu0 0.0
        %1582 = vmatpush1.xpose.msra.mxu0 0.0
        %1583 = vmatprep.subr.mxu0 0.0
        %1584 = vmatpush1.xpose.msra.mxu0 0.0
        %1585 = vmatprep.subr.mxu0 0.0
        %1586 = vmatpush1.xpose.msra.mxu0 0.0
        %1587 = vmatprep.subr.mxu0 0.0
        %1588 = vmatpush1.xpose.msra.mxu0 0.0
        %1589 = vmatprep.mubr.f32.mxu0 0.0
        %1590 = vmatmul.mubr.f32.gmra.mrb[0].mxu0 %v1475
        %v1591 = vpop.f32.mrb[0].mxu0
        %v1592 = vadd.f32 0.0, %v1591
        %v1593 = vpop.f32.mrb[0].mxu0
        %1594 = vdwg.mxu0
        %1595 = vset.pattern.permute.xlu0 16
        %1596 = vperm.xlu0 %1595, %v1245
        %v1597 = vpop.permute.xlu0 %1596
        %1599 = vset.pattern.permute.xlu0 16
        %1600 = vperm.xlu0 %1599, %v1250
        %v1601 = vpop.permute.xlu0 %1600
        %1603 = vset.pattern.permute.xlu0 16
        %1604 = vperm.xlu0 %1603, %v1255
        %v1605 = vpop.permute.xlu0 %1604
        %1607 = vset.pattern.permute.xlu0 16
        %1608 = vperm.xlu0 %1607, %v1260
        %v1609 = vpop.permute.xlu0 %1608
        %1611 = vset.pattern.permute.xlu0 16
        %1612 = vperm.xlu0 %1611, %v1265
        %v1613 = vpop.permute.xlu0 %1612
        %1615 = vset.pattern.permute.xlu0 16
        %1616 = vperm.xlu0 %1615, %v1270
        %v1617 = vpop.permute.xlu0 %1616
        %1619 = vset.pattern.permute.xlu0 16
        %1620 = vperm.xlu0 %1619, %v1275
        %v1621 = vpop.permute.xlu0 %1620
        %1623 = vset.pattern.permute.xlu0 16
        %1624 = vperm.xlu0 %1623, %v1280
        %v1625 = vpop.permute.xlu0 %1624
        %1627 = vset.pattern.permute.xlu0 16
        %1628 = vperm.xlu0 %1627, %v1285
        %v1629 = vpop.permute.xlu0 %1628
        %1631 = vset.pattern.permute.xlu0 16
        %1632 = vperm.xlu0 %1631, %v1290
        %v1633 = vpop.permute.xlu0 %1632
        %1635 = vset.pattern.permute.xlu0 16
        %1636 = vperm.xlu0 %1635, %v1295
        %v1637 = vpop.permute.xlu0 %1636
        %1639 = vset.pattern.permute.xlu0 16
        %1640 = vperm.xlu0 %1639, %v1300
        %v1641 = vpop.permute.xlu0 %1640
        %1643 = vset.pattern.permute.xlu0 16
        %1644 = vperm.xlu0 %1643, %v1305
        %v1645 = vpop.permute.xlu0 %1644
        %1647 = vset.pattern.permute.xlu0 16
        %1648 = vperm.xlu0 %1647, %v1310
        %v1649 = vpop.permute.xlu0 %1648
        %1651 = vset.pattern.permute.xlu0 16
        %1652 = vperm.xlu0 %1651, %v1315
        %v1653 = vpop.permute.xlu0 %1652
        %1655 = vset.pattern.permute.xlu0 16
        %1656 = vperm.xlu0 %1655, %v1320
        %v1657 = vpop.permute.xlu0 %1656
        %v1659 = vlaneseq
        %v1660 = vshrl.u32 %v1659, 7
        %v1661 = vsub.s32 0, %v1660
        %v1662 = vrot.slane %v1592, %v1661
        %v1663 = vadd.f32 %v1597, %v1662
        %v1664 = vadd.f32 %v1601, %v1662
        %v1665 = vadd.f32 %v1605, %v1662
        %v1666 = vadd.f32 %v1609, %v1662
        %v1667 = vadd.f32 %v1613, %v1662
        %v1668 = vadd.f32 %v1617, %v1662
        %v1669 = vadd.f32 %v1621, %v1662
        %v1670 = vadd.f32 %v1625, %v1662
        %v1671 = vadd.f32 %v1629, %v1662
        %v1672 = vadd.f32 %v1633, %v1662
        %v1673 = vadd.f32 %v1637, %v1662
        %v1674 = vadd.f32 %v1641, %v1662
        %v1675 = vadd.f32 %v1645, %v1662
        %v1676 = vadd.f32 %v1649, %v1662
        %v1677 = vadd.f32 %v1653, %v1662
        %v1678 = vadd.f32 %v1657, %v1662
        %vm1679 = vcmp.gt.f32.partialorder %v1663, 0.0
        %vm1680 = vcmp.gt.f32.partialorder %v1664, 0.0
        %vm1681 = vcmp.gt.f32.partialorder %v1665, 0.0
        %vm1682 = vcmp.gt.f32.partialorder %v1666, 0.0
        %vm1683 = vcmp.gt.f32.partialorder %v1667, 0.0
        %vm1684 = vcmp.gt.f32.partialorder %v1668, 0.0
        %vm1685 = vcmp.gt.f32.partialorder %v1669, 0.0
        %vm1686 = vcmp.gt.f32.partialorder %v1670, 0.0
        %vm1687 = vcmp.gt.f32.partialorder %v1671, 0.0
        %vm1688 = vcmp.gt.f32.partialorder %v1672, 0.0
        %vm1689 = vcmp.gt.f32.partialorder %v1673, 0.0
        %vm1690 = vcmp.gt.f32.partialorder %v1674, 0.0
        %vm1691 = vcmp.gt.f32.partialorder %v1675, 0.0
        %vm1692 = vcmp.gt.f32.partialorder %v1676, 0.0
        %vm1693 = vcmp.gt.f32.partialorder %v1677, 0.0
        %vm1694 = vcmp.gt.f32.partialorder %v1678, 0.0
        %v1695 = vmul.f32 %v1663, 0.2
        %v1696 = vmul.f32 %v1664, 0.2
        %v1697 = vmul.f32 %v1665, 0.2
        %v1698 = vmul.f32 %v1666, 0.2
        %v1699 = vmul.f32 %v1667, 0.2
        %v1700 = vmul.f32 %v1668, 0.2
        %v1701 = vmul.f32 %v1669, 0.2
        %v1702 = vmul.f32 %v1670, 0.2
        %v1703 = vmul.f32 %v1671, 0.2
        %v1704 = vmul.f32 %v1672, 0.2
        %v1705 = vmul.f32 %v1673, 0.2
        %v1706 = vmul.f32 %v1674, 0.2
        %v1707 = vmul.f32 %v1675, 0.2
        %v1708 = vmul.f32 %v1676, 0.2
        %v1709 = vmul.f32 %v1677, 0.2
        %v1710 = vmul.f32 %v1678, 0.2
        %v1711 = vsel %vm1679, %v1663, %v1695
        %v1712 = vsel %vm1680, %v1664, %v1696
        %v1713 = vsel %vm1681, %v1665, %v1697
        %v1714 = vsel %vm1682, %v1666, %v1698
        %v1715 = vsel %vm1683, %v1667, %v1699
        %v1716 = vsel %vm1684, %v1668, %v1700
        %v1717 = vsel %vm1685, %v1669, %v1701
        %v1718 = vsel %vm1686, %v1670, %v1702
        %v1719 = vsel %vm1687, %v1671, %v1703
        %v1720 = vsel %vm1688, %v1672, %v1704
        %v1721 = vsel %vm1689, %v1673, %v1705
        %v1722 = vsel %vm1690, %v1674, %v1706
        %v1723 = vsel %vm1691, %v1675, %v1707
        %v1724 = vsel %vm1692, %v1676, %v1708
        %v1725 = vsel %vm1693, %v1677, %v1709
        %v1726 = vsel %vm1694, %v1678, %v1710
        %v1727 = vadd.f32 %v1711, %v225
        %v1728 = vadd.f32 %v1712, %v226
        %v1729 = vadd.f32 %v1713, %v227
        %v1730 = vadd.f32 %v1714, %v228
        %v1731 = vadd.f32 %v1715, %v229
        %v1732 = vadd.f32 %v1716, %v230
        %v1733 = vadd.f32 %v1717, %v231
        %v1734 = vadd.f32 %v1718, %v232
        %v1735 = vadd.f32 %v1719, %v233
        %v1736 = vadd.f32 %v1720, %v234
        %v1737 = vadd.f32 %v1721, %v235
        %v1738 = vadd.f32 %v1722, %v236
        %v1739 = vadd.f32 %v1723, %v237
        %v1740 = vadd.f32 %v1724, %v238
        %v1741 = vadd.f32 %v1725, %v239
        %v1742 = vadd.f32 %v1726, %v240
        %1743 = vmax.xlane.f32.xlu0 %v1727
        %v1744 = vpop.xlane.xlu0 %1743
        %1745 = vmax.xlane.f32.xlu0 %v1728
        %v1746 = vpop.xlane.xlu0 %1745
        %1747 = vmax.xlane.f32.xlu0 %v1729
        %v1748 = vpop.xlane.xlu0 %1747
        %1749 = vmax.xlane.f32.xlu0 %v1730
        %v1750 = vpop.xlane.xlu0 %1749
        %1751 = vmax.xlane.f32.xlu0 %v1731
        %v1752 = vpop.xlane.xlu0 %1751
        %1753 = vmax.xlane.f32.xlu0 %v1732
        %v1754 = vpop.xlane.xlu0 %1753
        %1755 = vmax.xlane.f32.xlu0 %v1733
        %v1756 = vpop.xlane.xlu0 %1755
        %1757 = vmax.xlane.f32.xlu0 %v1734
        %v1758 = vpop.xlane.xlu0 %1757
        %1759 = vmax.xlane.f32.xlu0 %v1735
        %v1760 = vpop.xlane.xlu0 %1759
        %1761 = vmax.xlane.f32.xlu0 %v1736
        %v1762 = vpop.xlane.xlu0 %1761
        %1763 = vmax.xlane.f32.xlu0 %v1737
        %v1764 = vpop.xlane.xlu0 %1763
        %1765 = vmax.xlane.f32.xlu0 %v1738
        %v1766 = vpop.xlane.xlu0 %1765
        %1767 = vmax.xlane.f32.xlu0 %v1739
        %v1768 = vpop.xlane.xlu0 %1767
        %1769 = vmax.xlane.f32.xlu0 %v1740
        %v1770 = vpop.xlane.xlu0 %1769
        %1771 = vmax.xlane.f32.xlu0 %v1741
        %v1772 = vpop.xlane.xlu0 %1771
        %1773 = vmax.xlane.f32.xlu0 %v1742
        %v1774 = vpop.xlane.xlu0 %1773
        %v1775 = vsub.f32 %v1727, %v1744
        %v1776 = vsub.f32 %v1728, %v1746
        %v1777 = vsub.f32 %v1729, %v1748
        %v1778 = vsub.f32 %v1730, %v1750
        %v1779 = vsub.f32 %v1731, %v1752
        %v1780 = vsub.f32 %v1732, %v1754
        %v1781 = vsub.f32 %v1733, %v1756
        %v1782 = vsub.f32 %v1734, %v1758
        %v1783 = vsub.f32 %v1735, %v1760
        %v1784 = vsub.f32 %v1736, %v1762
        %v1785 = vsub.f32 %v1737, %v1764
        %v1786 = vsub.f32 %v1738, %v1766
        %v1787 = vsub.f32 %v1739, %v1768
        %v1788 = vsub.f32 %v1740, %v1770
        %v1789 = vsub.f32 %v1741, %v1772
        %v1790 = vsub.f32 %v1742, %v1774
        %v1791 = vmul.f32 %v1775, 1.442695
        %v1792 = vpow.pop %v1791
        %v1793 = vmul.f32 %v1776, 1.442695
        %v1794 = vpow.pop %v1793
        %v1795 = vmul.f32 %v1777, 1.442695
        %v1796 = vpow.pop %v1795
        %v1797 = vmul.f32 %v1778, 1.442695
        %v1798 = vpow.pop %v1797
        %v1799 = vmul.f32 %v1779, 1.442695
        %v1800 = vpow.pop %v1799
        %v1801 = vmul.f32 %v1780, 1.442695
        %v1802 = vpow.pop %v1801
        %v1803 = vmul.f32 %v1781, 1.442695
        %v1804 = vpow.pop %v1803
        %v1805 = vmul.f32 %v1782, 1.442695
        %v1806 = vpow.pop %v1805
        %v1807 = vmul.f32 %v1783, 1.442695
        %v1808 = vpow.pop %v1807
        %v1809 = vmul.f32 %v1784, 1.442695
        %v1810 = vpow.pop %v1809
        %v1811 = vmul.f32 %v1785, 1.442695
        %v1812 = vpow.pop %v1811
        %v1813 = vmul.f32 %v1786, 1.442695
        %v1814 = vpow.pop %v1813
        %v1815 = vmul.f32 %v1787, 1.442695
        %v1816 = vpow.pop %v1815
        %v1817 = vmul.f32 %v1788, 1.442695
        %v1818 = vpow.pop %v1817
        %v1819 = vmul.f32 %v1789, 1.442695
        %v1820 = vpow.pop %v1819
        %v1821 = vmul.f32 %v1790, 1.442695
        %v1822 = vpow.pop %v1821
        %1823 = vadd.xlane.f32.xlu0 %v1792
        %v1824 = vpop.xlane.xlu0 %1823
        %1825 = vadd.xlane.f32.xlu0 %v1794
        %v1826 = vpop.xlane.xlu0 %1825
        %1827 = vadd.xlane.f32.xlu0 %v1796
        %v1828 = vpop.xlane.xlu0 %1827
        %1829 = vadd.xlane.f32.xlu0 %v1798
        %v1830 = vpop.xlane.xlu0 %1829
        %1831 = vadd.xlane.f32.xlu0 %v1800
        %v1832 = vpop.xlane.xlu0 %1831
        %1833 = vadd.xlane.f32.xlu0 %v1802
        %v1834 = vpop.xlane.xlu0 %1833
        %1835 = vadd.xlane.f32.xlu0 %v1804
        %v1836 = vpop.xlane.xlu0 %1835
        %1837 = vadd.xlane.f32.xlu0 %v1806
        %v1838 = vpop.xlane.xlu0 %1837
        %1839 = vadd.xlane.f32.xlu0 %v1808
        %v1840 = vpop.xlane.xlu0 %1839
        %1841 = vadd.xlane.f32.xlu0 %v1810
        %v1842 = vpop.xlane.xlu0 %1841
        %1843 = vadd.xlane.f32.xlu0 %v1812
        %v1844 = vpop.xlane.xlu0 %1843
        %1845 = vadd.xlane.f32.xlu0 %v1814
        %v1846 = vpop.xlane.xlu0 %1845
        %1847 = vadd.xlane.f32.xlu0 %v1816
        %v1848 = vpop.xlane.xlu0 %1847
        %1849 = vadd.xlane.f32.xlu0 %v1818
        %v1850 = vpop.xlane.xlu0 %1849
        %1851 = vadd.xlane.f32.xlu0 %v1820
        %v1852 = vpop.xlane.xlu0 %1851
        %1853 = vadd.xlane.f32.xlu0 %v1822
        %v1854 = vpop.xlane.xlu0 %1853
        %v1855 = vrcp.pop %v1824
        %v1856 = vrcp.pop %v1826
        %v1857 = vrcp.pop %v1828
        %v1858 = vrcp.pop %v1830
        %v1859 = vrcp.pop %v1832
        %v1860 = vrcp.pop %v1834
        %v1861 = vrcp.pop %v1836
        %v1862 = vrcp.pop %v1838
        %v1863 = vrcp.pop %v1840
        %v1864 = vrcp.pop %v1842
        %v1865 = vrcp.pop %v1844
        %v1866 = vrcp.pop %v1846
        %v1867 = vrcp.pop %v1848
        %v1868 = vrcp.pop %v1850
        %v1869 = vrcp.pop %v1852
        %v1870 = vrcp.pop %v1854
        %v1871 = vmul.f32 %v1824, %v1855
        %v1872 = vmul.f32 %v1826, %v1856
        %v1873 = vmul.f32 %v1828, %v1857
        %v1874 = vmul.f32 %v1830, %v1858
        %v1875 = vmul.f32 %v1832, %v1859
        %v1876 = vmul.f32 %v1834, %v1860
        %v1877 = vmul.f32 %v1836, %v1861
        %v1878 = vmul.f32 %v1838, %v1862
        %v1879 = vmul.f32 %v1840, %v1863
        %v1880 = vmul.f32 %v1842, %v1864
        %v1881 = vmul.f32 %v1844, %v1865
        %v1882 = vmul.f32 %v1846, %v1866
        %v1883 = vmul.f32 %v1848, %v1867
        %v1884 = vmul.f32 %v1850, %v1868
        %v1885 = vmul.f32 %v1852, %v1869
        %v1886 = vmul.f32 %v1854, %v1870
        %v1887 = vsub.f32 2.0, %v1871
        %v1888 = vsub.f32 2.0, %v1872
        %v1889 = vsub.f32 2.0, %v1873
        %v1890 = vsub.f32 2.0, %v1874
        %v1891 = vsub.f32 2.0, %v1875
        %v1892 = vsub.f32 2.0, %v1876
        %v1893 = vsub.f32 2.0, %v1877
        %v1894 = vsub.f32 2.0, %v1878
        %v1895 = vsub.f32 2.0, %v1879
        %v1896 = vsub.f32 2.0, %v1880
        %v1897 = vsub.f32 2.0, %v1881
        %v1898 = vsub.f32 2.0, %v1882
        %v1899 = vsub.f32 2.0, %v1883
        %v1900 = vsub.f32 2.0, %v1884
        %v1901 = vsub.f32 2.0, %v1885
        %v1902 = vsub.f32 2.0, %v1886
        %v1903 = vmul.f32 %v1855, %v1887
        %v1904 = vmul.f32 %v1856, %v1888
        %v1905 = vmul.f32 %v1857, %v1889
        %v1906 = vmul.f32 %v1858, %v1890
        %v1907 = vmul.f32 %v1859, %v1891
        %v1908 = vmul.f32 %v1860, %v1892
        %v1909 = vmul.f32 %v1861, %v1893
        %v1910 = vmul.f32 %v1862, %v1894
        %v1911 = vmul.f32 %v1863, %v1895
        %v1912 = vmul.f32 %v1864, %v1896
        %v1913 = vmul.f32 %v1865, %v1897
        %v1914 = vmul.f32 %v1866, %v1898
        %v1915 = vmul.f32 %v1867, %v1899
        %v1916 = vmul.f32 %v1868, %v1900
        %v1917 = vmul.f32 %v1869, %v1901
        %v1918 = vmul.f32 %v1870, %v1902
        %v1919 = vmul.f32 %v1792, %v1903
        %v1920 = vmul.f32 %v1794, %v1904
        %v1921 = vmul.f32 %v1796, %v1905
        %v1922 = vmul.f32 %v1798, %v1906
        %v1923 = vmul.f32 %v1800, %v1907
        %v1924 = vmul.f32 %v1802, %v1908
        %v1925 = vmul.f32 %v1804, %v1909
        %v1926 = vmul.f32 %v1806, %v1910
        %v1927 = vmul.f32 %v1808, %v1911
        %v1928 = vmul.f32 %v1810, %v1912
        %v1929 = vmul.f32 %v1812, %v1913
        %v1930 = vmul.f32 %v1814, %v1914
        %v1931 = vmul.f32 %v1816, %v1915
        %v1932 = vmul.f32 %v1818, %v1916
        %v1933 = vmul.f32 %v1820, %v1917
        %v1934 = vmul.f32 %v1822, %v1918
        %1935 = vmatprep.subr.mxu0 0.0
        %1936 = vmatpush1.msra.mxu0 %v1245
        %1937 = vmatprep.subr.mxu0 0.0
        %1938 = vmatpush1.msra.mxu0 %v1250
        %1939 = vmatprep.subr.mxu0 0.0
        %1940 = vmatpush1.msra.mxu0 %v1255
        %1941 = vmatprep.subr.mxu0 0.0
        %1942 = vmatpush1.msra.mxu0 %v1260
        %1943 = vmatprep.subr.mxu0 0.0
        %1944 = vmatpush1.msra.mxu0 %v1265
        %1945 = vmatprep.subr.mxu0 0.0
        %1946 = vmatpush1.msra.mxu0 %v1270
        %1947 = vmatprep.subr.mxu0 0.0
        %1948 = vmatpush1.msra.mxu0 %v1275
        %1949 = vmatprep.subr.mxu0 0.0
        %1950 = vmatpush1.msra.mxu0 %v1280
        %1951 = vmatprep.subr.mxu0 0.0
        %1952 = vmatpush1.msra.mxu0 %v1285
        %1953 = vmatprep.subr.mxu0 0.0
        %1954 = vmatpush1.msra.mxu0 %v1290
        %1955 = vmatprep.subr.mxu0 0.0
        %1956 = vmatpush1.msra.mxu0 %v1295
        %1957 = vmatprep.subr.mxu0 0.0
        %1958 = vmatpush1.msra.mxu0 %v1300
        %1959 = vmatprep.subr.mxu0 0.0
        %1960 = vmatpush1.msra.mxu0 %v1305
        %1961 = vmatprep.subr.mxu0 0.0
        %1962 = vmatpush1.msra.mxu0 %v1310
        %1963 = vmatprep.subr.mxu0 0.0
        %1964 = vmatpush1.msra.mxu0 %v1315
        %1965 = vmatprep.subr.mxu0 0.0
        %1966 = vmatpush1.msra.mxu0 %v1320
        %1967 = vmatprep.subr.mxu0 0.0
        %1968 = vmatpush1.msra.mxu0 0.0
        %1969 = vmatprep.subr.mxu0 0.0
        %1970 = vmatpush1.msra.mxu0 0.0
        %1971 = vmatprep.subr.mxu0 0.0
        %1972 = vmatpush1.msra.mxu0 0.0
        %1973 = vmatprep.subr.mxu0 0.0
        %1974 = vmatpush1.msra.mxu0 0.0
        %1975 = vmatprep.subr.mxu0 0.0
        %1976 = vmatpush1.msra.mxu0 0.0
        %1977 = vmatprep.subr.mxu0 0.0
        %1978 = vmatpush1.msra.mxu0 0.0
        %1979 = vmatprep.subr.mxu0 0.0
        %1980 = vmatpush1.msra.mxu0 0.0
        %1981 = vmatprep.subr.mxu0 0.0
        %1982 = vmatpush1.msra.mxu0 0.0
        %1983 = vmatprep.subr.mxu0 0.0
        %1984 = vmatpush1.msra.mxu0 0.0
        %1985 = vmatprep.subr.mxu0 0.0
        %1986 = vmatpush1.msra.mxu0 0.0
        %1987 = vmatprep.subr.mxu0 0.0
        %1988 = vmatpush1.msra.mxu0 0.0
        %1989 = vmatprep.subr.mxu0 0.0
        %1990 = vmatpush1.msra.mxu0 0.0
        %1991 = vmatprep.subr.mxu0 0.0
        %1992 = vmatpush1.msra.mxu0 0.0
        %1993 = vmatprep.subr.mxu0 0.0
        %1994 = vmatpush1.msra.mxu0 0.0
        %1995 = vmatprep.subr.mxu0 0.0
        %1996 = vmatpush1.msra.mxu0 0.0
        %1997 = vmatprep.subr.mxu0 0.0
        %1998 = vmatpush1.msra.mxu0 0.0
        %1999 = vmatprep.mubr.f32.mxu0 0.0
        %2000 = vmatmul.mubr.f32.gmra.mrb[0].mxu0 %v1919
        %v2001 = vpop.f32.mrb[0].mxu0
        %v2002 = vadd.f32 0.0, %v2001
        %v2003 = vpop.f32.mrb[0].mxu0
        %2004 = vmatprep.mubr.f32.mxu0 0.0
        %2005 = vmatmul.mubr.f32.gmra.mrb[0].mxu0 %v1920
        %v2006 = vpop.f32.mrb[0].mxu0
        %v2007 = vadd.f32 0.0, %v2006
        %v2008 = vpop.f32.mrb[0].mxu0
        %2009 = vmatprep.mubr.f32.mxu0 0.0
        %2010 = vmatmul.mubr.f32.gmra.mrb[0].mxu0 %v1921
        %v2011 = vpop.f32.mrb[0].mxu0
        %v2012 = vadd.f32 0.0, %v2011
        %v2013 = vpop.f32.mrb[0].mxu0
        %2014 = vmatprep.mubr.f32.mxu0 0.0
        %2015 = vmatmul.mubr.f32.gmra.mrb[0].mxu0 %v1922
        %v2016 = vpop.f32.mrb[0].mxu0
        %v2017 = vadd.f32 0.0, %v2016
        %v2018 = vpop.f32.mrb[0].mxu0
        %2019 = vmatprep.mubr.f32.mxu0 0.0
        %2020 = vmatmul.mubr.f32.gmra.mrb[0].mxu0 %v1923
        %v2021 = vpop.f32.mrb[0].mxu0
        %v2022 = vadd.f32 0.0, %v2021
        %v2023 = vpop.f32.mrb[0].mxu0
        %2024 = vmatprep.mubr.f32.mxu0 0.0
        %2025 = vmatmul.mubr.f32.gmra.mrb[0].mxu0 %v1924
        %v2026 = vpop.f32.mrb[0].mxu0
        %v2027 = vadd.f32 0.0, %v2026
        %v2028 = vpop.f32.mrb[0].mxu0
        %2029 = vmatprep.mubr.f32.mxu0 0.0
        %2030 = vmatmul.mubr.f32.gmra.mrb[0].mxu0 %v1925
        %v2031 = vpop.f32.mrb[0].mxu0
        %v2032 = vadd.f32 0.0, %v2031
        %v2033 = vpop.f32.mrb[0].mxu0
        %2034 = vmatprep.mubr.f32.mxu0 0.0
        %2035 = vmatmul.mubr.f32.gmra.mrb[0].mxu0 %v1926
        %v2036 = vpop.f32.mrb[0].mxu0
        %v2037 = vadd.f32 0.0, %v2036
        %v2038 = vpop.f32.mrb[0].mxu0
        %2039 = vmatprep.mubr.f32.mxu0 0.0
        %2040 = vmatmul.mubr.f32.gmra.mrb[0].mxu0 %v1927
        %v2041 = vpop.f32.mrb[0].mxu0
        %v2042 = vadd.f32 0.0, %v2041
        %v2043 = vpop.f32.mrb[0].mxu0
        %2044 = vmatprep.mubr.f32.mxu0 0.0
        %2045 = vmatmul.mubr.f32.gmra.mrb[0].mxu0 %v1928
        %v2046 = vpop.f32.mrb[0].mxu0
        %v2047 = vadd.f32 0.0, %v2046
        %v2048 = vpop.f32.mrb[0].mxu0
        %2049 = vmatprep.mubr.f32.mxu0 0.0
        %2050 = vmatmul.mubr.f32.gmra.mrb[0].mxu0 %v1929
        %v2051 = vpop.f32.mrb[0].mxu0
        %v2052 = vadd.f32 0.0, %v2051
        %v2053 = vpop.f32.mrb[0].mxu0
        %2054 = vmatprep.mubr.f32.mxu0 0.0
        %2055 = vmatmul.mubr.f32.gmra.mrb[0].mxu0 %v1930
        %v2056 = vpop.f32.mrb[0].mxu0
        %v2057 = vadd.f32 0.0, %v2056
        %v2058 = vpop.f32.mrb[0].mxu0
        %2059 = vmatprep.mubr.f32.mxu0 0.0
        %2060 = vmatmul.mubr.f32.gmra.mrb[0].mxu0 %v1931
        %v2061 = vpop.f32.mrb[0].mxu0
        %v2062 = vadd.f32 0.0, %v2061
        %v2063 = vpop.f32.mrb[0].mxu0
        %2064 = vmatprep.mubr.f32.mxu0 0.0
        %2065 = vmatmul.mubr.f32.gmra.mrb[0].mxu0 %v1932
        %v2066 = vpop.f32.mrb[0].mxu0
        %v2067 = vadd.f32 0.0, %v2066
        %v2068 = vpop.f32.mrb[0].mxu0
        %2069 = vmatprep.mubr.f32.mxu0 0.0
        %2070 = vmatmul.mubr.f32.gmra.mrb[0].mxu0 %v1933
        %v2071 = vpop.f32.mrb[0].mxu0
        %v2072 = vadd.f32 0.0, %v2071
        %v2073 = vpop.f32.mrb[0].mxu0
        %2074 = vmatprep.mubr.f32.mxu0 0.0
        %2075 = vmatmul.mubr.f32.gmra.mrb[0].mxu0 %v1934
        %v2076 = vpop.f32.mrb[0].mxu0
        %v2077 = vadd.f32 0.0, %v2076
        %v2078 = vpop.f32.mrb[0].mxu0
        %2079 = vdwg.mxu0
        %vm2080 = vcmp.gt.f32.partialorder %v2002, 0.0
        %vm2081 = vcmp.gt.f32.partialorder %v2007, 0.0
        %vm2082 = vcmp.gt.f32.partialorder %v2012, 0.0
        %vm2083 = vcmp.gt.f32.partialorder %v2017, 0.0
        %vm2084 = vcmp.gt.f32.partialorder %v2022, 0.0
        %vm2085 = vcmp.gt.f32.partialorder %v2027, 0.0
        %vm2086 = vcmp.gt.f32.partialorder %v2032, 0.0
        %vm2087 = vcmp.gt.f32.partialorder %v2037, 0.0
        %vm2088 = vcmp.gt.f32.partialorder %v2042, 0.0
        %vm2089 = vcmp.gt.f32.partialorder %v2047, 0.0
        %vm2090 = vcmp.gt.f32.partialorder %v2052, 0.0
        %vm2091 = vcmp.gt.f32.partialorder %v2057, 0.0
        %vm2092 = vcmp.gt.f32.partialorder %v2062, 0.0
        %vm2093 = vcmp.gt.f32.partialorder %v2067, 0.0
        %vm2094 = vcmp.gt.f32.partialorder %v2072, 0.0
        %vm2095 = vcmp.gt.f32.partialorder %v2077, 0.0
        %v2096 = vmul.f32 %v2002, 1.442695
        %v2097 = vpow.pop %v2096
        %v2098 = vmul.f32 %v2007, 1.442695
        %v2099 = vpow.pop %v2098
        %v2100 = vmul.f32 %v2012, 1.442695
        %v2101 = vpow.pop %v2100
        %v2102 = vmul.f32 %v2017, 1.442695
        %v2103 = vpow.pop %v2102
        %v2104 = vmul.f32 %v2022, 1.442695
        %v2105 = vpow.pop %v2104
        %v2106 = vmul.f32 %v2027, 1.442695
        %v2107 = vpow.pop %v2106
        %v2108 = vmul.f32 %v2032, 1.442695
        %v2109 = vpow.pop %v2108
        %v2110 = vmul.f32 %v2037, 1.442695
        %v2111 = vpow.pop %v2110
        %v2112 = vmul.f32 %v2042, 1.442695
        %v2113 = vpow.pop %v2112
        %v2114 = vmul.f32 %v2047, 1.442695
        %v2115 = vpow.pop %v2114
        %v2116 = vmul.f32 %v2052, 1.442695
        %v2117 = vpow.pop %v2116
        %v2118 = vmul.f32 %v2057, 1.442695
        %v2119 = vpow.pop %v2118
        %v2120 = vmul.f32 %v2062, 1.442695
        %v2121 = vpow.pop %v2120
        %v2122 = vmul.f32 %v2067, 1.442695
        %v2123 = vpow.pop %v2122
        %v2124 = vmul.f32 %v2072, 1.442695
        %v2125 = vpow.pop %v2124
        %v2126 = vmul.f32 %v2077, 1.442695
        %v2127 = vpow.pop %v2126
        %v2128 = vsub.f32 %v2097, 1.0
        %v2129 = vsub.f32 %v2099, 1.0
        %v2130 = vsub.f32 %v2101, 1.0
        %v2131 = vsub.f32 %v2103, 1.0
        %v2132 = vsub.f32 %v2105, 1.0
        %v2133 = vsub.f32 %v2107, 1.0
        %v2134 = vsub.f32 %v2109, 1.0
        %v2135 = vsub.f32 %v2111, 1.0
        %v2136 = vsub.f32 %v2113, 1.0
        %v2137 = vsub.f32 %v2115, 1.0
        %v2138 = vsub.f32 %v2117, 1.0
        %v2139 = vsub.f32 %v2119, 1.0
        %v2140 = vsub.f32 %v2121, 1.0
        %v2141 = vsub.f32 %v2123, 1.0
        %v2142 = vsub.f32 %v2125, 1.0
        %v2143 = vsub.f32 %v2127, 1.0
        %v2144 = vsel %vm2080, %v2002, %v2128
        %v2145 = vsel %vm2081, %v2007, %v2129
        %v2146 = vsel %vm2082, %v2012, %v2130
        %v2147 = vsel %vm2083, %v2017, %v2131
        %v2148 = vsel %vm2084, %v2022, %v2132
        %v2149 = vsel %vm2085, %v2027, %v2133
        %v2150 = vsel %vm2086, %v2032, %v2134
        %v2151 = vsel %vm2087, %v2037, %v2135
        %v2152 = vsel %vm2088, %v2042, %v2136
        %v2153 = vsel %vm2089, %v2047, %v2137
        %v2154 = vsel %vm2090, %v2052, %v2138
        %v2155 = vsel %vm2091, %v2057, %v2139
        %v2156 = vsel %vm2092, %v2062, %v2140
        %v2157 = vsel %vm2093, %v2067, %v2141
        %v2158 = vsel %vm2094, %v2072, %v2142
        %v2159 = vsel %vm2095, %v2077, %v2143
        %v2160 = vld [vmem:[#allocation2 + $0xc0] sm:$0x1]
        %v2162 = vsel %vm1473, %v2160, 0
        %v2165 = vsel %vm1473, %v1394, 0
        %v2168 = vsel %vm1473, %v1399, 0
        %v2171 = vsel %vm1473, %v1404, 0
        %v2174 = vsel %vm1473, %v1409, 0
        %v2177 = vsel %vm1473, %v1414, 0
        %v2180 = vsel %vm1473, %v1419, 0
        %v2183 = vsel %vm1473, %v1424, 0
        %v2186 = vsel %vm1473, %v1429, 0
        %v2189 = vsel %vm1473, %v1434, 0
        %v2192 = vsel %vm1473, %v1439, 0
        %v2195 = vsel %vm1473, %v1444, 0
        %v2198 = vsel %vm1473, %v1449, 0
        %v2201 = vsel %vm1473, %v1454, 0
        %v2204 = vsel %vm1473, %v1459, 0
        %v2207 = vsel %vm1473, %v1464, 0
        %v2210 = vsel %vm1473, %v1469, 0
        %2212 = vmatprep.subr.mxu0 0.0
        %2213 = vmatpush1.xpose.msra.mxu0 %v2165
        %2214 = vmatprep.subr.mxu0 0.0
        %2215 = vmatpush1.xpose.msra.mxu0 %v2168
        %2216 = vmatprep.subr.mxu0 0.0
        %2217 = vmatpush1.xpose.msra.mxu0 %v2171
        %2218 = vmatprep.subr.mxu0 0.0
        %2219 = vmatpush1.xpose.msra.mxu0 %v2174
        %2220 = vmatprep.subr.mxu0 0.0
        %2221 = vmatpush1.xpose.msra.mxu0 %v2177
        %2222 = vmatprep.subr.mxu0 0.0
        %2223 = vmatpush1.xpose.msra.mxu0 %v2180
        %2224 = vmatprep.subr.mxu0 0.0
        %2225 = vmatpush1.xpose.msra.mxu0 %v2183
        %2226 = vmatprep.subr.mxu0 0.0
        %2227 = vmatpush1.xpose.msra.mxu0 %v2186
        %2228 = vmatprep.subr.mxu0 0.0
        %2229 = vmatpush1.xpose.msra.mxu0 %v2189
        %2230 = vmatprep.subr.mxu0 0.0
        %2231 = vmatpush1.xpose.msra.mxu0 %v2192
        %2232 = vmatprep.subr.mxu0 0.0
        %2233 = vmatpush1.xpose.msra.mxu0 %v2195
        %2234 = vmatprep.subr.mxu0 0.0
        %2235 = vmatpush1.xpose.msra.mxu0 %v2198
        %2236 = vmatprep.subr.mxu0 0.0
        %2237 = vmatpush1.xpose.msra.mxu0 %v2201
        %2238 = vmatprep.subr.mxu0 0.0
        %2239 = vmatpush1.xpose.msra.mxu0 %v2204
        %2240 = vmatprep.subr.mxu0 0.0
        %2241 = vmatpush1.xpose.msra.mxu0 %v2207
        %2242 = vmatprep.subr.mxu0 0.0
        %2243 = vmatpush1.xpose.msra.mxu0 %v2210
        %2244 = vmatprep.subr.mxu0 0.0
        %2245 = vmatpush1.xpose.msra.mxu0 0.0
        %2246 = vmatprep.subr.mxu0 0.0
        %2247 = vmatpush1.xpose.msra.mxu0 0.0
        %2248 = vmatprep.subr.mxu0 0.0
        %2249 = vmatpush1.xpose.msra.mxu0 0.0
        %2250 = vmatprep.subr.mxu0 0.0
        %2251 = vmatpush1.xpose.msra.mxu0 0.0
        %2252 = vmatprep.subr.mxu0 0.0
        %2253 = vmatpush1.xpose.msra.mxu0 0.0
        %2254 = vmatprep.subr.mxu0 0.0
        %2255 = vmatpush1.xpose.msra.mxu0 0.0
        %2256 = vmatprep.subr.mxu0 0.0
        %2257 = vmatpush1.xpose.msra.mxu0 0.0
        %2258 = vmatprep.subr.mxu0 0.0
        %2259 = vmatpush1.xpose.msra.mxu0 0.0
        %2260 = vmatprep.subr.mxu0 0.0
        %2261 = vmatpush1.xpose.msra.mxu0 0.0
        %2262 = vmatprep.subr.mxu0 0.0
        %2263 = vmatpush1.xpose.msra.mxu0 0.0
        %2264 = vmatprep.subr.mxu0 0.0
        %2265 = vmatpush1.xpose.msra.mxu0 0.0
        %2266 = vmatprep.subr.mxu0 0.0
        %2267 = vmatpush1.xpose.msra.mxu0 0.0
        %2268 = vmatprep.subr.mxu0 0.0
        %2269 = vmatpush1.xpose.msra.mxu0 0.0
        %2270 = vmatprep.subr.mxu0 0.0
        %2271 = vmatpush1.xpose.msra.mxu0 0.0
        %2272 = vmatprep.subr.mxu0 0.0
        %2273 = vmatpush1.xpose.msra.mxu0 0.0
        %2274 = vmatprep.subr.mxu0 0.0
        %2275 = vmatpush1.xpose.msra.mxu0 0.0
        %2276 = vmatprep.mubr.f32.mxu0 0.0
        %2277 = vmatmul.mubr.f32.gmra.mrb[0].mxu0 %v2162
        %v2278 = vpop.f32.mrb[0].mxu0
        %v2279 = vadd.f32 0.0, %v2278
        %v2280 = vpop.f32.mrb[0].mxu0
        %2281 = vdwg.mxu0
        %2282 = vset.pattern.permute.xlu0 16
        %2283 = vperm.xlu0 %2282, %v1394
        %v2284 = vpop.permute.xlu0 %2283
        %2286 = vset.pattern.permute.xlu0 16
        %2287 = vperm.xlu0 %2286, %v1399
        %v2288 = vpop.permute.xlu0 %2287
        %2290 = vset.pattern.permute.xlu0 16
        %2291 = vperm.xlu0 %2290, %v1404
        %v2292 = vpop.permute.xlu0 %2291
        %2294 = vset.pattern.permute.xlu0 16
        %2295 = vperm.xlu0 %2294, %v1409
        %v2296 = vpop.permute.xlu0 %2295
        %2298 = vset.pattern.permute.xlu0 16
        %2299 = vperm.xlu0 %2298, %v1414
        %v2300 = vpop.permute.xlu0 %2299
        %2302 = vset.pattern.permute.xlu0 16
        %2303 = vperm.xlu0 %2302, %v1419
        %v2304 = vpop.permute.xlu0 %2303
        %2306 = vset.pattern.permute.xlu0 16
        %2307 = vperm.xlu0 %2306, %v1424
        %v2308 = vpop.permute.xlu0 %2307
        %2310 = vset.pattern.permute.xlu0 16
        %2311 = vperm.xlu0 %2310, %v1429
        %v2312 = vpop.permute.xlu0 %2311
        %2314 = vset.pattern.permute.xlu0 16
        %2315 = vperm.xlu0 %2314, %v1434
        %v2316 = vpop.permute.xlu0 %2315
        %2318 = vset.pattern.permute.xlu0 16
        %2319 = vperm.xlu0 %2318, %v1439
        %v2320 = vpop.permute.xlu0 %2319
        %2322 = vset.pattern.permute.xlu0 16
        %2323 = vperm.xlu0 %2322, %v1444
        %v2324 = vpop.permute.xlu0 %2323
        %2326 = vset.pattern.permute.xlu0 16
        %2327 = vperm.xlu0 %2326, %v1449
        %v2328 = vpop.permute.xlu0 %2327
        %2330 = vset.pattern.permute.xlu0 16
        %2331 = vperm.xlu0 %2330, %v1454
        %v2332 = vpop.permute.xlu0 %2331
        %2334 = vset.pattern.permute.xlu0 16
        %2335 = vperm.xlu0 %2334, %v1459
        %v2336 = vpop.permute.xlu0 %2335
        %2338 = vset.pattern.permute.xlu0 16
        %2339 = vperm.xlu0 %2338, %v1464
        %v2340 = vpop.permute.xlu0 %2339
        %2342 = vset.pattern.permute.xlu0 16
        %2343 = vperm.xlu0 %2342, %v1469
        %v2344 = vpop.permute.xlu0 %2343
        %v2346 = vlaneseq
        %v2347 = vshrl.u32 %v2346, 7
        %v2348 = vsub.s32 0, %v2347
        %v2349 = vrot.slane %v2279, %v2348
        %v2350 = vadd.f32 %v2284, %v2349
        %v2351 = vadd.f32 %v2288, %v2349
        %v2352 = vadd.f32 %v2292, %v2349
        %v2353 = vadd.f32 %v2296, %v2349
        %v2354 = vadd.f32 %v2300, %v2349
        %v2355 = vadd.f32 %v2304, %v2349
        %v2356 = vadd.f32 %v2308, %v2349
        %v2357 = vadd.f32 %v2312, %v2349
        %v2358 = vadd.f32 %v2316, %v2349
        %v2359 = vadd.f32 %v2320, %v2349
        %v2360 = vadd.f32 %v2324, %v2349
        %v2361 = vadd.f32 %v2328, %v2349
        %v2362 = vadd.f32 %v2332, %v2349
        %v2363 = vadd.f32 %v2336, %v2349
        %v2364 = vadd.f32 %v2340, %v2349
        %v2365 = vadd.f32 %v2344, %v2349
        %vm2366 = vcmp.gt.f32.partialorder %v2350, 0.0
        %vm2367 = vcmp.gt.f32.partialorder %v2351, 0.0
        %vm2368 = vcmp.gt.f32.partialorder %v2352, 0.0
        %vm2369 = vcmp.gt.f32.partialorder %v2353, 0.0
        %vm2370 = vcmp.gt.f32.partialorder %v2354, 0.0
        %vm2371 = vcmp.gt.f32.partialorder %v2355, 0.0
        %vm2372 = vcmp.gt.f32.partialorder %v2356, 0.0
        %vm2373 = vcmp.gt.f32.partialorder %v2357, 0.0
        %vm2374 = vcmp.gt.f32.partialorder %v2358, 0.0
        %vm2375 = vcmp.gt.f32.partialorder %v2359, 0.0
        %vm2376 = vcmp.gt.f32.partialorder %v2360, 0.0
        %vm2377 = vcmp.gt.f32.partialorder %v2361, 0.0
        %vm2378 = vcmp.gt.f32.partialorder %v2362, 0.0
        %vm2379 = vcmp.gt.f32.partialorder %v2363, 0.0
        %vm2380 = vcmp.gt.f32.partialorder %v2364, 0.0
        %vm2381 = vcmp.gt.f32.partialorder %v2365, 0.0
        %v2382 = vmul.f32 %v2350, 0.2
        %v2383 = vmul.f32 %v2351, 0.2
        %v2384 = vmul.f32 %v2352, 0.2
        %v2385 = vmul.f32 %v2353, 0.2
        %v2386 = vmul.f32 %v2354, 0.2
        %v2387 = vmul.f32 %v2355, 0.2
        %v2388 = vmul.f32 %v2356, 0.2
        %v2389 = vmul.f32 %v2357, 0.2
        %v2390 = vmul.f32 %v2358, 0.2
        %v2391 = vmul.f32 %v2359, 0.2
        %v2392 = vmul.f32 %v2360, 0.2
        %v2393 = vmul.f32 %v2361, 0.2
        %v2394 = vmul.f32 %v2362, 0.2
        %v2395 = vmul.f32 %v2363, 0.2
        %v2396 = vmul.f32 %v2364, 0.2
        %v2397 = vmul.f32 %v2365, 0.2
        %v2398 = vsel %vm2366, %v2350, %v2382
        %v2399 = vsel %vm2367, %v2351, %v2383
        %v2400 = vsel %vm2368, %v2352, %v2384
        %v2401 = vsel %vm2369, %v2353, %v2385
        %v2402 = vsel %vm2370, %v2354, %v2386
        %v2403 = vsel %vm2371, %v2355, %v2387
        %v2404 = vsel %vm2372, %v2356, %v2388
        %v2405 = vsel %vm2373, %v2357, %v2389
        %v2406 = vsel %vm2374, %v2358, %v2390
        %v2407 = vsel %vm2375, %v2359, %v2391
        %v2408 = vsel %vm2376, %v2360, %v2392
        %v2409 = vsel %vm2377, %v2361, %v2393
        %v2410 = vsel %vm2378, %v2362, %v2394
        %v2411 = vsel %vm2379, %v2363, %v2395
        %v2412 = vsel %vm2380, %v2364, %v2396
        %v2413 = vsel %vm2381, %v2365, %v2397
        %v2414 = vadd.f32 %v2398, %v225
        %v2415 = vadd.f32 %v2399, %v226
        %v2416 = vadd.f32 %v2400, %v227
        %v2417 = vadd.f32 %v2401, %v228
        %v2418 = vadd.f32 %v2402, %v229
        %v2419 = vadd.f32 %v2403, %v230
        %v2420 = vadd.f32 %v2404, %v231
        %v2421 = vadd.f32 %v2405, %v232
        %v2422 = vadd.f32 %v2406, %v233
        %v2423 = vadd.f32 %v2407, %v234
        %v2424 = vadd.f32 %v2408, %v235
        %v2425 = vadd.f32 %v2409, %v236
        %v2426 = vadd.f32 %v2410, %v237
        %v2427 = vadd.f32 %v2411, %v238
        %v2428 = vadd.f32 %v2412, %v239
        %v2429 = vadd.f32 %v2413, %v240
        %2430 = vmax.xlane.f32.xlu0 %v2414
        %v2431 = vpop.xlane.xlu0 %2430
        %2432 = vmax.xlane.f32.xlu0 %v2415
        %v2433 = vpop.xlane.xlu0 %2432
        %2434 = vmax.xlane.f32.xlu0 %v2416
        %v2435 = vpop.xlane.xlu0 %2434
        %2436 = vmax.xlane.f32.xlu0 %v2417
        %v2437 = vpop.xlane.xlu0 %2436
        %2438 = vmax.xlane.f32.xlu0 %v2418
        %v2439 = vpop.xlane.xlu0 %2438
        %2440 = vmax.xlane.f32.xlu0 %v2419
        %v2441 = vpop.xlane.xlu0 %2440
        %2442 = vmax.xlane.f32.xlu0 %v2420
        %v2443 = vpop.xlane.xlu0 %2442
        %2444 = vmax.xlane.f32.xlu0 %v2421
        %v2445 = vpop.xlane.xlu0 %2444
        %2446 = vmax.xlane.f32.xlu0 %v2422
        %v2447 = vpop.xlane.xlu0 %2446
        %2448 = vmax.xlane.f32.xlu0 %v2423
        %v2449 = vpop.xlane.xlu0 %2448
        %2450 = vmax.xlane.f32.xlu0 %v2424
        %v2451 = vpop.xlane.xlu0 %2450
        %2452 = vmax.xlane.f32.xlu0 %v2425
        %v2453 = vpop.xlane.xlu0 %2452
        %2454 = vmax.xlane.f32.xlu0 %v2426
        %v2455 = vpop.xlane.xlu0 %2454
        %2456 = vmax.xlane.f32.xlu0 %v2427
        %v2457 = vpop.xlane.xlu0 %2456
        %2458 = vmax.xlane.f32.xlu0 %v2428
        %v2459 = vpop.xlane.xlu0 %2458
        %2460 = vmax.xlane.f32.xlu0 %v2429
        %v2461 = vpop.xlane.xlu0 %2460
        %v2462 = vsub.f32 %v2414, %v2431
        %v2463 = vsub.f32 %v2415, %v2433
        %v2464 = vsub.f32 %v2416, %v2435
        %v2465 = vsub.f32 %v2417, %v2437
        %v2466 = vsub.f32 %v2418, %v2439
        %v2467 = vsub.f32 %v2419, %v2441
        %v2468 = vsub.f32 %v2420, %v2443
        %v2469 = vsub.f32 %v2421, %v2445
        %v2470 = vsub.f32 %v2422, %v2447
        %v2471 = vsub.f32 %v2423, %v2449
        %v2472 = vsub.f32 %v2424, %v2451
        %v2473 = vsub.f32 %v2425, %v2453
        %v2474 = vsub.f32 %v2426, %v2455
        %v2475 = vsub.f32 %v2427, %v2457
        %v2476 = vsub.f32 %v2428, %v2459
        %v2477 = vsub.f32 %v2429, %v2461
        %v2478 = vmul.f32 %v2462, 1.442695
        %v2479 = vpow.pop %v2478
        %v2480 = vmul.f32 %v2463, 1.442695
        %v2481 = vpow.pop %v2480
        %v2482 = vmul.f32 %v2464, 1.442695
        %v2483 = vpow.pop %v2482
        %v2484 = vmul.f32 %v2465, 1.442695
        %v2485 = vpow.pop %v2484
        %v2486 = vmul.f32 %v2466, 1.442695
        %v2487 = vpow.pop %v2486
        %v2488 = vmul.f32 %v2467, 1.442695
        %v2489 = vpow.pop %v2488
        %v2490 = vmul.f32 %v2468, 1.442695
        %v2491 = vpow.pop %v2490
        %v2492 = vmul.f32 %v2469, 1.442695
        %v2493 = vpow.pop %v2492
        %v2494 = vmul.f32 %v2470, 1.442695
        %v2495 = vpow.pop %v2494
        %v2496 = vmul.f32 %v2471, 1.442695
        %v2497 = vpow.pop %v2496
        %v2498 = vmul.f32 %v2472, 1.442695
        %v2499 = vpow.pop %v2498
        %v2500 = vmul.f32 %v2473, 1.442695
        %v2501 = vpow.pop %v2500
        %v2502 = vmul.f32 %v2474, 1.442695
        %v2503 = vpow.pop %v2502
        %v2504 = vmul.f32 %v2475, 1.442695
        %v2505 = vpow.pop %v2504
        %v2506 = vmul.f32 %v2476, 1.442695
        %v2507 = vpow.pop %v2506
        %v2508 = vmul.f32 %v2477, 1.442695
        %v2509 = vpow.pop %v2508
        %2510 = vadd.xlane.f32.xlu0 %v2479
        %v2511 = vpop.xlane.xlu0 %2510
        %2512 = vadd.xlane.f32.xlu0 %v2481
        %v2513 = vpop.xlane.xlu0 %2512
        %2514 = vadd.xlane.f32.xlu0 %v2483
        %v2515 = vpop.xlane.xlu0 %2514
        %2516 = vadd.xlane.f32.xlu0 %v2485
        %v2517 = vpop.xlane.xlu0 %2516
        %2518 = vadd.xlane.f32.xlu0 %v2487
        %v2519 = vpop.xlane.xlu0 %2518
        %2520 = vadd.xlane.f32.xlu0 %v2489
        %v2521 = vpop.xlane.xlu0 %2520
        %2522 = vadd.xlane.f32.xlu0 %v2491
        %v2523 = vpop.xlane.xlu0 %2522
        %2524 = vadd.xlane.f32.xlu0 %v2493
        %v2525 = vpop.xlane.xlu0 %2524
        %2526 = vadd.xlane.f32.xlu0 %v2495
        %v2527 = vpop.xlane.xlu0 %2526
        %2528 = vadd.xlane.f32.xlu0 %v2497
        %v2529 = vpop.xlane.xlu0 %2528
        %2530 = vadd.xlane.f32.xlu0 %v2499
        %v2531 = vpop.xlane.xlu0 %2530
        %2532 = vadd.xlane.f32.xlu0 %v2501
        %v2533 = vpop.xlane.xlu0 %2532
        %2534 = vadd.xlane.f32.xlu0 %v2503
        %v2535 = vpop.xlane.xlu0 %2534
        %2536 = vadd.xlane.f32.xlu0 %v2505
        %v2537 = vpop.xlane.xlu0 %2536
        %2538 = vadd.xlane.f32.xlu0 %v2507
        %v2539 = vpop.xlane.xlu0 %2538
        %2540 = vadd.xlane.f32.xlu0 %v2509
        %v2541 = vpop.xlane.xlu0 %2540
        %v2542 = vrcp.pop %v2511
        %v2543 = vrcp.pop %v2513
        %v2544 = vrcp.pop %v2515
        %v2545 = vrcp.pop %v2517
        %v2546 = vrcp.pop %v2519
        %v2547 = vrcp.pop %v2521
        %v2548 = vrcp.pop %v2523
        %v2549 = vrcp.pop %v2525
        %v2550 = vrcp.pop %v2527
        %v2551 = vrcp.pop %v2529
        %v2552 = vrcp.pop %v2531
        %v2553 = vrcp.pop %v2533
        %v2554 = vrcp.pop %v2535
        %v2555 = vrcp.pop %v2537
        %v2556 = vrcp.pop %v2539
        %v2557 = vrcp.pop %v2541
        %v2558 = vmul.f32 %v2511, %v2542
        %v2559 = vmul.f32 %v2513, %v2543
        %v2560 = vmul.f32 %v2515, %v2544
        %v2561 = vmul.f32 %v2517, %v2545
        %v2562 = vmul.f32 %v2519, %v2546
        %v2563 = vmul.f32 %v2521, %v2547
        %v2564 = vmul.f32 %v2523, %v2548
        %v2565 = vmul.f32 %v2525, %v2549
        %v2566 = vmul.f32 %v2527, %v2550
        %v2567 = vmul.f32 %v2529, %v2551
        %v2568 = vmul.f32 %v2531, %v2552
        %v2569 = vmul.f32 %v2533, %v2553
        %v2570 = vmul.f32 %v2535, %v2554
        %v2571 = vmul.f32 %v2537, %v2555
        %v2572 = vmul.f32 %v2539, %v2556
        %v2573 = vmul.f32 %v2541, %v2557
        %v2574 = vsub.f32 2.0, %v2558
        %v2575 = vsub.f32 2.0, %v2559
        %v2576 = vsub.f32 2.0, %v2560
        %v2577 = vsub.f32 2.0, %v2561
        %v2578 = vsub.f32 2.0, %v2562
        %v2579 = vsub.f32 2.0, %v2563
        %v2580 = vsub.f32 2.0, %v2564
        %v2581 = vsub.f32 2.0, %v2565
        %v2582 = vsub.f32 2.0, %v2566
        %v2583 = vsub.f32 2.0, %v2567
        %v2584 = vsub.f32 2.0, %v2568
        %v2585 = vsub.f32 2.0, %v2569
        %v2586 = vsub.f32 2.0, %v2570
        %v2587 = vsub.f32 2.0, %v2571
        %v2588 = vsub.f32 2.0, %v2572
        %v2589 = vsub.f32 2.0, %v2573
        %v2590 = vmul.f32 %v2542, %v2574
        %v2591 = vmul.f32 %v2543, %v2575
        %v2592 = vmul.f32 %v2544, %v2576
        %v2593 = vmul.f32 %v2545, %v2577
        %v2594 = vmul.f32 %v2546, %v2578
        %v2595 = vmul.f32 %v2547, %v2579
        %v2596 = vmul.f32 %v2548, %v2580
        %v2597 = vmul.f32 %v2549, %v2581
        %v2598 = vmul.f32 %v2550, %v2582
        %v2599 = vmul.f32 %v2551, %v2583
        %v2600 = vmul.f32 %v2552, %v2584
        %v2601 = vmul.f32 %v2553, %v2585
        %v2602 = vmul.f32 %v2554, %v2586
        %v2603 = vmul.f32 %v2555, %v2587
        %v2604 = vmul.f32 %v2556, %v2588
        %v2605 = vmul.f32 %v2557, %v2589
        %v2606 = vmul.f32 %v2479, %v2590
        %v2607 = vmul.f32 %v2481, %v2591
        %v2608 = vmul.f32 %v2483, %v2592
        %v2609 = vmul.f32 %v2485, %v2593
        %v2610 = vmul.f32 %v2487, %v2594
        %v2611 = vmul.f32 %v2489, %v2595
        %v2612 = vmul.f32 %v2491, %v2596
        %v2613 = vmul.f32 %v2493, %v2597
        %v2614 = vmul.f32 %v2495, %v2598
        %v2615 = vmul.f32 %v2497, %v2599
        %v2616 = vmul.f32 %v2499, %v2600
        %v2617 = vmul.f32 %v2501, %v2601
        %v2618 = vmul.f32 %v2503, %v2602
        %v2619 = vmul.f32 %v2505, %v2603
        %v2620 = vmul.f32 %v2507, %v2604
        %v2621 = vmul.f32 %v2509, %v2605
        %2622 = vmatprep.subr.mxu0 0.0
        %2623 = vmatpush1.msra.mxu0 %v1394
        %2624 = vmatprep.subr.mxu0 0.0
        %2625 = vmatpush1.msra.mxu0 %v1399
        %2626 = vmatprep.subr.mxu0 0.0
        %2627 = vmatpush1.msra.mxu0 %v1404
        %2628 = vmatprep.subr.mxu0 0.0
        %2629 = vmatpush1.msra.mxu0 %v1409
        %2630 = vmatprep.subr.mxu0 0.0
        %2631 = vmatpush1.msra.mxu0 %v1414
        %2632 = vmatprep.subr.mxu0 0.0
        %2633 = vmatpush1.msra.mxu0 %v1419
        %2634 = vmatprep.subr.mxu0 0.0
        %2635 = vmatpush1.msra.mxu0 %v1424
        %2636 = vmatprep.subr.mxu0 0.0
        %2637 = vmatpush1.msra.mxu0 %v1429
        %2638 = vmatprep.subr.mxu0 0.0
        %2639 = vmatpush1.msra.mxu0 %v1434
        %2640 = vmatprep.subr.mxu0 0.0
        %2641 = vmatpush1.msra.mxu0 %v1439
        %2642 = vmatprep.subr.mxu0 0.0
        %2643 = vmatpush1.msra.mxu0 %v1444
        %2644 = vmatprep.subr.mxu0 0.0
        %2645 = vmatpush1.msra.mxu0 %v1449
        %2646 = vmatprep.subr.mxu0 0.0
        %2647 = vmatpush1.msra.mxu0 %v1454
        %2648 = vmatprep.subr.mxu0 0.0
        %2649 = vmatpush1.msra.mxu0 %v1459
        %2650 = vmatprep.subr.mxu0 0.0
        %2651 = vmatpush1.msra.mxu0 %v1464
        %2652 = vmatprep.subr.mxu0 0.0
        %2653 = vmatpush1.msra.mxu0 %v1469
        %2654 = vmatprep.subr.mxu0 0.0
        %2655 = vmatpush1.msra.mxu0 0.0
        %2656 = vmatprep.subr.mxu0 0.0
        %2657 = vmatpush1.msra.mxu0 0.0
        %2658 = vmatprep.subr.mxu0 0.0
        %2659 = vmatpush1.msra.mxu0 0.0
        %2660 = vmatprep.subr.mxu0 0.0
        %2661 = vmatpush1.msra.mxu0 0.0
        %2662 = vmatprep.subr.mxu0 0.0
        %2663 = vmatpush1.msra.mxu0 0.0
        %2664 = vmatprep.subr.mxu0 0.0
        %2665 = vmatpush1.msra.mxu0 0.0
        %2666 = vmatprep.subr.mxu0 0.0
        %2667 = vmatpush1.msra.mxu0 0.0
        %2668 = vmatprep.subr.mxu0 0.0
        %2669 = vmatpush1.msra.mxu0 0.0
        %2670 = vmatprep.subr.mxu0 0.0
        %2671 = vmatpush1.msra.mxu0 0.0
        %2672 = vmatprep.subr.mxu0 0.0
        %2673 = vmatpush1.msra.mxu0 0.0
        %2674 = vmatprep.subr.mxu0 0.0
        %2675 = vmatpush1.msra.mxu0 0.0
        %2676 = vmatprep.subr.mxu0 0.0
        %2677 = vmatpush1.msra.mxu0 0.0
        %2678 = vmatprep.subr.mxu0 0.0
        %2679 = vmatpush1.msra.mxu0 0.0
        %2680 = vmatprep.subr.mxu0 0.0
        %2681 = vmatpush1.msra.mxu0 0.0
        %2682 = vmatprep.subr.mxu0 0.0
        %2683 = vmatpush1.msra.mxu0 0.0
        %2684 = vmatprep.subr.mxu0 0.0
        %2685 = vmatpush1.msra.mxu0 0.0
        %2686 = vmatprep.mubr.f32.mxu0 0.0
        %2687 = vmatmul.mubr.f32.gmra.mrb[0].mxu0 %v2606
        %v2688 = vpop.f32.mrb[0].mxu0
        %v2689 = vadd.f32 0.0, %v2688
        %v2690 = vpop.f32.mrb[0].mxu0
        %2691 = vmatprep.mubr.f32.mxu0 0.0
        %2692 = vmatmul.mubr.f32.gmra.mrb[0].mxu0 %v2607
        %v2693 = vpop.f32.mrb[0].mxu0
        %v2694 = vadd.f32 0.0, %v2693
        %v2695 = vpop.f32.mrb[0].mxu0
        %2696 = vmatprep.mubr.f32.mxu0 0.0
        %2697 = vmatmul.mubr.f32.gmra.mrb[0].mxu0 %v2608
        %v2698 = vpop.f32.mrb[0].mxu0
        %v2699 = vadd.f32 0.0, %v2698
        %v2700 = vpop.f32.mrb[0].mxu0
        %2701 = vmatprep.mubr.f32.mxu0 0.0
        %2702 = vmatmul.mubr.f32.gmra.mrb[0].mxu0 %v2609
        %v2703 = vpop.f32.mrb[0].mxu0
        %v2704 = vadd.f32 0.0, %v2703
        %v2705 = vpop.f32.mrb[0].mxu0
        %2706 = vmatprep.mubr.f32.mxu0 0.0
        %2707 = vmatmul.mubr.f32.gmra.mrb[0].mxu0 %v2610
        %v2708 = vpop.f32.mrb[0].mxu0
        %v2709 = vadd.f32 0.0, %v2708
        %v2710 = vpop.f32.mrb[0].mxu0
        %2711 = vmatprep.mubr.f32.mxu0 0.0
        %2712 = vmatmul.mubr.f32.gmra.mrb[0].mxu0 %v2611
        %v2713 = vpop.f32.mrb[0].mxu0
        %v2714 = vadd.f32 0.0, %v2713
        %v2715 = vpop.f32.mrb[0].mxu0
        %2716 = vmatprep.mubr.f32.mxu0 0.0
        %2717 = vmatmul.mubr.f32.gmra.mrb[0].mxu0 %v2612
        %v2718 = vpop.f32.mrb[0].mxu0
        %v2719 = vadd.f32 0.0, %v2718
        %v2720 = vpop.f32.mrb[0].mxu0
        %2721 = vmatprep.mubr.f32.mxu0 0.0
        %2722 = vmatmul.mubr.f32.gmra.mrb[0].mxu0 %v2613
        %v2723 = vpop.f32.mrb[0].mxu0
        %v2724 = vadd.f32 0.0, %v2723
        %v2725 = vpop.f32.mrb[0].mxu0
        %2726 = vmatprep.mubr.f32.mxu0 0.0
        %2727 = vmatmul.mubr.f32.gmra.mrb[0].mxu0 %v2614
        %v2728 = vpop.f32.mrb[0].mxu0
        %v2729 = vadd.f32 0.0, %v2728
        %v2730 = vpop.f32.mrb[0].mxu0
        %2731 = vmatprep.mubr.f32.mxu0 0.0
        %2732 = vmatmul.mubr.f32.gmra.mrb[0].mxu0 %v2615
        %v2733 = vpop.f32.mrb[0].mxu0
        %v2734 = vadd.f32 0.0, %v2733
        %v2735 = vpop.f32.mrb[0].mxu0
        %2736 = vmatprep.mubr.f32.mxu0 0.0
        %2737 = vmatmul.mubr.f32.gmra.mrb[0].mxu0 %v2616
        %v2738 = vpop.f32.mrb[0].mxu0
        %v2739 = vadd.f32 0.0, %v2738
        %v2740 = vpop.f32.mrb[0].mxu0
        %2741 = vmatprep.mubr.f32.mxu0 0.0
        %2742 = vmatmul.mubr.f32.gmra.mrb[0].mxu0 %v2617
        %v2743 = vpop.f32.mrb[0].mxu0
        %v2744 = vadd.f32 0.0, %v2743
        %v2745 = vpop.f32.mrb[0].mxu0
        %2746 = vmatprep.mubr.f32.mxu0 0.0
        %2747 = vmatmul.mubr.f32.gmra.mrb[0].mxu0 %v2618
        %v2748 = vpop.f32.mrb[0].mxu0
        %v2749 = vadd.f32 0.0, %v2748
        %v2750 = vpop.f32.mrb[0].mxu0
        %2751 = vmatprep.mubr.f32.mxu0 0.0
        %2752 = vmatmul.mubr.f32.gmra.mrb[0].mxu0 %v2619
        %v2753 = vpop.f32.mrb[0].mxu0
        %v2754 = vadd.f32 0.0, %v2753
        %v2755 = vpop.f32.mrb[0].mxu0
        %2756 = vmatprep.mubr.f32.mxu0 0.0
        %2757 = vmatmul.mubr.f32.gmra.mrb[0].mxu0 %v2620
        %v2758 = vpop.f32.mrb[0].mxu0
        %v2759 = vadd.f32 0.0, %v2758
        %v2760 = vpop.f32.mrb[0].mxu0
        %2761 = vmatprep.mubr.f32.mxu0 0.0
        %2762 = vmatmul.mubr.f32.gmra.mrb[0].mxu0 %v2621
        %v2763 = vpop.f32.mrb[0].mxu0
        %v2764 = vadd.f32 0.0, %v2763
        %v2765 = vpop.f32.mrb[0].mxu0
        %2766 = vdwg.mxu0
        %vm2767 = vcmp.gt.f32.partialorder %v2689, 0.0
        %vm2768 = vcmp.gt.f32.partialorder %v2694, 0.0
        %vm2769 = vcmp.gt.f32.partialorder %v2699, 0.0
        %vm2770 = vcmp.gt.f32.partialorder %v2704, 0.0
        %vm2771 = vcmp.gt.f32.partialorder %v2709, 0.0
        %vm2772 = vcmp.gt.f32.partialorder %v2714, 0.0
        %vm2773 = vcmp.gt.f32.partialorder %v2719, 0.0
        %vm2774 = vcmp.gt.f32.partialorder %v2724, 0.0
        %vm2775 = vcmp.gt.f32.partialorder %v2729, 0.0
        %vm2776 = vcmp.gt.f32.partialorder %v2734, 0.0
        %vm2777 = vcmp.gt.f32.partialorder %v2739, 0.0
        %vm2778 = vcmp.gt.f32.partialorder %v2744, 0.0
        %vm2779 = vcmp.gt.f32.partialorder %v2749, 0.0
        %vm2780 = vcmp.gt.f32.partialorder %v2754, 0.0
        %vm2781 = vcmp.gt.f32.partialorder %v2759, 0.0
        %vm2782 = vcmp.gt.f32.partialorder %v2764, 0.0
        %v2783 = vmul.f32 %v2689, 1.442695
        %v2784 = vpow.pop %v2783
        %v2785 = vmul.f32 %v2694, 1.442695
        %v2786 = vpow.pop %v2785
        %v2787 = vmul.f32 %v2699, 1.442695
        %v2788 = vpow.pop %v2787
        %v2789 = vmul.f32 %v2704, 1.442695
        %v2790 = vpow.pop %v2789
        %v2791 = vmul.f32 %v2709, 1.442695
        %v2792 = vpow.pop %v2791
        %v2793 = vmul.f32 %v2714, 1.442695
        %v2794 = vpow.pop %v2793
        %v2795 = vmul.f32 %v2719, 1.442695
        %v2796 = vpow.pop %v2795
        %v2797 = vmul.f32 %v2724, 1.442695
        %v2798 = vpow.pop %v2797
        %v2799 = vmul.f32 %v2729, 1.442695
        %v2800 = vpow.pop %v2799
        %v2801 = vmul.f32 %v2734, 1.442695
        %v2802 = vpow.pop %v2801
        %v2803 = vmul.f32 %v2739, 1.442695
        %v2804 = vpow.pop %v2803
        %v2805 = vmul.f32 %v2744, 1.442695
        %v2806 = vpow.pop %v2805
        %v2807 = vmul.f32 %v2749, 1.442695
        %v2808 = vpow.pop %v2807
        %v2809 = vmul.f32 %v2754, 1.442695
        %v2810 = vpow.pop %v2809
        %v2811 = vmul.f32 %v2759, 1.442695
        %v2812 = vpow.pop %v2811
        %v2813 = vmul.f32 %v2764, 1.442695
        %v2814 = vpow.pop %v2813
        %v2815 = vsub.f32 %v2784, 1.0
        %v2816 = vsub.f32 %v2786, 1.0
        %v2817 = vsub.f32 %v2788, 1.0
        %v2818 = vsub.f32 %v2790, 1.0
        %v2819 = vsub.f32 %v2792, 1.0
        %v2820 = vsub.f32 %v2794, 1.0
        %v2821 = vsub.f32 %v2796, 1.0
        %v2822 = vsub.f32 %v2798, 1.0
        %v2823 = vsub.f32 %v2800, 1.0
        %v2824 = vsub.f32 %v2802, 1.0
        %v2825 = vsub.f32 %v2804, 1.0
        %v2826 = vsub.f32 %v2806, 1.0
        %v2827 = vsub.f32 %v2808, 1.0
        %v2828 = vsub.f32 %v2810, 1.0
        %v2829 = vsub.f32 %v2812, 1.0
        %v2830 = vsub.f32 %v2814, 1.0
        %v2831 = vsel %vm2767, %v2689, %v2815
        %v2832 = vsel %vm2768, %v2694, %v2816
        %v2833 = vsel %vm2769, %v2699, %v2817
        %v2834 = vsel %vm2770, %v2704, %v2818
        %v2835 = vsel %vm2771, %v2709, %v2819
        %v2836 = vsel %vm2772, %v2714, %v2820
        %v2837 = vsel %vm2773, %v2719, %v2821
        %v2838 = vsel %vm2774, %v2724, %v2822
        %v2839 = vsel %vm2775, %v2729, %v2823
        %v2840 = vsel %vm2776, %v2734, %v2824
        %v2841 = vsel %vm2777, %v2739, %v2825
        %v2842 = vsel %vm2778, %v2744, %v2826
        %v2843 = vsel %vm2779, %v2749, %v2827
        %v2844 = vsel %vm2780, %v2754, %v2828
        %v2845 = vsel %vm2781, %v2759, %v2829
        %v2846 = vsel %vm2782, %v2764, %v2830
        %v2847 = vmul.f32 %v2831, 1.442695
        %v2848 = vpow.pop %v2847
        %v2849 = vmul.f32 %v2832, 1.442695
        %v2850 = vpow.pop %v2849
        %v2851 = vmul.f32 %v2833, 1.442695
        %v2852 = vpow.pop %v2851
        %v2853 = vmul.f32 %v2834, 1.442695
        %v2854 = vpow.pop %v2853
        %v2855 = vmul.f32 %v2835, 1.442695
        %v2856 = vpow.pop %v2855
        %v2857 = vmul.f32 %v2836, 1.442695
        %v2858 = vpow.pop %v2857
        %v2859 = vmul.f32 %v2837, 1.442695
        %v2860 = vpow.pop %v2859
        %v2861 = vmul.f32 %v2838, 1.442695
        %v2862 = vpow.pop %v2861
        %v2863 = vmul.f32 %v2839, 1.442695
        %v2864 = vpow.pop %v2863
        %v2865 = vmul.f32 %v2840, 1.442695
        %v2866 = vpow.pop %v2865
        %v2867 = vmul.f32 %v2841, 1.442695
        %v2868 = vpow.pop %v2867
        %v2869 = vmul.f32 %v2842, 1.442695
        %v2870 = vpow.pop %v2869
        %v2871 = vmul.f32 %v2843, 1.442695
        %v2872 = vpow.pop %v2871
        %v2873 = vmul.f32 %v2844, 1.442695
        %v2874 = vpow.pop %v2873
        %v2875 = vmul.f32 %v2845, 1.442695
        %v2876 = vpow.pop %v2875
        %v2877 = vmul.f32 %v2846, 1.442695
        %v2878 = vpow.pop %v2877
        %v2879 = vmul.f32 %v209, %v2848
        %v2880 = vmul.f32 %v210, %v2850
        %v2881 = vmul.f32 %v211, %v2852
        %v2882 = vmul.f32 %v212, %v2854
        %v2883 = vmul.f32 %v213, %v2856
        %v2884 = vmul.f32 %v214, %v2858
        %v2885 = vmul.f32 %v215, %v2860
        %v2886 = vmul.f32 %v216, %v2862
        %v2887 = vmul.f32 %v217, %v2864
        %v2888 = vmul.f32 %v218, %v2866
        %v2889 = vmul.f32 %v219, %v2868
        %v2890 = vmul.f32 %v220, %v2870
        %v2891 = vmul.f32 %v221, %v2872
        %v2892 = vmul.f32 %v222, %v2874
        %v2893 = vmul.f32 %v223, %v2876
        %v2894 = vmul.f32 %v224, %v2878
        %v2895 = vadd.f32 %v2879, %v2144
        %v2896 = vadd.f32 %v2880, %v2145
        %v2897 = vadd.f32 %v2881, %v2146
        %v2898 = vadd.f32 %v2882, %v2147
        %v2899 = vadd.f32 %v2883, %v2148
        %v2900 = vadd.f32 %v2884, %v2149
        %v2901 = vadd.f32 %v2885, %v2150
        %v2902 = vadd.f32 %v2886, %v2151
        %v2903 = vadd.f32 %v2887, %v2152
        %v2904 = vadd.f32 %v2888, %v2153
        %v2905 = vadd.f32 %v2889, %v2154
        %v2906 = vadd.f32 %v2890, %v2155
        %v2907 = vadd.f32 %v2891, %v2156
        %v2908 = vadd.f32 %v2892, %v2157
        %v2909 = vadd.f32 %v2893, %v2158
        %v2910 = vadd.f32 %v2894, %v2159
        %v2911 = vld [vmem:[#allocation2 + $0x60] sm:$0xff]
        %v2912 = vld [vmem:[#allocation2 + $0x68] sm:$0xff]
        %v2913 = vld [vmem:[#allocation2 + $0x70] sm:$0xff]
        %v2914 = vld [vmem:[#allocation2 + $0x78] sm:$0xff]
        %v2915 = vld [vmem:[#allocation2 + $0x80] sm:$0xff]
        %v2916 = vld [vmem:[#allocation2 + $0x88] sm:$0xff]
        %2917 = vmatprep.subr.mxu0 0.0
        %2918 = vmatpush1.msra.mxu0 %v2913
        %2919 = vmatprep.subr.mxu0 0.0
        %2920 = vmatpush1.msra.mxu0 %v2914
        %2921 = vmatprep.subr.mxu0 0.0
        %2922 = vmatpush1.msra.mxu0 %v2915
        %2923 = vmatprep.subr.mxu0 0.0
        %2924 = vmatpush1.msra.mxu0 %v2916
        %2925 = vmatprep.subr.mxu0 0.0
        %2926 = vmatpush1.msra.mxu0 0.0
        %2927 = vmatprep.subr.mxu0 0.0
        %2928 = vmatpush1.msra.mxu0 0.0
        %2929 = vmatprep.subr.mxu0 0.0
        %2930 = vmatpush1.msra.mxu0 0.0
        %2931 = vmatprep.subr.mxu0 0.0
        %2932 = vmatpush1.msra.mxu0 0.0
        %2933 = vmatprep.subr.mxu0 0.0
        %2934 = vmatpush1.msra.mxu0 0.0
        %2935 = vmatprep.subr.mxu0 0.0
        %2936 = vmatpush1.msra.mxu0 0.0
        %2937 = vmatprep.subr.mxu0 0.0
        %2938 = vmatpush1.msra.mxu0 0.0
        %2939 = vmatprep.subr.mxu0 0.0
        %2940 = vmatpush1.msra.mxu0 0.0
        %2941 = vmatprep.subr.mxu0 0.0
        %2942 = vmatpush1.msra.mxu0 0.0
        %2943 = vmatprep.subr.mxu0 0.0
        %2944 = vmatpush1.msra.mxu0 0.0
        %2945 = vmatprep.subr.mxu0 0.0
        %2946 = vmatpush1.msra.mxu0 0.0
        %2947 = vmatprep.subr.mxu0 0.0
        %2948 = vmatpush1.msra.mxu0 0.0
        %2949 = vmatprep.subr.mxu0 0.0
        %2950 = vmatpush1.msra.mxu0 0.0
        %2951 = vmatprep.subr.mxu0 0.0
        %2952 = vmatpush1.msra.mxu0 0.0
        %2953 = vmatprep.subr.mxu0 0.0
        %2954 = vmatpush1.msra.mxu0 0.0
        %2955 = vmatprep.subr.mxu0 0.0
        %2956 = vmatpush1.msra.mxu0 0.0
        %2957 = vmatprep.subr.mxu0 0.0
        %2958 = vmatpush1.msra.mxu0 0.0
        %2959 = vmatprep.subr.mxu0 0.0
        %2960 = vmatpush1.msra.mxu0 0.0
        %2961 = vmatprep.subr.mxu0 0.0
        %2962 = vmatpush1.msra.mxu0 0.0
        %2963 = vmatprep.subr.mxu0 0.0
        %2964 = vmatpush1.msra.mxu0 0.0
        %2965 = vmatprep.subr.mxu0 0.0
        %2966 = vmatpush1.msra.mxu0 0.0
        %2967 = vmatprep.subr.mxu0 0.0
        %2968 = vmatpush1.msra.mxu0 0.0
        %2969 = vmatprep.subr.mxu0 0.0
        %2970 = vmatpush1.msra.mxu0 0.0
        %2971 = vmatprep.subr.mxu0 0.0
        %2972 = vmatpush1.msra.mxu0 0.0
        %2973 = vmatprep.subr.mxu0 0.0
        %2974 = vmatpush1.msra.mxu0 0.0
        %2975 = vmatprep.subr.mxu0 0.0
        %2976 = vmatpush1.msra.mxu0 0.0
        %2977 = vmatprep.subr.mxu0 0.0
        %2978 = vmatpush1.msra.mxu0 0.0
        %2979 = vmatprep.subr.mxu0 0.0
        %2980 = vmatpush1.msra.mxu0 0.0
        %2981 = vmatprep.mubr.f32.mxu0 0.0
        %2982 = vmatmul.mubr.f32.gmra.mrb[0].mxu0 %v247
        %v2983 = vpop.f32.mrb[0].mxu0
        %v2984 = vadd.f32 0.0, %v2983
        %v2985 = vpop.f32.mrb[0].mxu0
        %2986 = vmatprep.mubr.f32.mxu0 0.0
        %2987 = vmatmul.mubr.f32.gmra.mrb[0].mxu0 %v250
        %v2988 = vpop.f32.mrb[0].mxu0
        %v2989 = vadd.f32 0.0, %v2988
        %v2990 = vpop.f32.mrb[0].mxu0
        %2991 = vmatprep.mubr.f32.mxu0 0.0
        %2992 = vmatmul.mubr.f32.gmra.mrb[0].mxu0 %v253
        %v2993 = vpop.f32.mrb[0].mxu0
        %v2994 = vadd.f32 0.0, %v2993
        %v2995 = vpop.f32.mrb[0].mxu0
        %2996 = vmatprep.mubr.f32.mxu0 0.0
        %2997 = vmatmul.mubr.f32.gmra.mrb[0].mxu0 %v256
        %v2998 = vpop.f32.mrb[0].mxu0
        %v2999 = vadd.f32 0.0, %v2998
        %v3000 = vpop.f32.mrb[0].mxu0
        %3001 = vmatprep.mubr.f32.mxu0 0.0
        %3002 = vmatmul.mubr.f32.gmra.mrb[0].mxu0 %v259
        %v3003 = vpop.f32.mrb[0].mxu0
        %v3004 = vadd.f32 0.0, %v3003
        %v3005 = vpop.f32.mrb[0].mxu0
        %3006 = vmatprep.mubr.f32.mxu0 0.0
        %3007 = vmatmul.mubr.f32.gmra.mrb[0].mxu0 %v262
        %v3008 = vpop.f32.mrb[0].mxu0
        %v3009 = vadd.f32 0.0, %v3008
        %v3010 = vpop.f32.mrb[0].mxu0
        %3011 = vmatprep.mubr.f32.mxu0 0.0
        %3012 = vmatmul.mubr.f32.gmra.mrb[0].mxu0 %v265
        %v3013 = vpop.f32.mrb[0].mxu0
        %v3014 = vadd.f32 0.0, %v3013
        %v3015 = vpop.f32.mrb[0].mxu0
        %3016 = vmatprep.mubr.f32.mxu0 0.0
        %3017 = vmatmul.mubr.f32.gmra.mrb[0].mxu0 %v268
        %v3018 = vpop.f32.mrb[0].mxu0
        %v3019 = vadd.f32 0.0, %v3018
        %v3020 = vpop.f32.mrb[0].mxu0
        %3021 = vmatprep.mubr.f32.mxu0 0.0
        %3022 = vmatmul.mubr.f32.gmra.mrb[0].mxu0 %v271
        %v3023 = vpop.f32.mrb[0].mxu0
        %v3024 = vadd.f32 0.0, %v3023
        %v3025 = vpop.f32.mrb[0].mxu0
        %3026 = vmatprep.mubr.f32.mxu0 0.0
        %3027 = vmatmul.mubr.f32.gmra.mrb[0].mxu0 %v274
        %v3028 = vpop.f32.mrb[0].mxu0
        %v3029 = vadd.f32 0.0, %v3028
        %v3030 = vpop.f32.mrb[0].mxu0
        %3031 = vmatprep.mubr.f32.mxu0 0.0
        %3032 = vmatmul.mubr.f32.gmra.mrb[0].mxu0 %v277
        %v3033 = vpop.f32.mrb[0].mxu0
        %v3034 = vadd.f32 0.0, %v3033
        %v3035 = vpop.f32.mrb[0].mxu0
        %3036 = vmatprep.mubr.f32.mxu0 0.0
        %3037 = vmatmul.mubr.f32.gmra.mrb[0].mxu0 %v280
        %v3038 = vpop.f32.mrb[0].mxu0
        %v3039 = vadd.f32 0.0, %v3038
        %v3040 = vpop.f32.mrb[0].mxu0
        %3041 = vmatprep.mubr.f32.mxu0 0.0
        %3042 = vmatmul.mubr.f32.gmra.mrb[0].mxu0 %v283
        %v3043 = vpop.f32.mrb[0].mxu0
        %v3044 = vadd.f32 0.0, %v3043
        %v3045 = vpop.f32.mrb[0].mxu0
        %3046 = vmatprep.mubr.f32.mxu0 0.0
        %3047 = vmatmul.mubr.f32.gmra.mrb[0].mxu0 %v286
        %v3048 = vpop.f32.mrb[0].mxu0
        %v3049 = vadd.f32 0.0, %v3048
        %v3050 = vpop.f32.mrb[0].mxu0
        %3051 = vmatprep.mubr.f32.mxu0 0.0
        %3052 = vmatmul.mubr.f32.gmra.mrb[0].mxu0 %v289
        %v3053 = vpop.f32.mrb[0].mxu0
        %v3054 = vadd.f32 0.0, %v3053
        %v3055 = vpop.f32.mrb[0].mxu0
        %3056 = vmatprep.mubr.f32.mxu0 0.0
        %3057 = vmatmul.mubr.f32.gmra.mrb[0].mxu0 %v292
        %v3058 = vpop.f32.mrb[0].mxu0
        %v3059 = vadd.f32 0.0, %v3058
        %v3060 = vpop.f32.mrb[0].mxu0
        %3061 = vdwg.mxu0
        %v3063 = vsel %vm1473, %v2895, 0
        %v3066 = vsel %vm1473, %v2896, 0
        %v3069 = vsel %vm1473, %v2897, 0
        %v3072 = vsel %vm1473, %v2898, 0
        %v3075 = vsel %vm1473, %v2899, 0
        %v3078 = vsel %vm1473, %v2900, 0
        %v3081 = vsel %vm1473, %v2901, 0
        %v3084 = vsel %vm1473, %v2902, 0
        %v3087 = vsel %vm1473, %v2903, 0
        %v3090 = vsel %vm1473, %v2904, 0
        %v3093 = vsel %vm1473, %v2905, 0
        %v3096 = vsel %vm1473, %v2906, 0
        %v3099 = vsel %vm1473, %v2907, 0
        %v3102 = vsel %vm1473, %v2908, 0
        %v3105 = vsel %vm1473, %v2909, 0
        %v3108 = vsel %vm1473, %v2910, 0
        %3110 = vmatprep.subr.mxu0 0.0
        %3111 = vmatpush1.msra.mxu0 %v2911
        %3112 = vmatprep.subr.mxu0 0.0
        %3113 = vmatpush1.msra.mxu0 %v2912
        %3114 = vmatprep.subr.mxu0 0.0
        %3115 = vmatpush1.msra.mxu0 0.0
        %3116 = vmatprep.subr.mxu0 0.0
        %3117 = vmatpush1.msra.mxu0 0.0
        %3118 = vmatprep.subr.mxu0 0.0
        %3119 = vmatpush1.msra.mxu0 0.0
        %3120 = vmatprep.subr.mxu0 0.0
        %3121 = vmatpush1.msra.mxu0 0.0
        %3122 = vmatprep.subr.mxu0 0.0
        %3123 = vmatpush1.msra.mxu0 0.0
        %3124 = vmatprep.subr.mxu0 0.0
        %3125 = vmatpush1.msra.mxu0 0.0
        %3126 = vmatprep.subr.mxu0 0.0
        %3127 = vmatpush1.msra.mxu0 0.0
        %3128 = vmatprep.subr.mxu0 0.0
        %3129 = vmatpush1.msra.mxu0 0.0
        %3130 = vmatprep.subr.mxu0 0.0
        %3131 = vmatpush1.msra.mxu0 0.0
        %3132 = vmatprep.subr.mxu0 0.0
        %3133 = vmatpush1.msra.mxu0 0.0
        %3134 = vmatprep.subr.mxu0 0.0
        %3135 = vmatpush1.msra.mxu0 0.0
        %3136 = vmatprep.subr.mxu0 0.0
        %3137 = vmatpush1.msra.mxu0 0.0
        %3138 = vmatprep.subr.mxu0 0.0
        %3139 = vmatpush1.msra.mxu0 0.0
        %3140 = vmatprep.subr.mxu0 0.0
        %3141 = vmatpush1.msra.mxu0 0.0
        %3142 = vmatprep.subr.mxu0 0.0
        %3143 = vmatpush1.msra.mxu0 0.0
        %3144 = vmatprep.subr.mxu0 0.0
        %3145 = vmatpush1.msra.mxu0 0.0
        %3146 = vmatprep.subr.mxu0 0.0
        %3147 = vmatpush1.msra.mxu0 0.0
        %3148 = vmatprep.subr.mxu0 0.0
        %3149 = vmatpush1.msra.mxu0 0.0
        %3150 = vmatprep.subr.mxu0 0.0
        %3151 = vmatpush1.msra.mxu0 0.0
        %3152 = vmatprep.subr.mxu0 0.0
        %3153 = vmatpush1.msra.mxu0 0.0
        %3154 = vmatprep.subr.mxu0 0.0
        %3155 = vmatpush1.msra.mxu0 0.0
        %3156 = vmatprep.subr.mxu0 0.0
        %3157 = vmatpush1.msra.mxu0 0.0
        %3158 = vmatprep.subr.mxu0 0.0
        %3159 = vmatpush1.msra.mxu0 0.0
        %3160 = vmatprep.subr.mxu0 0.0
        %3161 = vmatpush1.msra.mxu0 0.0
        %3162 = vmatprep.subr.mxu0 0.0
        %3163 = vmatpush1.msra.mxu0 0.0
        %3164 = vmatprep.subr.mxu0 0.0
        %3165 = vmatpush1.msra.mxu0 0.0
        %3166 = vmatprep.subr.mxu0 0.0
        %3167 = vmatpush1.msra.mxu0 0.0
        %3168 = vmatprep.subr.mxu0 0.0
        %3169 = vmatpush1.msra.mxu0 0.0
        %3170 = vmatprep.subr.mxu0 0.0
        %3171 = vmatpush1.msra.mxu0 0.0
        %3172 = vmatprep.subr.mxu0 0.0
        %3173 = vmatpush1.msra.mxu0 0.0
        %3174 = vmatprep.mubr.f32.mxu0 0.0
        %3175 = vmatmul.mubr.f32.gmra.mrb[0].mxu0 %v3063
        %v3176 = vpop.f32.mrb[0].mxu0
        %v3177 = vadd.f32 %v2984, %v3176
        %v3178 = vpop.f32.mrb[0].mxu0
        %3179 = vmatprep.mubr.f32.mxu0 0.0
        %3180 = vmatmul.mubr.f32.gmra.mrb[0].mxu0 %v3066
        %v3181 = vpop.f32.mrb[0].mxu0
        %v3182 = vadd.f32 %v2989, %v3181
        %v3183 = vpop.f32.mrb[0].mxu0
        %3184 = vmatprep.mubr.f32.mxu0 0.0
        %3185 = vmatmul.mubr.f32.gmra.mrb[0].mxu0 %v3069
        %v3186 = vpop.f32.mrb[0].mxu0
        %v3187 = vadd.f32 %v2994, %v3186
        %v3188 = vpop.f32.mrb[0].mxu0
        %3189 = vmatprep.mubr.f32.mxu0 0.0
        %3190 = vmatmul.mubr.f32.gmra.mrb[0].mxu0 %v3072
        %v3191 = vpop.f32.mrb[0].mxu0
        %v3192 = vadd.f32 %v2999, %v3191
        %v3193 = vpop.f32.mrb[0].mxu0
        %3194 = vmatprep.mubr.f32.mxu0 0.0
        %3195 = vmatmul.mubr.f32.gmra.mrb[0].mxu0 %v3075
        %v3196 = vpop.f32.mrb[0].mxu0
        %v3197 = vadd.f32 %v3004, %v3196
        %v3198 = vpop.f32.mrb[0].mxu0
        %3199 = vmatprep.mubr.f32.mxu0 0.0
        %3200 = vmatmul.mubr.f32.gmra.mrb[0].mxu0 %v3078
        %v3201 = vpop.f32.mrb[0].mxu0
        %v3202 = vadd.f32 %v3009, %v3201
        %v3203 = vpop.f32.mrb[0].mxu0
        %3204 = vmatprep.mubr.f32.mxu0 0.0
        %3205 = vmatmul.mubr.f32.gmra.mrb[0].mxu0 %v3081
        %v3206 = vpop.f32.mrb[0].mxu0
        %v3207 = vadd.f32 %v3014, %v3206
        %v3208 = vpop.f32.mrb[0].mxu0
        %3209 = vmatprep.mubr.f32.mxu0 0.0
        %3210 = vmatmul.mubr.f32.gmra.mrb[0].mxu0 %v3084
        %v3211 = vpop.f32.mrb[0].mxu0
        %v3212 = vadd.f32 %v3019, %v3211
        %v3213 = vpop.f32.mrb[0].mxu0
        %3214 = vmatprep.mubr.f32.mxu0 0.0
        %3215 = vmatmul.mubr.f32.gmra.mrb[0].mxu0 %v3087
        %v3216 = vpop.f32.mrb[0].mxu0
        %v3217 = vadd.f32 %v3024, %v3216
        %v3218 = vpop.f32.mrb[0].mxu0
        %3219 = vmatprep.mubr.f32.mxu0 0.0
        %3220 = vmatmul.mubr.f32.gmra.mrb[0].mxu0 %v3090
        %v3221 = vpop.f32.mrb[0].mxu0
        %v3222 = vadd.f32 %v3029, %v3221
        %v3223 = vpop.f32.mrb[0].mxu0
        %3224 = vmatprep.mubr.f32.mxu0 0.0
        %3225 = vmatmul.mubr.f32.gmra.mrb[0].mxu0 %v3093
        %v3226 = vpop.f32.mrb[0].mxu0
        %v3227 = vadd.f32 %v3034, %v3226
        %v3228 = vpop.f32.mrb[0].mxu0
        %3229 = vmatprep.mubr.f32.mxu0 0.0
        %3230 = vmatmul.mubr.f32.gmra.mrb[0].mxu0 %v3096
        %v3231 = vpop.f32.mrb[0].mxu0
        %v3232 = vadd.f32 %v3039, %v3231
        %v3233 = vpop.f32.mrb[0].mxu0
        %3234 = vmatprep.mubr.f32.mxu0 0.0
        %3235 = vmatmul.mubr.f32.gmra.mrb[0].mxu0 %v3099
        %v3236 = vpop.f32.mrb[0].mxu0
        %v3237 = vadd.f32 %v3044, %v3236
        %v3238 = vpop.f32.mrb[0].mxu0
        %3239 = vmatprep.mubr.f32.mxu0 0.0
        %3240 = vmatmul.mubr.f32.gmra.mrb[0].mxu0 %v3102
        %v3241 = vpop.f32.mrb[0].mxu0
        %v3242 = vadd.f32 %v3049, %v3241
        %v3243 = vpop.f32.mrb[0].mxu0
        %3244 = vmatprep.mubr.f32.mxu0 0.0
        %3245 = vmatmul.mubr.f32.gmra.mrb[0].mxu0 %v3105
        %v3246 = vpop.f32.mrb[0].mxu0
        %v3247 = vadd.f32 %v3054, %v3246
        %v3248 = vpop.f32.mrb[0].mxu0
        %3249 = vmatprep.mubr.f32.mxu0 0.0
        %3250 = vmatmul.mubr.f32.gmra.mrb[0].mxu0 %v3108
        %v3251 = vpop.f32.mrb[0].mxu0
        %v3252 = vadd.f32 %v3059, %v3251
        %v3253 = vpop.f32.mrb[0].mxu0
        %3254 = vdwg.mxu0
        %v3255 = vld [vmem:[#allocation2 + $0xc8] sm:$0x1]
        %v3256 = vlaneseq
        %v3257 = vshrl.u32 %v3256, 7
        %v3258 = vsub.s32 0, %v3257
        %v3259 = vrot.slane %v3255, %v3258
        %v3260 = vadd.f32 %v3177, %v3259
        %v3261 = vadd.f32 %v3182, %v3259
        %v3262 = vadd.f32 %v3187, %v3259
        %v3263 = vadd.f32 %v3192, %v3259
        %v3264 = vadd.f32 %v3197, %v3259
        %v3265 = vadd.f32 %v3202, %v3259
        %v3266 = vadd.f32 %v3207, %v3259
        %v3267 = vadd.f32 %v3212, %v3259
        %v3268 = vadd.f32 %v3217, %v3259
        %v3269 = vadd.f32 %v3222, %v3259
        %v3270 = vadd.f32 %v3227, %v3259
        %v3271 = vadd.f32 %v3232, %v3259
        %v3272 = vadd.f32 %v3237, %v3259
        %v3273 = vadd.f32 %v3242, %v3259
        %v3274 = vadd.f32 %v3247, %v3259
        %v3275 = vadd.f32 %v3252, %v3259
        %v3276 = vmax.f32 %v3260, 0.0
        %v3277 = vmax.f32 %v3261, 0.0
        %v3278 = vmax.f32 %v3262, 0.0
        %v3279 = vmax.f32 %v3263, 0.0
        %v3280 = vmax.f32 %v3264, 0.0
        %v3281 = vmax.f32 %v3265, 0.0
        %v3282 = vmax.f32 %v3266, 0.0
        %v3283 = vmax.f32 %v3267, 0.0
        %v3284 = vmax.f32 %v3268, 0.0
        %v3285 = vmax.f32 %v3269, 0.0
        %v3286 = vmax.f32 %v3270, 0.0
        %v3287 = vmax.f32 %v3271, 0.0
        %v3288 = vmax.f32 %v3272, 0.0
        %v3289 = vmax.f32 %v3273, 0.0
        %v3290 = vmax.f32 %v3274, 0.0
        %v3291 = vmax.f32 %v3275, 0.0
        %v3292 = vld [vmem:[#allocation2 + $0x90] sm:$0xff]
        %v3293 = vld [vmem:[#allocation2 + $0x98] sm:$0xff]
        %v3294 = vld [vmem:[#allocation2 + $0xa0] sm:$0xff]
        %v3295 = vld [vmem:[#allocation2 + $0xa8] sm:$0xff]
        %v3296 = vld [vmem:[#allocation2 + $0xd0] sm:$0x1]
        %v3297 = vlaneseq
        %v3298 = vshrl.u32 %v3297, 7
        %v3299 = vsub.s32 0, %v3298
        %v3300 = vrot.slane %v3296, %v3299
        %v3302 = vsel %vm245, %v3276, 0
        %v3305 = vsel %vm245, %v3277, 0
        %v3308 = vsel %vm245, %v3278, 0
        %v3311 = vsel %vm245, %v3279, 0
        %v3314 = vsel %vm245, %v3280, 0
        %v3317 = vsel %vm245, %v3281, 0
        %v3320 = vsel %vm245, %v3282, 0
        %v3323 = vsel %vm245, %v3283, 0
        %v3326 = vsel %vm245, %v3284, 0
        %v3329 = vsel %vm245, %v3285, 0
        %v3332 = vsel %vm245, %v3286, 0
        %v3335 = vsel %vm245, %v3287, 0
        %v3338 = vsel %vm245, %v3288, 0
        %v3341 = vsel %vm245, %v3289, 0
        %v3344 = vsel %vm245, %v3290, 0
        %v3347 = vsel %vm245, %v3291, 0
        %3349 = vmatprep.subr.mxu0 0.0
        %3350 = vmatpush1.msra.mxu0 %v3292
        %3351 = vmatprep.subr.mxu0 0.0
        %3352 = vmatpush1.msra.mxu0 %v3293
        %3353 = vmatprep.subr.mxu0 0.0
        %3354 = vmatpush1.msra.mxu0 %v3294
        %3355 = vmatprep.subr.mxu0 0.0
        %3356 = vmatpush1.msra.mxu0 %v3295
        %3357 = vmatprep.subr.mxu0 0.0
        %3358 = vmatpush1.msra.mxu0 0.0
        %3359 = vmatprep.subr.mxu0 0.0
        %3360 = vmatpush1.msra.mxu0 0.0
        %3361 = vmatprep.subr.mxu0 0.0
        %3362 = vmatpush1.msra.mxu0 0.0
        %3363 = vmatprep.subr.mxu0 0.0
        %3364 = vmatpush1.msra.mxu0 0.0
        %3365 = vmatprep.subr.mxu0 0.0
        %3366 = vmatpush1.msra.mxu0 0.0
        %3367 = vmatprep.subr.mxu0 0.0
        %3368 = vmatpush1.msra.mxu0 0.0
        %3369 = vmatprep.subr.mxu0 0.0
        %3370 = vmatpush1.msra.mxu0 0.0
        %3371 = vmatprep.subr.mxu0 0.0
        %3372 = vmatpush1.msra.mxu0 0.0
        %3373 = vmatprep.subr.mxu0 0.0
        %3374 = vmatpush1.msra.mxu0 0.0
        %3375 = vmatprep.subr.mxu0 0.0
        %3376 = vmatpush1.msra.mxu0 0.0
        %3377 = vmatprep.subr.mxu0 0.0
        %3378 = vmatpush1.msra.mxu0 0.0
        %3379 = vmatprep.subr.mxu0 0.0
        %3380 = vmatpush1.msra.mxu0 0.0
        %3381 = vmatprep.subr.mxu0 0.0
        %3382 = vmatpush1.msra.mxu0 0.0
        %3383 = vmatprep.subr.mxu0 0.0
        %3384 = vmatpush1.msra.mxu0 0.0
        %3385 = vmatprep.subr.mxu0 0.0
        %3386 = vmatpush1.msra.mxu0 0.0
        %3387 = vmatprep.subr.mxu0 0.0
        %3388 = vmatpush1.msra.mxu0 0.0
        %3389 = vmatprep.subr.mxu0 0.0
        %3390 = vmatpush1.msra.mxu0 0.0
        %3391 = vmatprep.subr.mxu0 0.0
        %3392 = vmatpush1.msra.mxu0 0.0
        %3393 = vmatprep.subr.mxu0 0.0
        %3394 = vmatpush1.msra.mxu0 0.0
        %3395 = vmatprep.subr.mxu0 0.0
        %3396 = vmatpush1.msra.mxu0 0.0
        %3397 = vmatprep.subr.mxu0 0.0
        %3398 = vmatpush1.msra.mxu0 0.0
        %3399 = vmatprep.subr.mxu0 0.0
        %3400 = vmatpush1.msra.mxu0 0.0
        %3401 = vmatprep.subr.mxu0 0.0
        %3402 = vmatpush1.msra.mxu0 0.0
        %3403 = vmatprep.subr.mxu0 0.0
        %3404 = vmatpush1.msra.mxu0 0.0
        %3405 = vmatprep.subr.mxu0 0.0
        %3406 = vmatpush1.msra.mxu0 0.0
        %3407 = vmatprep.subr.mxu0 0.0
        %3408 = vmatpush1.msra.mxu0 0.0
        %3409 = vmatprep.subr.mxu0 0.0
        %3410 = vmatpush1.msra.mxu0 0.0
        %3411 = vmatprep.subr.mxu0 0.0
        %3412 = vmatpush1.msra.mxu0 0.0
        %3413 = vmatprep.mubr.f32.mxu0 0.0
        %3414 = vmatmul.mubr.f32.gmra.mrb[0].mxu0 %v3302
        %v3415 = vpop.f32.mrb[0].mxu0
        %v3416 = vadd.f32 %v3300, %v3415
        %v3417 = vpop.f32.mrb[0].mxu0
        %3418 = vmatprep.mubr.f32.mxu0 0.0
        %3419 = vmatmul.mubr.f32.gmra.mrb[0].mxu0 %v3305
        %v3420 = vpop.f32.mrb[0].mxu0
        %v3421 = vadd.f32 %v3300, %v3420
        %v3422 = vpop.f32.mrb[0].mxu0
        %3423 = vmatprep.mubr.f32.mxu0 0.0
        %3424 = vmatmul.mubr.f32.gmra.mrb[0].mxu0 %v3308
        %v3425 = vpop.f32.mrb[0].mxu0
        %v3426 = vadd.f32 %v3300, %v3425
        %v3427 = vpop.f32.mrb[0].mxu0
        %3428 = vmatprep.mubr.f32.mxu0 0.0
        %3429 = vmatmul.mubr.f32.gmra.mrb[0].mxu0 %v3311
        %v3430 = vpop.f32.mrb[0].mxu0
        %v3431 = vadd.f32 %v3300, %v3430
        %v3432 = vpop.f32.mrb[0].mxu0
        %3433 = vmatprep.mubr.f32.mxu0 0.0
        %3434 = vmatmul.mubr.f32.gmra.mrb[0].mxu0 %v3314
        %v3435 = vpop.f32.mrb[0].mxu0
        %v3436 = vadd.f32 %v3300, %v3435
        %v3437 = vpop.f32.mrb[0].mxu0
        %3438 = vmatprep.mubr.f32.mxu0 0.0
        %3439 = vmatmul.mubr.f32.gmra.mrb[0].mxu0 %v3317
        %v3440 = vpop.f32.mrb[0].mxu0
        %v3441 = vadd.f32 %v3300, %v3440
        %v3442 = vpop.f32.mrb[0].mxu0
        %3443 = vmatprep.mubr.f32.mxu0 0.0
        %3444 = vmatmul.mubr.f32.gmra.mrb[0].mxu0 %v3320
        %v3445 = vpop.f32.mrb[0].mxu0
        %v3446 = vadd.f32 %v3300, %v3445
        %v3447 = vpop.f32.mrb[0].mxu0
        %3448 = vmatprep.mubr.f32.mxu0 0.0
        %3449 = vmatmul.mubr.f32.gmra.mrb[0].mxu0 %v3323
        %v3450 = vpop.f32.mrb[0].mxu0
        %v3451 = vadd.f32 %v3300, %v3450
        %v3452 = vpop.f32.mrb[0].mxu0
        %3453 = vmatprep.mubr.f32.mxu0 0.0
        %3454 = vmatmul.mubr.f32.gmra.mrb[0].mxu0 %v3326
        %v3455 = vpop.f32.mrb[0].mxu0
        %v3456 = vadd.f32 %v3300, %v3455
        %v3457 = vpop.f32.mrb[0].mxu0
        %3458 = vmatprep.mubr.f32.mxu0 0.0
        %3459 = vmatmul.mubr.f32.gmra.mrb[0].mxu0 %v3329
        %v3460 = vpop.f32.mrb[0].mxu0
        %v3461 = vadd.f32 %v3300, %v3460
        %v3462 = vpop.f32.mrb[0].mxu0
        %3463 = vmatprep.mubr.f32.mxu0 0.0
        %3464 = vmatmul.mubr.f32.gmra.mrb[0].mxu0 %v3332
        %v3465 = vpop.f32.mrb[0].mxu0
        %v3466 = vadd.f32 %v3300, %v3465
        %v3467 = vpop.f32.mrb[0].mxu0
        %3468 = vmatprep.mubr.f32.mxu0 0.0
        %3469 = vmatmul.mubr.f32.gmra.mrb[0].mxu0 %v3335
        %v3470 = vpop.f32.mrb[0].mxu0
        %v3471 = vadd.f32 %v3300, %v3470
        %v3472 = vpop.f32.mrb[0].mxu0
        %3473 = vmatprep.mubr.f32.mxu0 0.0
        %3474 = vmatmul.mubr.f32.gmra.mrb[0].mxu0 %v3338
        %v3475 = vpop.f32.mrb[0].mxu0
        %v3476 = vadd.f32 %v3300, %v3475
        %v3477 = vpop.f32.mrb[0].mxu0
        %3478 = vmatprep.mubr.f32.mxu0 0.0
        %3479 = vmatmul.mubr.f32.gmra.mrb[0].mxu0 %v3341
        %v3480 = vpop.f32.mrb[0].mxu0
        %v3481 = vadd.f32 %v3300, %v3480
        %v3482 = vpop.f32.mrb[0].mxu0
        %3483 = vmatprep.mubr.f32.mxu0 0.0
        %3484 = vmatmul.mubr.f32.gmra.mrb[0].mxu0 %v3344
        %v3485 = vpop.f32.mrb[0].mxu0
        %v3486 = vadd.f32 %v3300, %v3485
        %v3487 = vpop.f32.mrb[0].mxu0
        %3488 = vmatprep.mubr.f32.mxu0 0.0
        %3489 = vmatmul.mubr.f32.gmra.mrb[0].mxu0 %v3347
        %v3490 = vpop.f32.mrb[0].mxu0
        %v3491 = vadd.f32 %v3300, %v3490
        %v3492 = vpop.f32.mrb[0].mxu0
        %3493 = vdwg.mxu0
        %v3494 = vxor.u32 %v3416, 2147483648
        %v3495 = vxor.u32 %v3421, 2147483648
        %v3496 = vxor.u32 %v3426, 2147483648
        %v3497 = vxor.u32 %v3431, 2147483648
        %v3498 = vxor.u32 %v3436, 2147483648
        %v3499 = vxor.u32 %v3441, 2147483648
        %v3500 = vxor.u32 %v3446, 2147483648
        %v3501 = vxor.u32 %v3451, 2147483648
        %v3502 = vxor.u32 %v3456, 2147483648
        %v3503 = vxor.u32 %v3461, 2147483648
        %v3504 = vxor.u32 %v3466, 2147483648
        %v3505 = vxor.u32 %v3471, 2147483648
        %v3506 = vxor.u32 %v3476, 2147483648
        %v3507 = vxor.u32 %v3481, 2147483648
        %v3508 = vxor.u32 %v3486, 2147483648
        %v3509 = vxor.u32 %v3491, 2147483648
        %v3510 = vmul.f32 %v3494, 1.442695
        %v3511 = vpow.pop %v3510
        %v3512 = vmul.f32 %v3495, 1.442695
        %v3513 = vpow.pop %v3512
        %v3514 = vmul.f32 %v3496, 1.442695
        %v3515 = vpow.pop %v3514
        %v3516 = vmul.f32 %v3497, 1.442695
        %v3517 = vpow.pop %v3516
        %v3518 = vmul.f32 %v3498, 1.442695
        %v3519 = vpow.pop %v3518
        %v3520 = vmul.f32 %v3499, 1.442695
        %v3521 = vpow.pop %v3520
        %v3522 = vmul.f32 %v3500, 1.442695
        %v3523 = vpow.pop %v3522
        %v3524 = vmul.f32 %v3501, 1.442695
        %v3525 = vpow.pop %v3524
        %v3526 = vmul.f32 %v3502, 1.442695
        %v3527 = vpow.pop %v3526
        %v3528 = vmul.f32 %v3503, 1.442695
        %v3529 = vpow.pop %v3528
        %v3530 = vmul.f32 %v3504, 1.442695
        %v3531 = vpow.pop %v3530
        %v3532 = vmul.f32 %v3505, 1.442695
        %v3533 = vpow.pop %v3532
        %v3534 = vmul.f32 %v3506, 1.442695
        %v3535 = vpow.pop %v3534
        %v3536 = vmul.f32 %v3507, 1.442695
        %v3537 = vpow.pop %v3536
        %v3538 = vmul.f32 %v3508, 1.442695
        %v3539 = vpow.pop %v3538
        %v3540 = vmul.f32 %v3509, 1.442695
        %v3541 = vpow.pop %v3540
        %v3542 = vadd.f32 %v3511, 1.0
        %v3543 = vadd.f32 %v3513, 1.0
        %v3544 = vadd.f32 %v3515, 1.0
        %v3545 = vadd.f32 %v3517, 1.0
        %v3546 = vadd.f32 %v3519, 1.0
        %v3547 = vadd.f32 %v3521, 1.0
        %v3548 = vadd.f32 %v3523, 1.0
        %v3549 = vadd.f32 %v3525, 1.0
        %v3550 = vadd.f32 %v3527, 1.0
        %v3551 = vadd.f32 %v3529, 1.0
        %v3552 = vadd.f32 %v3531, 1.0
        %v3553 = vadd.f32 %v3533, 1.0
        %v3554 = vadd.f32 %v3535, 1.0
        %v3555 = vadd.f32 %v3537, 1.0
        %v3556 = vadd.f32 %v3539, 1.0
        %v3557 = vadd.f32 %v3541, 1.0
        %v3558 = vrcp.pop %v3542
        %v3559 = vmul.f32 1.0, %v3558
        %v3560 = vrcp.pop %v3543
        %v3561 = vmul.f32 1.0, %v3560
        %v3562 = vrcp.pop %v3544
        %v3563 = vmul.f32 1.0, %v3562
        %v3564 = vrcp.pop %v3545
        %v3565 = vmul.f32 1.0, %v3564
        %v3566 = vrcp.pop %v3546
        %v3567 = vmul.f32 1.0, %v3566
        %v3568 = vrcp.pop %v3547
        %v3569 = vmul.f32 1.0, %v3568
        %v3570 = vrcp.pop %v3548
        %v3571 = vmul.f32 1.0, %v3570
        %v3572 = vrcp.pop %v3549
        %v3573 = vmul.f32 1.0, %v3572
        %v3574 = vrcp.pop %v3550
        %v3575 = vmul.f32 1.0, %v3574
        %v3576 = vrcp.pop %v3551
        %v3577 = vmul.f32 1.0, %v3576
        %v3578 = vrcp.pop %v3552
        %v3579 = vmul.f32 1.0, %v3578
        %v3580 = vrcp.pop %v3553
        %v3581 = vmul.f32 1.0, %v3580
        %v3582 = vrcp.pop %v3554
        %v3583 = vmul.f32 1.0, %v3582
        %v3584 = vrcp.pop %v3555
        %v3585 = vmul.f32 1.0, %v3584
        %v3586 = vrcp.pop %v3556
        %v3587 = vmul.f32 1.0, %v3586
        %v3588 = vrcp.pop %v3557
        %v3589 = vmul.f32 1.0, %v3588
        %3590 = vst [vmem:[%s195] sm:$0xff] %v3559
        %3591 = vst [vmem:[%s195 + $0x8] sm:$0xff] %v3561
        %3592 = vst [vmem:[%s195 + $0x10] sm:$0xff] %v3563
        %3593 = vst [vmem:[%s195 + $0x18] sm:$0xff] %v3565
        %3594 = vst [vmem:[%s195 + $0x20] sm:$0xff] %v3567
        %3595 = vst [vmem:[%s195 + $0x28] sm:$0xff] %v3569
        %3596 = vst [vmem:[%s195 + $0x30] sm:$0xff] %v3571
        %3597 = vst [vmem:[%s195 + $0x38] sm:$0xff] %v3573
        %3598 = vst [vmem:[%s195 + $0x40] sm:$0xff] %v3575
        %3599 = vst [vmem:[%s195 + $0x48] sm:$0xff] %v3577
        %3600 = vst [vmem:[%s195 + $0x50] sm:$0xff] %v3579
        %3601 = vst [vmem:[%s195 + $0x58] sm:$0xff] %v3581
        %3602 = vst [vmem:[%s195 + $0x60] sm:$0xff] %v3583
        %3603 = vst [vmem:[%s195 + $0x68] sm:$0xff] %v3585
        %3604 = vst [vmem:[%s195 + $0x70] sm:$0xff] %v3587
        %3605 = vst [vmem:[%s195 + $0x78] sm:$0xff] %v3589
        %s3606 = sand.u32 %s99, 1
        %s3607 = scalar_lea.sflag [#allocation4], %s3606
        %s3608 = sand.u32 %s99, 1
        %s3609 = smul.addr %s3608, 128
        %s3610 = scalar_lea.vmem [#allocation5], %s3609
        // Predicated region
        $region37: #{vgae8_forward.1} parent=31 // pred_check
          %p3611 = pneg %p109
        $region38: #{vgae8_forward.1} parent=31 // pred_check_branch
          %3613 = sbr.rel (%p3611) target = $region40
        $region39: #{vgae8_forward.1} parent=31 // pred_region
          %s3614 = smul.u32 16, %s18
          %s3616 = ssub.s32 2048, 2048
          %3617 = vsyncadd %s3607, %s3616
          %s3618 = smul.addr %s3614, 128
          %s3619 = scalar_lea.hbm %s3, %s3618
          %s3620 = sshll.u32 %s3610, 4
          %s3621 = int_to_ptr.vmem [resolvable:$true] %s3620
          %3626 = dma.vmem_to_hbm [thread:$0]  %s3621, 2048, %s3619, %s3607, 128, 128, 8
        $region40: #{vgae8_forward.1} parent=31 // pred_fallthru
          _
      $region32: #{vgae8_forward.1} parent=5 // pred_fallthru
        _
      %p3627 = scmp.le.s32.totalorder 2, %s13
      // Predicated region
      $region41: #{vgae8_forward.1} parent=5 // pred_check
        %p3628 = pneg %p3627
      $region42: #{vgae8_forward.1} parent=5 // pred_check_branch
        %3630 = sbr.rel (%p3628) target = $region44
      $region43: #{vgae8_forward.1} parent=5 // pred_region
        %s3631 = ssub.s32 %s13, 2
        // Predicated region
        $region45: #{vgae8_forward.1} parent=43 // pred_check
          %p3632 = pneg %p115
        $region46: #{vgae8_forward.1} parent=43 // pred_check_branch
          %3634 = sbr.rel (%p3632) target = $region48
        $region47: #{vgae8_forward.1} parent=43 // pred_region
          %s3635 = sand.u32 %s100, 1
          %s3636 = scalar_lea.sflag [#allocation4], %s3635
          %s3637 = sand.u32 %s100, 1
          %s3638 = smul.addr %s3637, 128
          %s3639 = scalar_lea.vmem [#allocation5], %s3638
          %3640 = dma.done %s3636, 2048
        $region48: #{vgae8_forward.1} parent=43 // pred_fallthru
          _
      $region44: #{vgae8_forward.1} parent=5 // pred_fallthru
        _
    $region6: #{vgae8_forward.1} parent=1 // loop_footer
      %s17 = sadd.s32 1, %s13
    $region7: #{vgae8_forward.1} parent=1 // loop_footer_branch
      %12 = sbr.rel target = $region3
    $region8: #{vgae8_forward.1} parent=1 // loop_exit
      _
    %3641 = vsyncpa [#allocation3], 1
    %s3642 = scalar_lea.sflag [#allocation3], 1
    %3643 = vsyncpa %s3642, 1
    %3644 = vsyncpa [#allocation4], 1
    %s3645 = scalar_lea.sflag [#allocation4], 1
    %3646 = vsyncpa %s3645, 1

</llo_original>
